<compile_context>
chip_gen: v7x
topology: tpu7x:2x2x1
jax: 0.10.0
libtpu: 0.0.40
codegen_flags: <defaults>
</compile_context>

<pallas_src>
import numpy as np
import jax
import jax.numpy as jnp
from jax.experimental import pallas as pl
from jax.experimental.pallas import tpu as pltpu

# ------------------------------ configuration ------------------------------

C = 4
C_IN = 3
N_CLASSES = 10
N_LAYERS = 8            # n_layers = 3 * n_big_nodes + 2
N_BIG_NODES = 2
WINDOW = 3
STEM_MULT = 4
CELL_MULT = 4
INPUT_SIZE = 16
BATCH = 2

K_STEM = ((9 * C_IN + 15) // 16) * 16                        # im2col K padded 27 -> 32
N_CAND = [min(WINDOW, 2 + k) for k in range(N_BIG_NODES)]    # candidates per big node: [2, 3]
# s0 == s1 in the reference forward, so whenever both sit in a node's window their
# two softmax(alpha)*beta scalars are pre-summed -> effective candidates [1, 2].
N_CAND_EFF = [n - 1 if n == 2 + k else n for k, n in enumerate(N_CAND)]
EW_EFF = sum(N_CAND_EFF)                                     # mixing scalars per DAG: 3


def _imgs_per_grid_step(batch):
    """One image per grid step on multi-TC chips (v7x: 'parallel' batch axis shards
    across the 2 TensorCores); fold the whole batch into one grid step on single-TC
    v5e/v6e, where grid steps are just a serial loop with fixed per-step overhead."""
    try:
        kind = jax.devices()[0].device_kind.lower()
    except Exception:
        kind = ""
    if "v7" in kind and batch > 1 and batch % 2 == 0:
        return 1
    return batch


IMGS = _imgs_per_grid_step(BATCH)


# ------------------------------ fused kernel -------------------------------


def _make_kernel(imgs, m1):
    """Build the fused forward kernel for `imgs` images per grid step."""
    m2 = m1 // 4          # rows per image after the first 2x2 pool
    f32, bf16 = jnp.float32, jnp.bfloat16

    def kernel(ew_ref,                                   # (9,) f32 SMEM mixing scalars
               cols_ref,                                 # (imgs*m1, K_STEM) bf16 im2col stem input
               stem_w_ref,                               # (K_STEM, 16) bf16, BN folded
               dag1_w_ref, red2_w_ref,                   # (2,16,16) / (32,32)
               dag2_w_ref, red5_w_ref,                   # (2,32,32) / (64,64)
               dag3_w_ref, head_w_ref,                   # (2,64,64) / (128,10)
               bias_ref,                                 # (16,64) f32 packed biases
               p1_ref, p2_ref, gap_ref,                  # pool / GAP matrices (bf16)
               out_ref):                                 # (1, imgs, N_CLASSES) f32

        def bias(row, width):
            return bias_ref[row:row + 1, :width]

        def pool(x, p_ref, rows_in):
            # Per-image 2x2 average pool as a tiny matmul (MXU); static row slices.
            parts = [jnp.dot(p_ref[...],
                             x[b * rows_in:(b + 1) * rows_in, :],
                             preferred_element_type=f32)
                     for b in range(imgs)]
            return parts[0] if imgs == 1 else jnp.concatenate(parts, axis=0)

        def reduction_cell(a, b, w_ref, bias_row, p_ref, rows_in):
            # Lane-dense channel concat of the two DAG halves, ONE pool matmul,
            # ReLU, ONE 1x1 conv with the original (unsplit) concat weight.
            x = jnp.concatenate([a, b], axis=-1)                        # bf16
            y = jnp.maximum(pool(x, p_ref, rows_in), 0.0)               # f32
            cout = w_ref.shape[1]
            z = jnp.dot(y.astype(bf16), w_ref[...],
                        preferred_element_type=f32) + bias(bias_row, cout)
            return z.astype(bf16)

        # TODO(synk): GetCell / SearchBigDAGPartiallyConnection internals (genotype
        # ops) were not provided; each node cell is ReLU->1x1conv->BN and node inputs
        # mix the sliding window of previous states with softmax(alpha)*beta scalars.
        # Duplicate leading candidates (s0 == s1) are collapsed into one scalar.
        def big_dag(s, dag, w_stack_ref, bias_row0):
            cout = w_stack_ref.shape[-1]
            states = [s]                                  # s0 == s1 -> single bf16 entry
            off = dag * EW_EFF
            for node, n_eff in enumerate(N_CAND_EFF):
                cand = states[-n_eff:]
                mix = ew_ref[off] * cand[0].astype(f32)   # SMEM scalar * state (f32 mix)
                for i in range(1, n_eff):
                    mix = mix + ew_ref[off + i] * cand[i].astype(f32)
                off += n_eff
                mix = jnp.maximum(mix, 0.0)               # cell input ReLU
                y = jnp.dot(mix.astype(bf16), w_stack_ref[node],
                            preferred_element_type=f32) + bias(bias_row0 + node, cout)
                states.append(y.astype(bf16))             # bf16 state storage (vreg relief)
            return states[-2], states[-1]                 # two halves of the channel concat

        # stem0: Conv2d(C_in, 4C, 3, 1, 1, bias=False) + BN (scale folded) as im2col GEMM.
        stem = (jnp.dot(cols_ref[...], stem_w_ref[...], preferred_element_type=f32)
                + bias(0, STEM_MULT * C)).astype(bf16)

        a1, b1 = big_dag(stem, 0, dag1_w_ref, 1)
        s = reduction_cell(a1, b1, red2_w_ref, 3, p1_ref, m1)     # HxW   -> H/2 x W/2
        a2, b2 = big_dag(s, 1, dag2_w_ref, 4)
        s = reduction_cell(a2, b2, red5_w_ref, 6, p2_ref, m2)     #       -> H/4 x W/4
        a3, b3 = big_dag(s, 2, dag3_w_ref, 7)

        # GAP (block-diagonal per-image averaging matmul) + linear head, both on the
        # lane-dense 128-channel concat.
        x3 = jnp.concatenate([a3, b3], axis=-1)                    # (imgs*m3, 128) bf16
        g = jnp.dot(gap_ref[...], x3, preferred_element_type=f32)  # (imgs, 128)
        logits = jnp.dot(g.astype(bf16), head_w_ref[...],
                         preferred_element_type=f32) + bias(9, N_CLASSES)
        out_ref[...] = logits[None]

    return kernel


# ------------------------------ wrapper (JAX) -------------------------------


def _im2col3x3(x):
    """NHWC, 3x3 patches with pad=1 -> (B*H*W, K_STEM), K zero-padded 27 -> 32."""
    # TODO(synk): could be folded into the kernel as 9 shifted MXU accumulates; left
    # in XLA because the stem input is a single ~30 KB bf16 read before the kernel.
    B, H, W, Cin = x.shape
    xp = jnp.pad(x, ((0, 0), (1, 1), (1, 1), (0, 0)))
    cols = [xp[:, dh:dh + H, dw:dw + W, :] for dh in range(3) for dw in range(3)]
    cols = jnp.concatenate(cols, axis=-1).reshape(B * H * W, 9 * Cin)
    return jnp.pad(cols, ((0, 0), (0, K_STEM - 9 * Cin)))


def _pool2x2_matrix(h, w):
    """Matrix P with P @ x == 2x2 average pool of an (h*w, C) row-major spatial map."""
    ho, wo = h // 2, w // 2
    p = np.zeros((ho * wo, h * w), np.float32)
    for i in range(ho):
        for j in range(wo):
            o = i * wo + j
            for dh in range(2):
                for dw in range(2):
                    p[o, (2 * i + dh) * w + (2 * j + dw)] = 0.25
    return jnp.asarray(p, jnp.bfloat16)


def _edge_weights(weights_DAG, weight_beta_DAG):
    """softmax(alpha[:n_used]) * beta[:n_used] per (DAG, node), with the duplicate
    (s0 == s1) leading candidates pre-summed, flattened to (9,).  Reproduces the
    reference quirk: every DAG reuses weight_beta_DAG[0:n_big_nodes]."""
    betas = weight_beta_DAG[0:N_BIG_NODES]
    chunks = []
    for d in range(3):
        for k in range(N_BIG_NODES):
            n_used = N_CAND[k]
            a = jax.nn.softmax(weights_DAG[d * N_BIG_NODES + k][:n_used])
            w = a * betas[k][:n_used]
            if n_used == 2 + k:                          # s0 and s1 both in the window
                w = jnp.concatenate([w[:2].sum(keepdims=True), w[2:]])
            chunks.append(w)
    return jnp.concatenate(chunks).astype(jnp.float32)


def prepare_params(params):
    """One-time parameter preprocessing (outside the per-call jit): BN-scale fold,
    bf16 casts, K padding, weight stacking, bias packing, pool/GAP matrices."""
    def fold(w, scale):                                  # BN eval: gamma=1, mean=0 synthetic
        return (w * scale[None, :]).astype(jnp.bfloat16)

    stem_w = jnp.pad(fold(params["stem_w"], params["stem_scale"]),
                     ((0, K_STEM - params["stem_w"].shape[0]), (0, 0)))
    cw = [fold(cp["w"], cp["scale"]) for cp in params["cells"]]

    biases = np.zeros((16, 64), np.float32)
    biases[0, :STEM_MULT * C] = np.asarray(params["stem_bias"])
    for i, cp in enumerate(params["cells"]):             # rows 1..8
        v = np.asarray(cp["bias"])
        biases[1 + i, :v.shape[0]] = v
    biases[9, :N_CLASSES] = np.asarray(params["linear_b"])

    m3 = (INPUT_SIZE // 4) * (INPUT_SIZE // 4)
    gap = np.zeros((IMGS, IMGS * m3), np.float32)
    for b in range(IMGS):
        gap[b, b * m3:(b + 1) * m3] = 1.0 / m3

    return dict(
        stem_w=stem_w,
        dag1_w=jnp.stack([cw[0], cw[1]]),                # (2,16,16)
        red2_w=cw[2],                                    # (32,32) unsplit
        dag2_w=jnp.stack([cw[3], cw[4]]),                # (2,32,32)
        red5_w=cw[5],                                    # (64,64) unsplit
        dag3_w=jnp.stack([cw[6], cw[7]]),                # (2,64,64)
        head_w=params["linear_w"].astype(jnp.bfloat16),  # (128,10) unsplit
        biases=jnp.asarray(biases),
        p1=_pool2x2_matrix(INPUT_SIZE, INPUT_SIZE),
        p2=_pool2x2_matrix(INPUT_SIZE // 2, INPUT_SIZE // 2),
        gap=jnp.asarray(gap, jnp.bfloat16),
    )


def _forward_impl(kparams, x_nchw, weights_DAG, weight_beta_DAG):
    x = jnp.transpose(x_nchw, (0, 2, 3, 1))              # NCHW -> NHWC
    B, H, W, _ = x.shape
    M1 = H * W
    assert B % IMGS == 0
    n_steps = B // IMGS

    cols = _im2col3x3(x).astype(jnp.bfloat16)            # (B*M1, K_STEM)
    ew = _edge_weights(weights_DAG, weight_beta_DAG)     # (9,) f32 -> SMEM

    names = ("stem_w", "dag1_w", "red2_w", "dag2_w", "red5_w",
             "dag3_w", "head_w", "biases", "p1", "p2", "gap")
    weight_args = [kparams[k] for k in names]

    def const_spec(a):
        nd = a.ndim
        return pl.BlockSpec(a.shape, lambda step, _n=nd: (0,) * _n)

    out = pl.pallas_call(
        _make_kernel(IMGS, M1),
        grid=(n_steps,),
        out_shape=jax.ShapeDtypeStruct((n_steps, IMGS, N_CLASSES), jnp.float32),
        in_specs=[pl.BlockSpec(memory_space=pltpu.MemorySpace.SMEM),          # edge-mix scalars
                  pl.BlockSpec((IMGS * M1, K_STEM), lambda step: (step, 0))]  # stem im2col rows
                 + [const_spec(a) for a in weight_args],
        out_specs=pl.BlockSpec((1, IMGS, N_CLASSES), lambda step: (step, 0, 0)),
        compiler_params=pltpu.CompilerParams(
            dimension_semantics=("parallel",)),          # shards images across v7x's 2 TCs
    )(ew, cols, *weight_args)
    return out.reshape(B, N_CLASSES)


forward = jax.jit(_forward_impl)


# --------------------------- model construction ----------------------------


def init_params(key):
    keys = iter(jax.random.split(key, 16))

    def nrm(shape, scale=0.1):
        return scale * jax.random.normal(next(keys), shape, jnp.float32)

    stem_cout = STEM_MULT * C                            # 16
    params = {
        "stem_w": nrm((9 * C_IN, stem_cout)),
        "stem_scale": jnp.ones((stem_cout,), jnp.float32),   # BN eval (gamma=1, var=1)
        "stem_bias": jnp.zeros((stem_cout,), jnp.float32),   # BN eval (beta=0, mean=0)
    }
    # (cin, cout) per cell; cells 2 and 5 are the stride-2 reduction cells that
    # consume the channel-concat of the preceding big DAG.
    cell_specs = [(16, 16), (16, 16),                    # cells 0-1  (bigDAG1)
                  (32, 32),                              # cell  2    (reduction)
                  (32, 32), (32, 32),                    # cells 3-4  (bigDAG2)
                  (64, 64),                              # cell  5    (reduction)
                  (64, 64), (64, 64)]                    # cells 6-7  (bigDAG3)
    params["cells"] = [
        {"w": nrm((cin, cout)),
         "scale": jnp.ones((cout,), jnp.float32),
         "bias": jnp.zeros((cout,), jnp.float32)}
        for cin, cout in cell_specs
    ]
    params["linear_w"] = nrm((32 * C, N_CLASSES))        # nn.Linear(32*C, n_classes)
    params["linear_b"] = jnp.zeros((N_CLASSES,), jnp.float32)
    return params


if __name__ == "__main__":
    key = jax.random.PRNGKey(0)
    kp, kx, ka, kb = jax.random.split(key, 4)
    params = init_params(kp)
    kparams = prepare_params(params)                     # hoisted out of the per-call path
    x = jax.random.normal(kx, (BATCH, C_IN, INPUT_SIZE, INPUT_SIZE), jnp.float32)
    weights_DAG = jax.random.normal(ka, (3 * N_BIG_NODES, WINDOW), jnp.float32)
    weight_beta_DAG = jax.nn.sigmoid(
        jax.random.normal(kb, (3 * N_BIG_NODES, WINDOW), jnp.float32))

    logits = forward(kparams, x, weights_DAG, weight_beta_DAG)
    jax.block_until_ready(logits)
    assert logits.shape == (BATCH, N_CLASSES), logits.shape
    assert bool(jnp.all(jnp.isfinite(logits)))
    print("KERNEL_OK")
</pallas_src>

<mosaic_0001>
module attributes {stable_mosaic.version = 11 : i64} {
  func.func @kernel(%arg0: i32, %arg1: memref<9xf32, #tpu.memory_space<smem>>, %arg2: memref<512x32xbf16, #tpu.memory_space<vmem>>, %arg3: memref<32x16xbf16, #tpu.memory_space<vmem>>, %arg4: memref<2x16x16xbf16, #tpu.memory_space<vmem>>, %arg5: memref<32x32xbf16, #tpu.memory_space<vmem>>, %arg6: memref<2x32x32xbf16, #tpu.memory_space<vmem>>, %arg7: memref<64x64xbf16, #tpu.memory_space<vmem>>, %arg8: memref<2x64x64xbf16, #tpu.memory_space<vmem>>, %arg9: memref<128x10xbf16, #tpu.memory_space<vmem>>, %arg10: memref<16x64xf32, #tpu.memory_space<vmem>>, %arg11: memref<64x256xbf16, #tpu.memory_space<vmem>>, %arg12: memref<16x64xbf16, #tpu.memory_space<vmem>>, %arg13: memref<2x32xbf16, #tpu.memory_space<vmem>>, %arg14: memref<1x2x10xf32, #tpu.memory_space<vmem>>) attributes {dimension_semantics = [#tpu.dimension_semantics<parallel>], iteration_bounds = array<i64: 1>, scalar_prefetch = 0 : i64, scratch_operands = 0 : i64, tpu.core_type = #tpu.core_type<tc>, window_params = [{transform_indices = @transform_0, window_bounds = array<i64: 9>}, {transform_indices = @transform_1, window_bounds = array<i64: 512, 32>}, {pipeline_mode = #tpu.pipeline_mode<synchronous>, transform_indices = @transform_2, window_bounds = array<i64: 32, 16>}, {pipeline_mode = #tpu.pipeline_mode<synchronous>, transform_indices = @transform_3, window_bounds = array<i64: 2, 16, 16>}, {pipeline_mode = #tpu.pipeline_mode<synchronous>, transform_indices = @transform_4, window_bounds = array<i64: 32, 32>}, {pipeline_mode = #tpu.pipeline_mode<synchronous>, transform_indices = @transform_5, window_bounds = array<i64: 2, 32, 32>}, {pipeline_mode = #tpu.pipeline_mode<synchronous>, transform_indices = @transform_6, window_bounds = array<i64: 64, 64>}, {pipeline_mode = #tpu.pipeline_mode<synchronous>, transform_indices = @transform_7, window_bounds = array<i64: 2, 64, 64>}, {pipeline_mode = #tpu.pipeline_mode<synchronous>, transform_indices = @transform_8, window_bounds = array<i64: 128, 10>}, {pipeline_mode = #tpu.pipeline_mode<synchronous>, transform_indices = @transform_9, window_bounds = array<i64: 16, 64>}, {pipeline_mode = #tpu.pipeline_mode<synchronous>, transform_indices = @transform_10, window_bounds = array<i64: 64, 256>}, {pipeline_mode = #tpu.pipeline_mode<synchronous>, transform_indices = @transform_11, window_bounds = array<i64: 16, 64>}, {pipeline_mode = #tpu.pipeline_mode<synchronous>, transform_indices = @transform_12, window_bounds = array<i64: 2, 32>}, {transform_indices = @transform_13, window_bounds = array<i64: 1, 2, 10>}]} {
    %c0 = arith.constant 0 : index
    %c0_0 = arith.constant 0 : index
    %0 = vector.load %arg2[%c0, %c0_0] : memref<512x32xbf16, #tpu.memory_space<vmem>>, vector<512x32xbf16>
    %c0_1 = arith.constant 0 : index
    %c0_2 = arith.constant 0 : index
    %1 = vector.load %arg3[%c0_1, %c0_2] : memref<32x16xbf16, #tpu.memory_space<vmem>>, vector<32x16xbf16>
    %cst = arith.constant dense<0.000000e+00> : vector<512x16xf32>
    %2 = tpu.matmul %0, %1, %cst {dimension_numbers = #tpu.dot_dimension_numbers<[1], [0], [0], [1], [0, 0, 1, 1], [], []>} : vector<512x32xbf16>, vector<32x16xbf16>, vector<512x16xf32> -> vector<512x16xf32>
    %c0_3 = arith.constant 0 : index
    %c0_4 = arith.constant 0 : index
    %3 = vector.load %arg10[%c0_3, %c0_4] : memref<16x64xf32, #tpu.memory_space<vmem>>, vector<1x16xf32>
    %4 = vector.broadcast %3 : vector<1x16xf32> to vector<512x16xf32>
    %5 = arith.addf %2, %4 : vector<512x16xf32>
    %6 = arith.truncf %5 : vector<512x16xf32> to vector<512x16xbf16>
    %c0_5 = arith.constant 0 : index
    %7 = memref.load %arg1[%c0_5] : memref<9xf32, #tpu.memory_space<smem>>
    %8 = arith.extf %6 : vector<512x16xbf16> to vector<512x16xf32>
    %9 = vector.broadcast %7 : f32 to vector<512x16xf32>
    %10 = arith.mulf %9, %8 : vector<512x16xf32>
    %cst_6 = arith.constant 0.000000e+00 : f32
    %11 = vector.broadcast %cst_6 : f32 to vector<512x16xf32>
    %12 = arith.maximumf %10, %11 : vector<512x16xf32>
    %13 = arith.truncf %12 : vector<512x16xf32> to vector<512x16xbf16>
    %c0_7 = arith.constant 0 : index
    %c0_8 = arith.constant 0 : index
    %c0_9 = arith.constant 0 : index
    %14 = vector.load %arg4[%c0_7, %c0_8, %c0_9] : memref<2x16x16xbf16, #tpu.memory_space<vmem>>, vector<1x16x16xbf16>
    %15 = vector.shape_cast %14 : vector<1x16x16xbf16> to vector<16x16xbf16>
    %cst_10 = arith.constant dense<0.000000e+00> : vector<512x16xf32>
    %16 = tpu.matmul %13, %15, %cst_10 {dimension_numbers = #tpu.dot_dimension_numbers<[1], [0], [0], [1], [0, 0, 1, 1], [], []>} : vector<512x16xbf16>, vector<16x16xbf16>, vector<512x16xf32> -> vector<512x16xf32>
    %c1 = arith.constant 1 : index
    %c0_11 = arith.constant 0 : index
    %17 = vector.load %arg10[%c1, %c0_11] : memref<16x64xf32, #tpu.memory_space<vmem>>, vector<1x16xf32>
    %18 = vector.broadcast %17 : vector<1x16xf32> to vector<512x16xf32>
    %19 = arith.addf %16, %18 : vector<512x16xf32>
    %20 = arith.truncf %19 : vector<512x16xf32> to vector<512x16xbf16>
    %c1_12 = arith.constant 1 : index
    %21 = memref.load %arg1[%c1_12] : memref<9xf32, #tpu.memory_space<smem>>
    %22 = arith.extf %6 : vector<512x16xbf16> to vector<512x16xf32>
    %23 = vector.broadcast %21 : f32 to vector<512x16xf32>
    %24 = arith.mulf %23, %22 : vector<512x16xf32>
    %c2 = arith.constant 2 : index
    %25 = memref.load %arg1[%c2] : memref<9xf32, #tpu.memory_space<smem>>
    %26 = arith.extf %20 : vector<512x16xbf16> to vector<512x16xf32>
    %27 = vector.broadcast %25 : f32 to vector<512x16xf32>
    %28 = arith.mulf %27, %26 : vector<512x16xf32>
    %29 = arith.addf %24, %28 : vector<512x16xf32>
    %cst_13 = arith.constant 0.000000e+00 : f32
    %30 = vector.broadcast %cst_13 : f32 to vector<512x16xf32>
    %31 = arith.maximumf %29, %30 : vector<512x16xf32>
    %32 = arith.truncf %31 : vector<512x16xf32> to vector<512x16xbf16>
    %c1_14 = arith.constant 1 : index
    %c0_15 = arith.constant 0 : index
    %c0_16 = arith.constant 0 : index
    %33 = vector.load %arg4[%c1_14, %c0_15, %c0_16] : memref<2x16x16xbf16, #tpu.memory_space<vmem>>, vector<1x16x16xbf16>
    %34 = vector.shape_cast %33 : vector<1x16x16xbf16> to vector<16x16xbf16>
    %cst_17 = arith.constant dense<0.000000e+00> : vector<512x16xf32>
    %35 = tpu.matmul %32, %34, %cst_17 {dimension_numbers = #tpu.dot_dimension_numbers<[1], [0], [0], [1], [0, 0, 1, 1], [], []>} : vector<512x16xbf16>, vector<16x16xbf16>, vector<512x16xf32> -> vector<512x16xf32>
    %c2_18 = arith.constant 2 : index
    %c0_19 = arith.constant 0 : index
    %36 = vector.load %arg10[%c2_18, %c0_19] : memref<16x64xf32, #tpu.memory_space<vmem>>, vector<1x16xf32>
    %37 = vector.broadcast %36 : vector<1x16xf32> to vector<512x16xf32>
    %38 = arith.addf %35, %37 : vector<512x16xf32>
    %39 = arith.truncf %38 : vector<512x16xf32> to vector<512x16xbf16>
    %40 = tpu.concatenate %20, %39 in 1 : vector<512x16xbf16>, vector<512x16xbf16> -> vector<512x32xbf16>
    %c0_20 = arith.constant 0 : index
    %c0_21 = arith.constant 0 : index
    %41 = vector.load %arg11[%c0_20, %c0_21] : memref<64x256xbf16, #tpu.memory_space<vmem>>, vector<64x256xbf16>
    %42 = vector.extract_strided_slice %40 {offsets = [0, 0], sizes = [256, 32], strides = [1, 1]} : vector<512x32xbf16> to vector<256x32xbf16>
    %cst_22 = arith.constant dense<0.000000e+00> : vector<64x32xf32>
    %43 = tpu.matmul %41, %42, %cst_22 {dimension_numbers = #tpu.dot_dimension_numbers<[1], [0], [0], [1], [0, 0, 1, 1], [], []>} : vector<64x256xbf16>, vector<256x32xbf16>, vector<64x32xf32> -> vector<64x32xf32>
    %c0_23 = arith.constant 0 : index
    %c0_24 = arith.constant 0 : index
    %44 = vector.load %arg11[%c0_23, %c0_24] : memref<64x256xbf16, #tpu.memory_space<vmem>>, vector<64x256xbf16>
    %45 = vector.extract_strided_slice %40 {offsets = [256, 0], sizes = [256, 32], strides = [1, 1]} : vector<512x32xbf16> to vector<256x32xbf16>
    %cst_25 = arith.constant dense<0.000000e+00> : vector<64x32xf32>
    %46 = tpu.matmul %44, %45, %cst_25 {dimension_numbers = #tpu.dot_dimension_numbers<[1], [0], [0], [1], [0, 0, 1, 1], [], []>} : vector<64x256xbf16>, vector<256x32xbf16>, vector<64x32xf32> -> vector<64x32xf32>
    %47 = tpu.concatenate %43, %46 in 0 : vector<64x32xf32>, vector<64x32xf32> -> vector<128x32xf32>
    %cst_26 = arith.constant 0.000000e+00 : f32
    %48 = vector.broadcast %cst_26 : f32 to vector<128x32xf32>
    %49 = arith.maximumf %47, %48 : vector<128x32xf32>
    %50 = arith.truncf %49 : vector<128x32xf32> to vector<128x32xbf16>
    %c0_27 = arith.constant 0 : index
    %c0_28 = arith.constant 0 : index
    %51 = vector.load %arg5[%c0_27, %c0_28] : memref<32x32xbf16, #tpu.memory_space<vmem>>, vector<32x32xbf16>
    %cst_29 = arith.constant dense<0.000000e+00> : vector<128x32xf32>
    %52 = tpu.matmul %50, %51, %cst_29 {dimension_numbers = #tpu.dot_dimension_numbers<[1], [0], [0], [1], [0, 0, 1, 1], [], []>} : vector<128x32xbf16>, vector<32x32xbf16>, vector<128x32xf32> -> vector<128x32xf32>
    %c3 = arith.constant 3 : index
    %c0_30 = arith.constant 0 : index
    %53 = vector.load %arg10[%c3, %c0_30] : memref<16x64xf32, #tpu.memory_space<vmem>>, vector<1x32xf32>
    %54 = vector.broadcast %53 : vector<1x32xf32> to vector<128x32xf32>
    %55 = arith.addf %52, %54 : vector<128x32xf32>
    %56 = arith.truncf %55 : vector<128x32xf32> to vector<128x32xbf16>
    %c3_31 = arith.constant 3 : index
    %57 = memref.load %arg1[%c3_31] : memref<9xf32, #tpu.memory_space<smem>>
    %58 = arith.extf %56 : vector<128x32xbf16> to vector<128x32xf32>
    %59 = vector.broadcast %57 : f32 to vector<128x32xf32>
    %60 = arith.mulf %59, %58 : vector<128x32xf32>
    %cst_32 = arith.constant 0.000000e+00 : f32
    %61 = vector.broadcast %cst_32 : f32 to vector<128x32xf32>
    %62 = arith.maximumf %60, %61 : vector<128x32xf32>
    %63 = arith.truncf %62 : vector<128x32xf32> to vector<128x32xbf16>
    %c0_33 = arith.constant 0 : index
    %c0_34 = arith.constant 0 : index
    %c0_35 = arith.constant 0 : index
    %64 = vector.load %arg6[%c0_33, %c0_34, %c0_35] : memref<2x32x32xbf16, #tpu.memory_space<vmem>>, vector<1x32x32xbf16>
    %65 = vector.shape_cast %64 : vector<1x32x32xbf16> to vector<32x32xbf16>
    %cst_36 = arith.constant dense<0.000000e+00> : vector<128x32xf32>
    %66 = tpu.matmul %63, %65, %cst_36 {dimension_numbers = #tpu.dot_dimension_numbers<[1], [0], [0], [1], [0, 0, 1, 1], [], []>} : vector<128x32xbf16>, vector<32x32xbf16>, vector<128x32xf32> -> vector<128x32xf32>
    %c4 = arith.constant 4 : index
    %c0_37 = arith.constant 0 : index
    %67 = vector.load %arg10[%c4, %c0_37] : memref<16x64xf32, #tpu.memory_space<vmem>>, vector<1x32xf32>
    %68 = vector.broadcast %67 : vector<1x32xf32> to vector<128x32xf32>
    %69 = arith.addf %66, %68 : vector<128x32xf32>
    %70 = arith.truncf %69 : vector<128x32xf32> to vector<128x32xbf16>
    %c4_38 = arith.constant 4 : index
    %71 = memref.load %arg1[%c4_38] : memref<9xf32, #tpu.memory_space<smem>>
    %72 = arith.extf %56 : vector<128x32xbf16> to vector<128x32xf32>
    %73 = vector.broadcast %71 : f32 to vector<128x32xf32>
    %74 = arith.mulf %73, %72 : vector<128x32xf32>
    %c5 = arith.constant 5 : index
    %75 = memref.load %arg1[%c5] : memref<9xf32, #tpu.memory_space<smem>>
    %76 = arith.extf %70 : vector<128x32xbf16> to vector<128x32xf32>
    %77 = vector.broadcast %75 : f32 to vector<128x32xf32>
    %78 = arith.mulf %77, %76 : vector<128x32xf32>
    %79 = arith.addf %74, %78 : vector<128x32xf32>
    %cst_39 = arith.constant 0.000000e+00 : f32
    %80 = vector.broadcast %cst_39 : f32 to vector<128x32xf32>
    %81 = arith.maximumf %79, %80 : vector<128x32xf32>
    %82 = arith.truncf %81 : vector<128x32xf32> to vector<128x32xbf16>
    %c1_40 = arith.constant 1 : index
    %c0_41 = arith.constant 0 : index
    %c0_42 = arith.constant 0 : index
    %83 = vector.load %arg6[%c1_40, %c0_41, %c0_42] : memref<2x32x32xbf16, #tpu.memory_space<vmem>>, vector<1x32x32xbf16>
    %84 = vector.shape_cast %83 : vector<1x32x32xbf16> to vector<32x32xbf16>
    %cst_43 = arith.constant dense<0.000000e+00> : vector<128x32xf32>
    %85 = tpu.matmul %82, %84, %cst_43 {dimension_numbers = #tpu.dot_dimension_numbers<[1], [0], [0], [1], [0, 0, 1, 1], [], []>} : vector<128x32xbf16>, vector<32x32xbf16>, vector<128x32xf32> -> vector<128x32xf32>
    %c5_44 = arith.constant 5 : index
    %c0_45 = arith.constant 0 : index
    %86 = vector.load %arg10[%c5_44, %c0_45] : memref<16x64xf32, #tpu.memory_space<vmem>>, vector<1x32xf32>
    %87 = vector.broadcast %86 : vector<1x32xf32> to vector<128x32xf32>
    %88 = arith.addf %85, %87 : vector<128x32xf32>
    %89 = arith.truncf %88 : vector<128x32xf32> to vector<128x32xbf16>
    %90 = tpu.concatenate %70, %89 in 1 : vector<128x32xbf16>, vector<128x32xbf16> -> vector<128x64xbf16>
    %c0_46 = arith.constant 0 : index
    %c0_47 = arith.constant 0 : index
    %91 = vector.load %arg12[%c0_46, %c0_47] : memref<16x64xbf16, #tpu.memory_space<vmem>>, vector<16x64xbf16>
    %92 = vector.extract_strided_slice %90 {offsets = [0, 0], sizes = [64, 64], strides = [1, 1]} : vector<128x64xbf16> to vector<64x64xbf16>
    %cst_48 = arith.constant dense<0.000000e+00> : vector<16x64xf32>
    %93 = tpu.matmul %91, %92, %cst_48 {dimension_numbers = #tpu.dot_dimension_numbers<[1], [0], [0], [1], [0, 0, 1, 1], [], []>} : vector<16x64xbf16>, vector<64x64xbf16>, vector<16x64xf32> -> vector<16x64xf32>
    %c0_49 = arith.constant 0 : index
    %c0_50 = arith.constant 0 : index
    %94 = vector.load %arg12[%c0_49, %c0_50] : memref<16x64xbf16, #tpu.memory_space<vmem>>, vector<16x64xbf16>
    %95 = vector.extract_strided_slice %90 {offsets = [64, 0], sizes = [64, 64], strides = [1, 1]} : vector<128x64xbf16> to vector<64x64xbf16>
    %cst_51 = arith.constant dense<0.000000e+00> : vector<16x64xf32>
    %96 = tpu.matmul %94, %95, %cst_51 {dimension_numbers = #tpu.dot_dimension_numbers<[1], [0], [0], [1], [0, 0, 1, 1], [], []>} : vector<16x64xbf16>, vector<64x64xbf16>, vector<16x64xf32> -> vector<16x64xf32>
    %97 = tpu.concatenate %93, %96 in 0 : vector<16x64xf32>, vector<16x64xf32> -> vector<32x64xf32>
    %cst_52 = arith.constant 0.000000e+00 : f32
    %98 = vector.broadcast %cst_52 : f32 to vector<32x64xf32>
    %99 = arith.maximumf %97, %98 : vector<32x64xf32>
    %100 = arith.truncf %99 : vector<32x64xf32> to vector<32x64xbf16>
    %c0_53 = arith.constant 0 : index
    %c0_54 = arith.constant 0 : index
    %101 = vector.load %arg7[%c0_53, %c0_54] : memref<64x64xbf16, #tpu.memory_space<vmem>>, vector<64x64xbf16>
    %cst_55 = arith.constant dense<0.000000e+00> : vector<32x64xf32>
    %102 = tpu.matmul %100, %101, %cst_55 {dimension_numbers = #tpu.dot_dimension_numbers<[1], [0], [0], [1], [0, 0, 1, 1], [], []>} : vector<32x64xbf16>, vector<64x64xbf16>, vector<32x64xf32> -> vector<32x64xf32>
    %c6 = arith.constant 6 : index
    %c0_56 = arith.constant 0 : index
    %103 = vector.load %arg10[%c6, %c0_56] : memref<16x64xf32, #tpu.memory_space<vmem>>, vector<1x64xf32>
    %104 = vector.broadcast %103 : vector<1x64xf32> to vector<32x64xf32>
    %105 = arith.addf %102, %104 : vector<32x64xf32>
    %106 = arith.truncf %105 : vector<32x64xf32> to vector<32x64xbf16>
    %c6_57 = arith.constant 6 : index
    %107 = memref.load %arg1[%c6_57] : memref<9xf32, #tpu.memory_space<smem>>
    %108 = arith.extf %106 : vector<32x64xbf16> to vector<32x64xf32>
    %109 = vector.broadcast %107 : f32 to vector<32x64xf32>
    %110 = arith.mulf %109, %108 : vector<32x64xf32>
    %cst_58 = arith.constant 0.000000e+00 : f32
    %111 = vector.broadcast %cst_58 : f32 to vector<32x64xf32>
    %112 = arith.maximumf %110, %111 : vector<32x64xf32>
    %113 = arith.truncf %112 : vector<32x64xf32> to vector<32x64xbf16>
    %c0_59 = arith.constant 0 : index
    %c0_60 = arith.constant 0 : index
    %c0_61 = arith.constant 0 : index
    %114 = vector.load %arg8[%c0_59, %c0_60, %c0_61] : memref<2x64x64xbf16, #tpu.memory_space<vmem>>, vector<1x64x64xbf16>
    %115 = vector.shape_cast %114 : vector<1x64x64xbf16> to vector<64x64xbf16>
    %cst_62 = arith.constant dense<0.000000e+00> : vector<32x64xf32>
    %116 = tpu.matmul %113, %115, %cst_62 {dimension_numbers = #tpu.dot_dimension_numbers<[1], [0], [0], [1], [0, 0, 1, 1], [], []>} : vector<32x64xbf16>, vector<64x64xbf16>, vector<32x64xf32> -> vector<32x64xf32>
    %c7 = arith.constant 7 : index
    %c0_63 = arith.constant 0 : index
    %117 = vector.load %arg10[%c7, %c0_63] : memref<16x64xf32, #tpu.memory_space<vmem>>, vector<1x64xf32>
    %118 = vector.broadcast %117 : vector<1x64xf32> to vector<32x64xf32>
    %119 = arith.addf %116, %118 : vector<32x64xf32>
    %120 = arith.truncf %119 : vector<32x64xf32> to vector<32x64xbf16>
    %c7_64 = arith.constant 7 : index
    %121 = memref.load %arg1[%c7_64] : memref<9xf32, #tpu.memory_space<smem>>
    %122 = arith.extf %106 : vector<32x64xbf16> to vector<32x64xf32>
    %123 = vector.broadcast %121 : f32 to vector<32x64xf32>
    %124 = arith.mulf %123, %122 : vector<32x64xf32>
    %c8 = arith.constant 8 : index
    %125 = memref.load %arg1[%c8] : memref<9xf32, #tpu.memory_space<smem>>
    %126 = arith.extf %120 : vector<32x64xbf16> to vector<32x64xf32>
    %127 = vector.broadcast %125 : f32 to vector<32x64xf32>
    %128 = arith.mulf %127, %126 : vector<32x64xf32>
    %129 = arith.addf %124, %128 : vector<32x64xf32>
    %cst_65 = arith.constant 0.000000e+00 : f32
    %130 = vector.broadcast %cst_65 : f32 to vector<32x64xf32>
    %131 = arith.maximumf %129, %130 : vector<32x64xf32>
    %132 = arith.truncf %131 : vector<32x64xf32> to vector<32x64xbf16>
    %c1_66 = arith.constant 1 : index
    %c0_67 = arith.constant 0 : index
    %c0_68 = arith.constant 0 : index
    %133 = vector.load %arg8[%c1_66, %c0_67, %c0_68] : memref<2x64x64xbf16, #tpu.memory_space<vmem>>, vector<1x64x64xbf16>
    %134 = vector.shape_cast %133 : vector<1x64x64xbf16> to vector<64x64xbf16>
    %cst_69 = arith.constant dense<0.000000e+00> : vector<32x64xf32>
    %135 = tpu.matmul %132, %134, %cst_69 {dimension_numbers = #tpu.dot_dimension_numbers<[1], [0], [0], [1], [0, 0, 1, 1], [], []>} : vector<32x64xbf16>, vector<64x64xbf16>, vector<32x64xf32> -> vector<32x64xf32>
    %c8_70 = arith.constant 8 : index
    %c0_71 = arith.constant 0 : index
    %136 = vector.load %arg10[%c8_70, %c0_71] : memref<16x64xf32, #tpu.memory_space<vmem>>, vector<1x64xf32>
    %137 = vector.broadcast %136 : vector<1x64xf32> to vector<32x64xf32>
    %138 = arith.addf %135, %137 : vector<32x64xf32>
    %139 = arith.truncf %138 : vector<32x64xf32> to vector<32x64xbf16>
    %140 = tpu.concatenate %120, %139 in 1 : vector<32x64xbf16>, vector<32x64xbf16> -> vector<32x128xbf16>
    %c0_72 = arith.constant 0 : index
    %c0_73 = arith.constant 0 : index
    %141 = vector.load %arg13[%c0_72, %c0_73] : memref<2x32xbf16, #tpu.memory_space<vmem>>, vector<2x32xbf16>
    %cst_74 = arith.constant dense<0.000000e+00> : vector<2x128xf32>
    %142 = tpu.matmul %141, %140, %cst_74 {dimension_numbers = #tpu.dot_dimension_numbers<[1], [0], [0], [1], [0, 0, 1, 1], [], []>} : vector<2x32xbf16>, vector<32x128xbf16>, vector<2x128xf32> -> vector<2x128xf32>
    %143 = arith.truncf %142 : vector<2x128xf32> to vector<2x128xbf16>
    %c0_75 = arith.constant 0 : index
    %c0_76 = arith.constant 0 : index
    %144 = vector.load %arg9[%c0_75, %c0_76] : memref<128x10xbf16, #tpu.memory_space<vmem>>, vector<128x10xbf16>
    %cst_77 = arith.constant dense<0.000000e+00> : vector<2x10xf32>
    %145 = tpu.matmul %143, %144, %cst_77 {dimension_numbers = #tpu.dot_dimension_numbers<[1], [0], [0], [1], [0, 0, 1, 1], [], []>} : vector<2x128xbf16>, vector<128x10xbf16>, vector<2x10xf32> -> vector<2x10xf32>
    %c9 = arith.constant 9 : index
    %c0_78 = arith.constant 0 : index
    %146 = vector.load %arg10[%c9, %c0_78] : memref<16x64xf32, #tpu.memory_space<vmem>>, vector<1x10xf32>
    %147 = vector.broadcast %146 : vector<1x10xf32> to vector<2x10xf32>
    %148 = arith.addf %145, %147 : vector<2x10xf32>
    %149 = vector.shape_cast %148 : vector<2x10xf32> to vector<1x2x10xf32>
    %c0_79 = arith.constant 0 : index
    %c0_80 = arith.constant 0 : index
    %c0_81 = arith.constant 0 : index
    %150 = vector.load %arg14[%c0_79, %c0_80, %c0_81] : memref<1x2x10xf32, #tpu.memory_space<vmem>>, vector<1x2x10xf32>
    tpu.vector_store %arg14[%c0_79, %c0_80, %c0_81], %149 {strides = array<i32>} : memref<1x2x10xf32, #tpu.memory_space<vmem>>, vector<1x2x10xf32>,
    return
  }
  func.func @transform_0(%arg0: i32) -> i32 {
    %c0_i32 = arith.constant 0 : i32
    %c0_i32_0 = arith.constant 0 : i32
    return %c0_i32 : i32
  }
  func.func @transform_1(%arg0: i32) -> (i32, i32) {
    %c0_i32 = arith.constant 0 : i32
    %c0_i32_0 = arith.constant 0 : i32
    return %arg0, %c0_i32 : i32, i32
  }
  func.func @transform_2(%arg0: i32) -> (i32, i32) {
    %c0_i32 = arith.constant 0 : i32
    %c0_i32_0 = arith.constant 0 : i32
    %c0_i32_1 = arith.constant 0 : i32
    return %c0_i32, %c0_i32_0 : i32, i32
  }
  func.func @transform_3(%arg0: i32) -> (i32, i32, i32) {
    %c0_i32 = arith.constant 0 : i32
    %c0_i32_0 = arith.constant 0 : i32
    %c0_i32_1 = arith.constant 0 : i32
    %c0_i32_2 = arith.constant 0 : i32
    return %c0_i32, %c0_i32_0, %c0_i32_1 : i32, i32, i32
  }
  func.func @transform_4(%arg0: i32) -> (i32, i32) {
    %c0_i32 = arith.constant 0 : i32
    %c0_i32_0 = arith.constant 0 : i32
    %c0_i32_1 = arith.constant 0 : i32
    return %c0_i32, %c0_i32_0 : i32, i32
  }
  func.func @transform_5(%arg0: i32) -> (i32, i32, i32) {
    %c0_i32 = arith.constant 0 : i32
    %c0_i32_0 = arith.constant 0 : i32
    %c0_i32_1 = arith.constant 0 : i32
    %c0_i32_2 = arith.constant 0 : i32
    return %c0_i32, %c0_i32_0, %c0_i32_1 : i32, i32, i32
  }
  func.func @transform_6(%arg0: i32) -> (i32, i32) {
    %c0_i32 = arith.constant 0 : i32
    %c0_i32_0 = arith.constant 0 : i32
    %c0_i32_1 = arith.constant 0 : i32
    return %c0_i32, %c0_i32_0 : i32, i32
  }
  func.func @transform_7(%arg0: i32) -> (i32, i32, i32) {
    %c0_i32 = arith.constant 0 : i32
    %c0_i32_0 = arith.constant 0 : i32
    %c0_i32_1 = arith.constant 0 : i32
    %c0_i32_2 = arith.constant 0 : i32
    return %c0_i32, %c0_i32_0, %c0_i32_1 : i32, i32, i32
  }
  func.func @transform_8(%arg0: i32) -> (i32, i32) {
    %c0_i32 = arith.constant 0 : i32
    %c0_i32_0 = arith.constant 0 : i32
    %c0_i32_1 = arith.constant 0 : i32
    return %c0_i32, %c0_i32_0 : i32, i32
  }
  func.func @transform_9(%arg0: i32) -> (i32, i32) {
    %c0_i32 = arith.constant 0 : i32
    %c0_i32_0 = arith.constant 0 : i32
    %c0_i32_1 = arith.constant 0 : i32
    return %c0_i32, %c0_i32_0 : i32, i32
  }
  func.func @transform_10(%arg0: i32) -> (i32, i32) {
    %c0_i32 = arith.constant 0 : i32
    %c0_i32_0 = arith.constant 0 : i32
    %c0_i32_1 = arith.constant 0 : i32
    return %c0_i32, %c0_i32_0 : i32, i32
  }
  func.func @transform_11(%arg0: i32) -> (i32, i32) {
    %c0_i32 = arith.constant 0 : i32
    %c0_i32_0 = arith.constant 0 : i32
    %c0_i32_1 = arith.constant 0 : i32
    return %c0_i32, %c0_i32_0 : i32, i32
  }
  func.func @transform_12(%arg0: i32) -> (i32, i32) {
    %c0_i32 = arith.constant 0 : i32
    %c0_i32_0 = arith.constant 0 : i32
    %c0_i32_1 = arith.constant 0 : i32
    return %c0_i32, %c0_i32_0 : i32, i32
  }
  func.func @transform_13(%arg0: i32) -> (i32, i32, i32) {
    %c0_i32 = arith.constant 0 : i32
    %c0_i32_0 = arith.constant 0 : i32
    %c0_i32_1 = arith.constant 0 : i32
    return %arg0, %c0_i32, %c0_i32_0 : i32, i32, i32
  }
}

</mosaic_0001>

<llo_original>
// kernel: _forward_impl.1
$region0: #{_forward_impl.1}
  #allocation0 [shape = 'u32[]', space=smem, size = 0x4, offset = 0x4, fixed_abs, tag = 'smem constant byte address 0x4 - core index']
  #allocation1 [shape = 'u32[144,128]{1,0:T(1,128)}', space=vmem, size = 0x12000, scoped, tag = 'internal scratch']
  %s0 = inlined_call_operand.vmem [shape: f32[9], index: 0, kind: input, shape index: {}]
  %s1 = inlined_call_operand.vmem [shape: bf16[512,32], index: 1, kind: input, shape index: {}]
  %s2 = inlined_call_operand.vmem [shape: bf16[32,16], index: 2, kind: input, shape index: {}]
  %s3 = inlined_call_operand.vmem [shape: bf16[2,16,16], index: 3, kind: input, shape index: {}]
  %s4 = inlined_call_operand.vmem [shape: bf16[32,32], index: 4, kind: input, shape index: {}]
  %s5 = inlined_call_operand.vmem [shape: bf16[2,32,32], index: 5, kind: input, shape index: {}]
  %s6 = inlined_call_operand.vmem [shape: bf16[64,64], index: 6, kind: input, shape index: {}]
  %s7 = inlined_call_operand.vmem [shape: bf16[2,64,64], index: 7, kind: input, shape index: {}]
  %s8 = inlined_call_operand.vmem [shape: bf16[128,10], index: 8, kind: input, shape index: {}]
  %s9 = inlined_call_operand.vmem [shape: f32[16,64], index: 9, kind: input, shape index: {}]
  %s10 = inlined_call_operand.vmem [shape: bf16[64,256], index: 10, kind: input, shape index: {}]
  %s11 = inlined_call_operand.vmem [shape: bf16[16,64], index: 11, kind: input, shape index: {}]
  %s12 = inlined_call_operand.vmem [shape: bf16[2,32], index: 12, kind: input, shape index: {}]
  %s13 = inlined_call_operand.hbm [shape: f32[1,2,10], index: 13, kind: output, shape index: {}]
  %s14 = sld [smem:[#allocation0]]
  $region66: #{_forward_impl.1} parent=0
    _
  %s16 = ssub.s32 1, %s14
  %s17 = scalar_select 0, %s16, %s14
  $region1: #{_forward_impl.1} parent=0
    #allocation2 [shape = 'u8[512]{0}', space=smem, size = 0x200, scoped, tag = 'input window, operand 0, single buffered']
    #allocation3 [shape = 's32[1]{0}', space=sflag, size = 0x4, scoped, tag = 'scoped memory for _forward_impl.1']
    #allocation4 [shape = 's32[1]{0}', space=sflag, size = 0x4, scoped, tag = 'scoped memory for _forward_impl.1']
    #allocation5 [shape = 'u8[1024]{0}', space=vmem, size = 0x400, scoped, tag = 'output window, operand 0, single buffered']
    %18 = vsyncpa [#allocation4], 0
    %19 = vsyncpa [#allocation3], 0
    // Predicated region
    $region2: #{_forward_impl.1} parent=1 // pred_check
      _
    $region3: #{_forward_impl.1} parent=1 // pred_check_branch
      %21 = sbr.rel (0) target = $region5
    $region4: #{_forward_impl.1} parent=1 // pred_region
      %s23 = ssub.s32 16, 16
      %24 = vsyncadd [#allocation4], %s23
      %s26 = sshll.u32 %s0, 4
      %s27 = int_to_ptr.vmem [resolvable:$true] %s26
      %29 = dma.vmem_to_smem %s27, 16, [#allocation2], [#allocation4]
    $region5: #{_forward_impl.1} parent=1 // pred_fallthru
      _
    // Predicated region
    $region6: #{_forward_impl.1} parent=1 // pred_check
      _
    $region7: #{_forward_impl.1} parent=1 // pred_check_branch
      %31 = sbr.rel (0) target = $region9
    $region8: #{_forward_impl.1} parent=1 // pred_region
      _
    $region9: #{_forward_impl.1} parent=1 // pred_fallthru
      _
    // Predicated region
    $region10: #{_forward_impl.1} parent=1 // pred_check
      _
    $region11: #{_forward_impl.1} parent=1 // pred_check_branch
      %33 = sbr.rel (0) target = $region13
    $region12: #{_forward_impl.1} parent=1 // pred_region
      _
    $region13: #{_forward_impl.1} parent=1 // pred_fallthru
      _
    // Predicated region
    $region14: #{_forward_impl.1} parent=1 // pred_check
      _
    $region15: #{_forward_impl.1} parent=1 // pred_check_branch
      %35 = sbr.rel (0) target = $region17
    $region16: #{_forward_impl.1} parent=1 // pred_region
      _
    $region17: #{_forward_impl.1} parent=1 // pred_fallthru
      _
    // Predicated region
    $region18: #{_forward_impl.1} parent=1 // pred_check
      _
    $region19: #{_forward_impl.1} parent=1 // pred_check_branch
      %37 = sbr.rel (0) target = $region21
    $region20: #{_forward_impl.1} parent=1 // pred_region
      _
    $region21: #{_forward_impl.1} parent=1 // pred_fallthru
      _
    // Predicated region
    $region22: #{_forward_impl.1} parent=1 // pred_check
      _
    $region23: #{_forward_impl.1} parent=1 // pred_check_branch
      %39 = sbr.rel (0) target = $region25
    $region24: #{_forward_impl.1} parent=1 // pred_region
      _
    $region25: #{_forward_impl.1} parent=1 // pred_fallthru
      _
    // Predicated region
    $region26: #{_forward_impl.1} parent=1 // pred_check
      _
    $region27: #{_forward_impl.1} parent=1 // pred_check_branch
      %41 = sbr.rel (0) target = $region29
    $region28: #{_forward_impl.1} parent=1 // pred_region
      _
    $region29: #{_forward_impl.1} parent=1 // pred_fallthru
      _
    // Predicated region
    $region30: #{_forward_impl.1} parent=1 // pred_check
      _
    $region31: #{_forward_impl.1} parent=1 // pred_check_branch
      %43 = sbr.rel (0) target = $region33
    $region32: #{_forward_impl.1} parent=1 // pred_region
      _
    $region33: #{_forward_impl.1} parent=1 // pred_fallthru
      _
    // Predicated region
    $region34: #{_forward_impl.1} parent=1 // pred_check
      _
    $region35: #{_forward_impl.1} parent=1 // pred_check_branch
      %45 = sbr.rel (0) target = $region37
    $region36: #{_forward_impl.1} parent=1 // pred_region
      _
    $region37: #{_forward_impl.1} parent=1 // pred_fallthru
      _
    // Predicated region
    $region38: #{_forward_impl.1} parent=1 // pred_check
      _
    $region39: #{_forward_impl.1} parent=1 // pred_check_branch
      %47 = sbr.rel (0) target = $region41
    $region40: #{_forward_impl.1} parent=1 // pred_region
      _
    $region41: #{_forward_impl.1} parent=1 // pred_fallthru
      _
    // Predicated region
    $region42: #{_forward_impl.1} parent=1 // pred_check
      _
    $region43: #{_forward_impl.1} parent=1 // pred_check_branch
      %49 = sbr.rel (0) target = $region45
    $region44: #{_forward_impl.1} parent=1 // pred_region
      _
    $region45: #{_forward_impl.1} parent=1 // pred_fallthru
      _
    // Predicated region
    $region46: #{_forward_impl.1} parent=1 // pred_check
      _
    $region47: #{_forward_impl.1} parent=1 // pred_check_branch
      %51 = sbr.rel (0) target = $region49
    $region48: #{_forward_impl.1} parent=1 // pred_region
      _
    $region49: #{_forward_impl.1} parent=1 // pred_fallthru
      _
    // Predicated region
    $region50: #{_forward_impl.1} parent=1 // pred_check
      _
    $region51: #{_forward_impl.1} parent=1 // pred_check_branch
      %53 = sbr.rel (0) target = $region53
    $region52: #{_forward_impl.1} parent=1 // pred_region
      _
    $region53: #{_forward_impl.1} parent=1 // pred_fallthru
      _
    // Predicated region
    $region54: #{_forward_impl.1} parent=1 // pred_check
      _
    $region55: #{_forward_impl.1} parent=1 // pred_check_branch
      %55 = sbr.rel (0) target = $region57
    $region56: #{_forward_impl.1} parent=1 // pred_region
      %56 = dma.done [#allocation4], 16
    $region57: #{_forward_impl.1} parent=1 // pred_fallthru
      _
    %57 = sfence
    %v59 = vld [vmem:[%s1] sm:$0xf]
    %v60 = vld [vmem:[%s1 + $0x4] sm:$0xf]
    %v61 = vld [vmem:[%s1 + $0x8] sm:$0xf]
    %v62 = vld [vmem:[%s1 + $0xc] sm:$0xf]
    %v63 = vld [vmem:[%s1 + $0x10] sm:$0xf]
    %v64 = vld [vmem:[%s1 + $0x14] sm:$0xf]
    %v65 = vld [vmem:[%s1 + $0x18] sm:$0xf]
    %v66 = vld [vmem:[%s1 + $0x1c] sm:$0xf]
    %v67 = vld [vmem:[%s1 + $0x20] sm:$0xf]
    %v68 = vld [vmem:[%s1 + $0x24] sm:$0xf]
    %v69 = vld [vmem:[%s1 + $0x28] sm:$0xf]
    %v70 = vld [vmem:[%s1 + $0x2c] sm:$0xf]
    %v71 = vld [vmem:[%s1 + $0x30] sm:$0xf]
    %v72 = vld [vmem:[%s1 + $0x34] sm:$0xf]
    %v73 = vld [vmem:[%s1 + $0x38] sm:$0xf]
    %v74 = vld [vmem:[%s1 + $0x3c] sm:$0xf]
    %v75 = vld [vmem:[%s1 + $0x40] sm:$0xf]
    %v76 = vld [vmem:[%s1 + $0x44] sm:$0xf]
    %v77 = vld [vmem:[%s1 + $0x48] sm:$0xf]
    %v78 = vld [vmem:[%s1 + $0x4c] sm:$0xf]
    %v79 = vld [vmem:[%s1 + $0x50] sm:$0xf]
    %v80 = vld [vmem:[%s1 + $0x54] sm:$0xf]
    %v81 = vld [vmem:[%s1 + $0x58] sm:$0xf]
    %v82 = vld [vmem:[%s1 + $0x5c] sm:$0xf]
    %v83 = vld [vmem:[%s1 + $0x60] sm:$0xf]
    %v84 = vld [vmem:[%s1 + $0x64] sm:$0xf]
    %v85 = vld [vmem:[%s1 + $0x68] sm:$0xf]
    %v86 = vld [vmem:[%s1 + $0x6c] sm:$0xf]
    %v87 = vld [vmem:[%s1 + $0x70] sm:$0xf]
    %v88 = vld [vmem:[%s1 + $0x74] sm:$0xf]
    %v89 = vld [vmem:[%s1 + $0x78] sm:$0xf]
    %v90 = vld [vmem:[%s1 + $0x7c] sm:$0xf]
    %v91 = vld [vmem:[%s1 + $0x80] sm:$0xf]
    %v92 = vld [vmem:[%s1 + $0x84] sm:$0xf]
    %v93 = vld [vmem:[%s1 + $0x88] sm:$0xf]
    %v94 = vld [vmem:[%s1 + $0x8c] sm:$0xf]
    %v95 = vld [vmem:[%s1 + $0x90] sm:$0xf]
    %v96 = vld [vmem:[%s1 + $0x94] sm:$0xf]
    %v97 = vld [vmem:[%s1 + $0x98] sm:$0xf]
    %v98 = vld [vmem:[%s1 + $0x9c] sm:$0xf]
    %v99 = vld [vmem:[%s1 + $0xa0] sm:$0xf]
    %v100 = vld [vmem:[%s1 + $0xa4] sm:$0xf]
    %v101 = vld [vmem:[%s1 + $0xa8] sm:$0xf]
    %v102 = vld [vmem:[%s1 + $0xac] sm:$0xf]
    %v103 = vld [vmem:[%s1 + $0xb0] sm:$0xf]
    %v104 = vld [vmem:[%s1 + $0xb4] sm:$0xf]
    %v105 = vld [vmem:[%s1 + $0xb8] sm:$0xf]
    %v106 = vld [vmem:[%s1 + $0xbc] sm:$0xf]
    %v107 = vld [vmem:[%s1 + $0xc0] sm:$0xf]
    %v108 = vld [vmem:[%s1 + $0xc4] sm:$0xf]
    %v109 = vld [vmem:[%s1 + $0xc8] sm:$0xf]
    %v110 = vld [vmem:[%s1 + $0xcc] sm:$0xf]
    %v111 = vld [vmem:[%s1 + $0xd0] sm:$0xf]
    %v112 = vld [vmem:[%s1 + $0xd4] sm:$0xf]
    %v113 = vld [vmem:[%s1 + $0xd8] sm:$0xf]
    %v114 = vld [vmem:[%s1 + $0xdc] sm:$0xf]
    %v115 = vld [vmem:[%s1 + $0xe0] sm:$0xf]
    %v116 = vld [vmem:[%s1 + $0xe4] sm:$0xf]
    %v117 = vld [vmem:[%s1 + $0xe8] sm:$0xf]
    %v118 = vld [vmem:[%s1 + $0xec] sm:$0xf]
    %v119 = vld [vmem:[%s1 + $0xf0] sm:$0xf]
    %v120 = vld [vmem:[%s1 + $0xf4] sm:$0xf]
    %v121 = vld [vmem:[%s1 + $0xf8] sm:$0xf]
    %v122 = vld [vmem:[%s1 + $0xfc] sm:$0xf]
    %v123 = vld [vmem:[%s2] sm:$0xf]
    %v124 = vld [vmem:[%s2 + $0x4] sm:$0xf]
    %v125 = vld [vmem:[%s2 + $0x8] sm:$0xf]
    %v126 = vld [vmem:[%s2 + $0xc] sm:$0xf]
    %v127 = vld [vmem:[%s9] sm:$0x1]
    %v128 = vlaneseq
    %v129 = vshrl.u32 %v128, 7
    %v130 = vsub.s32 0, %v129
    %v131 = vrot.slane %v127, %v130
    %v196 = vunpack.c.l.b16 %v59
    %v197 = vunpack.c.l.b16 %v60
    %v198 = vunpack.c.l.b16 %v61
    %v199 = vunpack.c.l.b16 %v62
    %v200 = vunpack.c.l.b16 %v63
    %v201 = vunpack.c.l.b16 %v64
    %v202 = vunpack.c.l.b16 %v65
    %v203 = vunpack.c.l.b16 %v66
    %v204 = vunpack.c.l.b16 %v67
    %v205 = vunpack.c.l.b16 %v68
    %v206 = vunpack.c.l.b16 %v69
    %v207 = vunpack.c.l.b16 %v70
    %v208 = vunpack.c.l.b16 %v71
    %v209 = vunpack.c.l.b16 %v72
    %v210 = vunpack.c.l.b16 %v73
    %v211 = vunpack.c.l.b16 %v74
    %v212 = vunpack.c.l.b16 %v75
    %v213 = vunpack.c.l.b16 %v76
    %v214 = vunpack.c.l.b16 %v77
    %v215 = vunpack.c.l.b16 %v78
    %v216 = vunpack.c.l.b16 %v79
    %v217 = vunpack.c.l.b16 %v80
    %v218 = vunpack.c.l.b16 %v81
    %v219 = vunpack.c.l.b16 %v82
    %v220 = vunpack.c.l.b16 %v83
    %v221 = vunpack.c.l.b16 %v84
    %v222 = vunpack.c.l.b16 %v85
    %v223 = vunpack.c.l.b16 %v86
    %v224 = vunpack.c.l.b16 %v87
    %v225 = vunpack.c.l.b16 %v88
    %v226 = vunpack.c.l.b16 %v89
    %v227 = vunpack.c.l.b16 %v90
    %v228 = vunpack.c.l.b16 %v91
    %v229 = vunpack.c.l.b16 %v92
    %v230 = vunpack.c.l.b16 %v93
    %v231 = vunpack.c.l.b16 %v94
    %v232 = vunpack.c.l.b16 %v95
    %v233 = vunpack.c.l.b16 %v96
    %v234 = vunpack.c.l.b16 %v97
    %v235 = vunpack.c.l.b16 %v98
    %v236 = vunpack.c.l.b16 %v99
    %v237 = vunpack.c.l.b16 %v100
    %v238 = vunpack.c.l.b16 %v101
    %v239 = vunpack.c.l.b16 %v102
    %v240 = vunpack.c.l.b16 %v103
    %v241 = vunpack.c.l.b16 %v104
    %v242 = vunpack.c.l.b16 %v105
    %v243 = vunpack.c.l.b16 %v106
    %v244 = vunpack.c.l.b16 %v107
    %v245 = vunpack.c.l.b16 %v108
    %v246 = vunpack.c.l.b16 %v109
    %v247 = vunpack.c.l.b16 %v110
    %v248 = vunpack.c.l.b16 %v111
    %v249 = vunpack.c.l.b16 %v112
    %v250 = vunpack.c.l.b16 %v113
    %v251 = vunpack.c.l.b16 %v114
    %v252 = vunpack.c.l.b16 %v115
    %v253 = vunpack.c.l.b16 %v116
    %v254 = vunpack.c.l.b16 %v117
    %v255 = vunpack.c.l.b16 %v118
    %v256 = vunpack.c.l.b16 %v119
    %v257 = vunpack.c.l.b16 %v120
    %v258 = vunpack.c.l.b16 %v121
    %v259 = vunpack.c.l.b16 %v122
    %v260 = vpack.c.b16 %v197, %v196
    %v261 = vpack.c.b16 %v199, %v198
    %v262 = vpack.c.b16 %v201, %v200
    %v263 = vpack.c.b16 %v203, %v202
    %v264 = vpack.c.b16 %v205, %v204
    %v265 = vpack.c.b16 %v207, %v206
    %v266 = vpack.c.b16 %v209, %v208
    %v267 = vpack.c.b16 %v211, %v210
    %v268 = vpack.c.b16 %v213, %v212
    %v269 = vpack.c.b16 %v215, %v214
    %v270 = vpack.c.b16 %v217, %v216
    %v271 = vpack.c.b16 %v219, %v218
    %v272 = vpack.c.b16 %v221, %v220
    %v273 = vpack.c.b16 %v223, %v222
    %v274 = vpack.c.b16 %v225, %v224
    %v275 = vpack.c.b16 %v227, %v226
    %v276 = vpack.c.b16 %v229, %v228
    %v277 = vpack.c.b16 %v231, %v230
    %v278 = vpack.c.b16 %v233, %v232
    %v279 = vpack.c.b16 %v235, %v234
    %v280 = vpack.c.b16 %v237, %v236
    %v281 = vpack.c.b16 %v239, %v238
    %v282 = vpack.c.b16 %v241, %v240
    %v283 = vpack.c.b16 %v243, %v242
    %v284 = vpack.c.b16 %v245, %v244
    %v285 = vpack.c.b16 %v247, %v246
    %v286 = vpack.c.b16 %v249, %v248
    %v287 = vpack.c.b16 %v251, %v250
    %v288 = vpack.c.b16 %v253, %v252
    %v289 = vpack.c.b16 %v255, %v254
    %v290 = vpack.c.b16 %v257, %v256
    %v291 = vpack.c.b16 %v259, %v258
    %v296 = vunpack.c.l.b16 %v123
    %v297 = vunpack.c.l.b16 %v124
    %v298 = vunpack.c.l.b16 %v125
    %v299 = vunpack.c.l.b16 %v126
    %v300 = vpack.c.b16 %v297, %v296
    %v301 = vpack.c.b16 %v299, %v298
    %vm304 = vcmask 261120
    %v306 = vsel %vm304, %v260, 0
    %v309 = vsel %vm304, %v261, 0
    %v312 = vsel %vm304, %v262, 0
    %v315 = vsel %vm304, %v263, 0
    %v318 = vsel %vm304, %v264, 0
    %v321 = vsel %vm304, %v265, 0
    %v324 = vsel %vm304, %v266, 0
    %v327 = vsel %vm304, %v267, 0
    %v330 = vsel %vm304, %v268, 0
    %v333 = vsel %vm304, %v269, 0
    %v336 = vsel %vm304, %v270, 0
    %v339 = vsel %vm304, %v271, 0
    %v342 = vsel %vm304, %v272, 0
    %v345 = vsel %vm304, %v273, 0
    %v348 = vsel %vm304, %v274, 0
    %v351 = vsel %vm304, %v275, 0
    %v354 = vsel %vm304, %v276, 0
    %v357 = vsel %vm304, %v277, 0
    %v360 = vsel %vm304, %v278, 0
    %v363 = vsel %vm304, %v279, 0
    %v366 = vsel %vm304, %v280, 0
    %v369 = vsel %vm304, %v281, 0
    %v372 = vsel %vm304, %v282, 0
    %v375 = vsel %vm304, %v283, 0
    %v378 = vsel %vm304, %v284, 0
    %v381 = vsel %vm304, %v285, 0
    %v384 = vsel %vm304, %v286, 0
    %v387 = vsel %vm304, %v287, 0
    %v390 = vsel %vm304, %v288, 0
    %v393 = vsel %vm304, %v289, 0
    %v396 = vsel %vm304, %v290, 0
    %v399 = vsel %vm304, %v291, 0
    %401 = vmatprep.subr.bf16.mxu0 0
    %402 = vmatpush1.bf16.msra.mxu0 %v300
    %403 = vmatprep.subr.bf16.mxu0 0
    %404 = vmatpush1.bf16.msra.mxu0 %v301
    %405 = vmatprep.subr.bf16.mxu0 0
    %406 = vmatpush1.bf16.msra.mxu0 0
    %407 = vmatprep.subr.bf16.mxu0 0
    %408 = vmatpush1.bf16.msra.mxu0 0
    %409 = vmatprep.subr.bf16.mxu0 0
    %410 = vmatpush1.bf16.msra.mxu0 0
    %411 = vmatprep.subr.bf16.mxu0 0
    %412 = vmatpush1.bf16.msra.mxu0 0
    %413 = vmatprep.subr.bf16.mxu0 0
    %414 = vmatpush1.bf16.msra.mxu0 0
    %415 = vmatprep.subr.bf16.mxu0 0
    %416 = vmatpush1.bf16.msra.mxu0 0
    %417 = vmatprep.subr.bf16.mxu0 0
    %418 = vmatpush1.bf16.msra.mxu0 0
    %419 = vmatprep.subr.bf16.mxu0 0
    %420 = vmatpush1.bf16.msra.mxu0 0
    %421 = vmatprep.subr.bf16.mxu0 0
    %422 = vmatpush1.bf16.msra.mxu0 0
    %423 = vmatprep.subr.bf16.mxu0 0
    %424 = vmatpush1.bf16.msra.mxu0 0
    %425 = vmatprep.subr.bf16.mxu0 0
    %426 = vmatpush1.bf16.msra.mxu0 0
    %427 = vmatprep.subr.bf16.mxu0 0
    %428 = vmatpush1.bf16.msra.mxu0 0
    %429 = vmatprep.subr.bf16.mxu0 0
    %430 = vmatpush1.bf16.msra.mxu0 0
    %431 = vmatprep.subr.bf16.mxu0 0
    %432 = vmatpush1.bf16.msra.mxu0 0
    %433 = vmatprep.mubr.bf16.mxu0 0
    %434 = vmatmul.mubr.bf16.gmra.mrb[0].mxu0 %v306
    %v435 = vpop.f32.mrb[0].mxu0
    %v436 = vadd.f32 %v131, %v435
    %v437 = vpop.f32.mrb[0].mxu0
    %v438 = vpop.f32.mrb[0].mxu0
    %v439 = vadd.f32 %v131, %v438
    %v440 = vpop.f32.mrb[0].mxu0
    %441 = vmatprep.mubr.bf16.mxu0 0
    %442 = vmatmul.mubr.bf16.gmra.mrb[0].mxu0 %v309
    %v443 = vpop.f32.mrb[0].mxu0
    %v444 = vadd.f32 %v131, %v443
    %v445 = vpop.f32.mrb[0].mxu0
    %v446 = vpop.f32.mrb[0].mxu0
    %v447 = vadd.f32 %v131, %v446
    %v448 = vpop.f32.mrb[0].mxu0
    %449 = vmatprep.mubr.bf16.mxu0 0
    %450 = vmatmul.mubr.bf16.gmra.mrb[0].mxu0 %v312
    %v451 = vpop.f32.mrb[0].mxu0
    %v452 = vadd.f32 %v131, %v451
    %v453 = vpop.f32.mrb[0].mxu0
    %v454 = vpop.f32.mrb[0].mxu0
    %v455 = vadd.f32 %v131, %v454
    %v456 = vpop.f32.mrb[0].mxu0
    %457 = vmatprep.mubr.bf16.mxu0 0
    %458 = vmatmul.mubr.bf16.gmra.mrb[0].mxu0 %v315
    %v459 = vpop.f32.mrb[0].mxu0
    %v460 = vadd.f32 %v131, %v459
    %v461 = vpop.f32.mrb[0].mxu0
    %v462 = vpop.f32.mrb[0].mxu0
    %v463 = vadd.f32 %v131, %v462
    %v464 = vpop.f32.mrb[0].mxu0
    %465 = vmatprep.mubr.bf16.mxu0 0
    %466 = vmatmul.mubr.bf16.gmra.mrb[0].mxu0 %v318
    %v467 = vpop.f32.mrb[0].mxu0
    %v468 = vadd.f32 %v131, %v467
    %v469 = vpop.f32.mrb[0].mxu0
    %v470 = vpop.f32.mrb[0].mxu0
    %v471 = vadd.f32 %v131, %v470
    %v472 = vpop.f32.mrb[0].mxu0
    %473 = vmatprep.mubr.bf16.mxu0 0
    %474 = vmatmul.mubr.bf16.gmra.mrb[0].mxu0 %v321
    %v475 = vpop.f32.mrb[0].mxu0
    %v476 = vadd.f32 %v131, %v475
    %v477 = vpop.f32.mrb[0].mxu0
    %v478 = vpop.f32.mrb[0].mxu0
    %v479 = vadd.f32 %v131, %v478
    %v480 = vpop.f32.mrb[0].mxu0
    %481 = vmatprep.mubr.bf16.mxu0 0
    %482 = vmatmul.mubr.bf16.gmra.mrb[0].mxu0 %v324
    %v483 = vpop.f32.mrb[0].mxu0
    %v484 = vadd.f32 %v131, %v483
    %v485 = vpop.f32.mrb[0].mxu0
    %v486 = vpop.f32.mrb[0].mxu0
    %v487 = vadd.f32 %v131, %v486
    %v488 = vpop.f32.mrb[0].mxu0
    %489 = vmatprep.mubr.bf16.mxu0 0
    %490 = vmatmul.mubr.bf16.gmra.mrb[0].mxu0 %v327
    %v491 = vpop.f32.mrb[0].mxu0
    %v492 = vadd.f32 %v131, %v491
    %v493 = vpop.f32.mrb[0].mxu0
    %v494 = vpop.f32.mrb[0].mxu0
    %v495 = vadd.f32 %v131, %v494
    %v496 = vpop.f32.mrb[0].mxu0
    %497 = vmatprep.mubr.bf16.mxu0 0
    %498 = vmatmul.mubr.bf16.gmra.mrb[0].mxu0 %v330
    %v499 = vpop.f32.mrb[0].mxu0
    %v500 = vadd.f32 %v131, %v499
    %v501 = vpop.f32.mrb[0].mxu0
    %v502 = vpop.f32.mrb[0].mxu0
    %v503 = vadd.f32 %v131, %v502
    %v504 = vpop.f32.mrb[0].mxu0
    %505 = vmatprep.mubr.bf16.mxu0 0
    %506 = vmatmul.mubr.bf16.gmra.mrb[0].mxu0 %v333
    %v507 = vpop.f32.mrb[0].mxu0
    %v508 = vadd.f32 %v131, %v507
    %v509 = vpop.f32.mrb[0].mxu0
    %v510 = vpop.f32.mrb[0].mxu0
    %v511 = vadd.f32 %v131, %v510
    %v512 = vpop.f32.mrb[0].mxu0
    %513 = vmatprep.mubr.bf16.mxu0 0
    %514 = vmatmul.mubr.bf16.gmra.mrb[0].mxu0 %v336
    %v515 = vpop.f32.mrb[0].mxu0
    %v516 = vadd.f32 %v131, %v515
    %v517 = vpop.f32.mrb[0].mxu0
    %v518 = vpop.f32.mrb[0].mxu0
    %v519 = vadd.f32 %v131, %v518
    %v520 = vpop.f32.mrb[0].mxu0
    %521 = vmatprep.mubr.bf16.mxu0 0
    %522 = vmatmul.mubr.bf16.gmra.mrb[0].mxu0 %v339
    %v523 = vpop.f32.mrb[0].mxu0
    %v524 = vadd.f32 %v131, %v523
    %v525 = vpop.f32.mrb[0].mxu0
    %v526 = vpop.f32.mrb[0].mxu0
    %v527 = vadd.f32 %v131, %v526
    %v528 = vpop.f32.mrb[0].mxu0
    %529 = vmatprep.mubr.bf16.mxu0 0
    %530 = vmatmul.mubr.bf16.gmra.mrb[0].mxu0 %v342
    %v531 = vpop.f32.mrb[0].mxu0
    %v532 = vadd.f32 %v131, %v531
    %v533 = vpop.f32.mrb[0].mxu0
    %v534 = vpop.f32.mrb[0].mxu0
    %v535 = vadd.f32 %v131, %v534
    %v536 = vpop.f32.mrb[0].mxu0
    %537 = vmatprep.mubr.bf16.mxu0 0
    %538 = vmatmul.mubr.bf16.gmra.mrb[0].mxu0 %v345
    %v539 = vpop.f32.mrb[0].mxu0
    %v540 = vadd.f32 %v131, %v539
    %v541 = vpop.f32.mrb[0].mxu0
    %v542 = vpop.f32.mrb[0].mxu0
    %v543 = vadd.f32 %v131, %v542
    %v544 = vpop.f32.mrb[0].mxu0
    %545 = vmatprep.mubr.bf16.mxu0 0
    %546 = vmatmul.mubr.bf16.gmra.mrb[0].mxu0 %v348
    %v547 = vpop.f32.mrb[0].mxu0
    %v548 = vadd.f32 %v131, %v547
    %v549 = vpop.f32.mrb[0].mxu0
    %v550 = vpop.f32.mrb[0].mxu0
    %v551 = vadd.f32 %v131, %v550
    %v552 = vpop.f32.mrb[0].mxu0
    %553 = vmatprep.mubr.bf16.mxu0 0
    %554 = vmatmul.mubr.bf16.gmra.mrb[0].mxu0 %v351
    %v555 = vpop.f32.mrb[0].mxu0
    %v556 = vadd.f32 %v131, %v555
    %v557 = vpop.f32.mrb[0].mxu0
    %v558 = vpop.f32.mrb[0].mxu0
    %v559 = vadd.f32 %v131, %v558
    %v560 = vpop.f32.mrb[0].mxu0
    %561 = vmatprep.mubr.bf16.mxu0 0
    %562 = vmatmul.mubr.bf16.gmra.mrb[0].mxu0 %v354
    %v563 = vpop.f32.mrb[0].mxu0
    %v564 = vadd.f32 %v131, %v563
    %v565 = vpop.f32.mrb[0].mxu0
    %v566 = vpop.f32.mrb[0].mxu0
    %v567 = vadd.f32 %v131, %v566
    %v568 = vpop.f32.mrb[0].mxu0
    %569 = vmatprep.mubr.bf16.mxu0 0
    %570 = vmatmul.mubr.bf16.gmra.mrb[0].mxu0 %v357
    %v571 = vpop.f32.mrb[0].mxu0
    %v572 = vadd.f32 %v131, %v571
    %v573 = vpop.f32.mrb[0].mxu0
    %v574 = vpop.f32.mrb[0].mxu0
    %v575 = vadd.f32 %v131, %v574
    %v576 = vpop.f32.mrb[0].mxu0
    %577 = vmatprep.mubr.bf16.mxu0 0
    %578 = vmatmul.mubr.bf16.gmra.mrb[0].mxu0 %v360
    %v579 = vpop.f32.mrb[0].mxu0
    %v580 = vadd.f32 %v131, %v579
    %v581 = vpop.f32.mrb[0].mxu0
    %v582 = vpop.f32.mrb[0].mxu0
    %v583 = vadd.f32 %v131, %v582
    %v584 = vpop.f32.mrb[0].mxu0
    %585 = vmatprep.mubr.bf16.mxu0 0
    %586 = vmatmul.mubr.bf16.gmra.mrb[0].mxu0 %v363
    %v587 = vpop.f32.mrb[0].mxu0
    %v588 = vadd.f32 %v131, %v587
    %v589 = vpop.f32.mrb[0].mxu0
    %v590 = vpop.f32.mrb[0].mxu0
    %v591 = vadd.f32 %v131, %v590
    %v592 = vpop.f32.mrb[0].mxu0
    %593 = vmatprep.mubr.bf16.mxu0 0
    %594 = vmatmul.mubr.bf16.gmra.mrb[0].mxu0 %v366
    %v595 = vpop.f32.mrb[0].mxu0
    %v596 = vadd.f32 %v131, %v595
    %v597 = vpop.f32.mrb[0].mxu0
    %v598 = vpop.f32.mrb[0].mxu0
    %v599 = vadd.f32 %v131, %v598
    %v600 = vpop.f32.mrb[0].mxu0
    %601 = vmatprep.mubr.bf16.mxu0 0
    %602 = vmatmul.mubr.bf16.gmra.mrb[0].mxu0 %v369
    %v603 = vpop.f32.mrb[0].mxu0
    %v604 = vadd.f32 %v131, %v603
    %v605 = vpop.f32.mrb[0].mxu0
    %v606 = vpop.f32.mrb[0].mxu0
    %v607 = vadd.f32 %v131, %v606
    %v608 = vpop.f32.mrb[0].mxu0
    %609 = vmatprep.mubr.bf16.mxu0 0
    %610 = vmatmul.mubr.bf16.gmra.mrb[0].mxu0 %v372
    %v611 = vpop.f32.mrb[0].mxu0
    %v612 = vadd.f32 %v131, %v611
    %v613 = vpop.f32.mrb[0].mxu0
    %v614 = vpop.f32.mrb[0].mxu0
    %v615 = vadd.f32 %v131, %v614
    %v616 = vpop.f32.mrb[0].mxu0
    %617 = vmatprep.mubr.bf16.mxu0 0
    %618 = vmatmul.mubr.bf16.gmra.mrb[0].mxu0 %v375
    %v619 = vpop.f32.mrb[0].mxu0
    %v620 = vadd.f32 %v131, %v619
    %v621 = vpop.f32.mrb[0].mxu0
    %v622 = vpop.f32.mrb[0].mxu0
    %v623 = vadd.f32 %v131, %v622
    %v624 = vpop.f32.mrb[0].mxu0
    %625 = vmatprep.mubr.bf16.mxu0 0
    %626 = vmatmul.mubr.bf16.gmra.mrb[0].mxu0 %v378
    %v627 = vpop.f32.mrb[0].mxu0
    %v628 = vadd.f32 %v131, %v627
    %v629 = vpop.f32.mrb[0].mxu0
    %v630 = vpop.f32.mrb[0].mxu0
    %v631 = vadd.f32 %v131, %v630
    %v632 = vpop.f32.mrb[0].mxu0
    %633 = vmatprep.mubr.bf16.mxu0 0
    %634 = vmatmul.mubr.bf16.gmra.mrb[0].mxu0 %v381
    %v635 = vpop.f32.mrb[0].mxu0
    %v636 = vadd.f32 %v131, %v635
    %v637 = vpop.f32.mrb[0].mxu0
    %v638 = vpop.f32.mrb[0].mxu0
    %v639 = vadd.f32 %v131, %v638
    %v640 = vpop.f32.mrb[0].mxu0
    %641 = vmatprep.mubr.bf16.mxu0 0
    %642 = vmatmul.mubr.bf16.gmra.mrb[0].mxu0 %v384
    %v643 = vpop.f32.mrb[0].mxu0
    %v644 = vadd.f32 %v131, %v643
    %v645 = vpop.f32.mrb[0].mxu0
    %v646 = vpop.f32.mrb[0].mxu0
    %v647 = vadd.f32 %v131, %v646
    %v648 = vpop.f32.mrb[0].mxu0
    %649 = vmatprep.mubr.bf16.mxu0 0
    %650 = vmatmul.mubr.bf16.gmra.mrb[0].mxu0 %v387
    %v651 = vpop.f32.mrb[0].mxu0
    %v652 = vadd.f32 %v131, %v651
    %v653 = vpop.f32.mrb[0].mxu0
    %v654 = vpop.f32.mrb[0].mxu0
    %v655 = vadd.f32 %v131, %v654
    %v656 = vpop.f32.mrb[0].mxu0
    %657 = vmatprep.mubr.bf16.mxu0 0
    %658 = vmatmul.mubr.bf16.gmra.mrb[0].mxu0 %v390
    %v659 = vpop.f32.mrb[0].mxu0
    %v660 = vadd.f32 %v131, %v659
    %v661 = vpop.f32.mrb[0].mxu0
    %v662 = vpop.f32.mrb[0].mxu0
    %v663 = vadd.f32 %v131, %v662
    %v664 = vpop.f32.mrb[0].mxu0
    %665 = vmatprep.mubr.bf16.mxu0 0
    %666 = vmatmul.mubr.bf16.gmra.mrb[0].mxu0 %v393
    %v667 = vpop.f32.mrb[0].mxu0
    %v668 = vadd.f32 %v131, %v667
    %v669 = vpop.f32.mrb[0].mxu0
    %v670 = vpop.f32.mrb[0].mxu0
    %v671 = vadd.f32 %v131, %v670
    %v672 = vpop.f32.mrb[0].mxu0
    %673 = vmatprep.mubr.bf16.mxu0 0
    %674 = vmatmul.mubr.bf16.gmra.mrb[0].mxu0 %v396
    %v675 = vpop.f32.mrb[0].mxu0
    %v676 = vadd.f32 %v131, %v675
    %v677 = vpop.f32.mrb[0].mxu0
    %v678 = vpop.f32.mrb[0].mxu0
    %v679 = vadd.f32 %v131, %v678
    %v680 = vpop.f32.mrb[0].mxu0
    %681 = vmatprep.mubr.bf16.mxu0 0
    %682 = vmatmul.mubr.bf16.gmra.mrb[0].mxu0 %v399
    %v683 = vpop.f32.mrb[0].mxu0
    %v684 = vadd.f32 %v131, %v683
    %v685 = vpop.f32.mrb[0].mxu0
    %v686 = vpop.f32.mrb[0].mxu0
    %v687 = vadd.f32 %v131, %v686
    %v688 = vpop.f32.mrb[0].mxu0
    %689 = vdwg.mxu0
    %v690 = vpack.c.bf16 %v439, %v436
    %v691 = vpack.c.bf16 %v447, %v444
    %v692 = vpack.c.bf16 %v455, %v452
    %v693 = vpack.c.bf16 %v463, %v460
    %v694 = vpack.c.bf16 %v471, %v468
    %v695 = vpack.c.bf16 %v479, %v476
    %v696 = vpack.c.bf16 %v487, %v484
    %v697 = vpack.c.bf16 %v495, %v492
    %v698 = vpack.c.bf16 %v503, %v500
    %v699 = vpack.c.bf16 %v511, %v508
    %v700 = vpack.c.bf16 %v519, %v516
    %v701 = vpack.c.bf16 %v527, %v524
    %v702 = vpack.c.bf16 %v535, %v532
    %v703 = vpack.c.bf16 %v543, %v540
    %v704 = vpack.c.bf16 %v551, %v548
    %v705 = vpack.c.bf16 %v559, %v556
    %v706 = vpack.c.bf16 %v567, %v564
    %v707 = vpack.c.bf16 %v575, %v572
    %v708 = vpack.c.bf16 %v583, %v580
    %v709 = vpack.c.bf16 %v591, %v588
    %v710 = vpack.c.bf16 %v599, %v596
    %v711 = vpack.c.bf16 %v607, %v604
    %v712 = vpack.c.bf16 %v615, %v612
    %v713 = vpack.c.bf16 %v623, %v620
    %v714 = vpack.c.bf16 %v631, %v628
    %v715 = vpack.c.bf16 %v639, %v636
    %v716 = vpack.c.bf16 %v647, %v644
    %v717 = vpack.c.bf16 %v655, %v652
    %v718 = vpack.c.bf16 %v663, %v660
    %v719 = vpack.c.bf16 %v671, %v668
    %v720 = vpack.c.bf16 %v679, %v676
    %v721 = vpack.c.bf16 %v687, %v684
    %s722 = sld [smem:[#allocation2]]
    %v723 = vunpack.c.l.bf16 %v690
    %v724 = vunpack.c.h.bf16 %v690
    %v725 = vunpack.c.l.bf16 %v691
    %v726 = vunpack.c.h.bf16 %v691
    %v727 = vunpack.c.l.bf16 %v692
    %v728 = vunpack.c.h.bf16 %v692
    %v729 = vunpack.c.l.bf16 %v693
    %v730 = vunpack.c.h.bf16 %v693
    %v731 = vunpack.c.l.bf16 %v694
    %v732 = vunpack.c.h.bf16 %v694
    %v733 = vunpack.c.l.bf16 %v695
    %v734 = vunpack.c.h.bf16 %v695
    %v735 = vunpack.c.l.bf16 %v696
    %v736 = vunpack.c.h.bf16 %v696
    %v737 = vunpack.c.l.bf16 %v697
    %v738 = vunpack.c.h.bf16 %v697
    %v739 = vunpack.c.l.bf16 %v698
    %v740 = vunpack.c.h.bf16 %v698
    %v741 = vunpack.c.l.bf16 %v699
    %v742 = vunpack.c.h.bf16 %v699
    %v743 = vunpack.c.l.bf16 %v700
    %v744 = vunpack.c.h.bf16 %v700
    %v745 = vunpack.c.l.bf16 %v701
    %v746 = vunpack.c.h.bf16 %v701
    %v747 = vunpack.c.l.bf16 %v702
    %v748 = vunpack.c.h.bf16 %v702
    %v749 = vunpack.c.l.bf16 %v703
    %v750 = vunpack.c.h.bf16 %v703
    %v751 = vunpack.c.l.bf16 %v704
    %v752 = vunpack.c.h.bf16 %v704
    %v753 = vunpack.c.l.bf16 %v705
    %v754 = vunpack.c.h.bf16 %v705
    %v755 = vunpack.c.l.bf16 %v706
    %v756 = vunpack.c.h.bf16 %v706
    %v757 = vunpack.c.l.bf16 %v707
    %v758 = vunpack.c.h.bf16 %v707
    %v759 = vunpack.c.l.bf16 %v708
    %v760 = vunpack.c.h.bf16 %v708
    %v761 = vunpack.c.l.bf16 %v709
    %v762 = vunpack.c.h.bf16 %v709
    %v763 = vunpack.c.l.bf16 %v710
    %v764 = vunpack.c.h.bf16 %v710
    %v765 = vunpack.c.l.bf16 %v711
    %v766 = vunpack.c.h.bf16 %v711
    %v767 = vunpack.c.l.bf16 %v712
    %v768 = vunpack.c.h.bf16 %v712
    %v769 = vunpack.c.l.bf16 %v713
    %v770 = vunpack.c.h.bf16 %v713
    %v771 = vunpack.c.l.bf16 %v714
    %v772 = vunpack.c.h.bf16 %v714
    %v773 = vunpack.c.l.bf16 %v715
    %v774 = vunpack.c.h.bf16 %v715
    %v775 = vunpack.c.l.bf16 %v716
    %v776 = vunpack.c.h.bf16 %v716
    %v777 = vunpack.c.l.bf16 %v717
    %v778 = vunpack.c.h.bf16 %v717
    %v779 = vunpack.c.l.bf16 %v718
    %v780 = vunpack.c.h.bf16 %v718
    %v781 = vunpack.c.l.bf16 %v719
    %v782 = vunpack.c.h.bf16 %v719
    %v783 = vunpack.c.l.bf16 %v720
    %v784 = vunpack.c.h.bf16 %v720
    %v785 = vunpack.c.l.bf16 %v721
    %v786 = vunpack.c.h.bf16 %v721
    %v787 = vstv %s722
    %v788 = vmul.f32 %v787, %v723
    %v789 = vmul.f32 %v787, %v724
    %v790 = vmul.f32 %v787, %v725
    %v791 = vmul.f32 %v787, %v726
    %v792 = vmul.f32 %v787, %v727
    %v793 = vmul.f32 %v787, %v728
    %v794 = vmul.f32 %v787, %v729
    %v795 = vmul.f32 %v787, %v730
    %v796 = vmul.f32 %v787, %v731
    %v797 = vmul.f32 %v787, %v732
    %v798 = vmul.f32 %v787, %v733
    %v799 = vmul.f32 %v787, %v734
    %v800 = vmul.f32 %v787, %v735
    %v801 = vmul.f32 %v787, %v736
    %v802 = vmul.f32 %v787, %v737
    %v803 = vmul.f32 %v787, %v738
    %v804 = vmul.f32 %v787, %v739
    %v805 = vmul.f32 %v787, %v740
    %v806 = vmul.f32 %v787, %v741
    %v807 = vmul.f32 %v787, %v742
    %v808 = vmul.f32 %v787, %v743
    %v809 = vmul.f32 %v787, %v744
    %v810 = vmul.f32 %v787, %v745
    %v811 = vmul.f32 %v787, %v746
    %v812 = vmul.f32 %v787, %v747
    %v813 = vmul.f32 %v787, %v748
    %v814 = vmul.f32 %v787, %v749
    %v815 = vmul.f32 %v787, %v750
    %v816 = vmul.f32 %v787, %v751
    %v817 = vmul.f32 %v787, %v752
    %v818 = vmul.f32 %v787, %v753
    %v819 = vmul.f32 %v787, %v754
    %v820 = vmul.f32 %v787, %v755
    %v821 = vmul.f32 %v787, %v756
    %v822 = vmul.f32 %v787, %v757
    %v823 = vmul.f32 %v787, %v758
    %v824 = vmul.f32 %v787, %v759
    %v825 = vmul.f32 %v787, %v760
    %v826 = vmul.f32 %v787, %v761
    %v827 = vmul.f32 %v787, %v762
    %v828 = vmul.f32 %v787, %v763
    %v829 = vmul.f32 %v787, %v764
    %v830 = vmul.f32 %v787, %v765
    %v831 = vmul.f32 %v787, %v766
    %v832 = vmul.f32 %v787, %v767
    %v833 = vmul.f32 %v787, %v768
    %v834 = vmul.f32 %v787, %v769
    %v835 = vmul.f32 %v787, %v770
    %v836 = vmul.f32 %v787, %v771
    %v837 = vmul.f32 %v787, %v772
    %v838 = vmul.f32 %v787, %v773
    %v839 = vmul.f32 %v787, %v774
    %v840 = vmul.f32 %v787, %v775
    %v841 = vmul.f32 %v787, %v776
    %v842 = vmul.f32 %v787, %v777
    %v843 = vmul.f32 %v787, %v778
    %v844 = vmul.f32 %v787, %v779
    %v845 = vmul.f32 %v787, %v780
    %v846 = vmul.f32 %v787, %v781
    %v847 = vmul.f32 %v787, %v782
    %v848 = vmul.f32 %v787, %v783
    %v849 = vmul.f32 %v787, %v784
    %v850 = vmul.f32 %v787, %v785
    %v851 = vmul.f32 %v787, %v786
    %v852 = vmax.f32 %v788, 0.0
    %v853 = vmax.f32 %v789, 0.0
    %v854 = vmax.f32 %v790, 0.0
    %v855 = vmax.f32 %v791, 0.0
    %v856 = vmax.f32 %v792, 0.0
    %v857 = vmax.f32 %v793, 0.0
    %v858 = vmax.f32 %v794, 0.0
    %v859 = vmax.f32 %v795, 0.0
    %v860 = vmax.f32 %v796, 0.0
    %v861 = vmax.f32 %v797, 0.0
    %v862 = vmax.f32 %v798, 0.0
    %v863 = vmax.f32 %v799, 0.0
    %v864 = vmax.f32 %v800, 0.0
    %v865 = vmax.f32 %v801, 0.0
    %v866 = vmax.f32 %v802, 0.0
    %v867 = vmax.f32 %v803, 0.0
    %v868 = vmax.f32 %v804, 0.0
    %v869 = vmax.f32 %v805, 0.0
    %v870 = vmax.f32 %v806, 0.0
    %v871 = vmax.f32 %v807, 0.0
    %v872 = vmax.f32 %v808, 0.0
    %v873 = vmax.f32 %v809, 0.0
    %v874 = vmax.f32 %v810, 0.0
    %v875 = vmax.f32 %v811, 0.0
    %v876 = vmax.f32 %v812, 0.0
    %v877 = vmax.f32 %v813, 0.0
    %v878 = vmax.f32 %v814, 0.0
    %v879 = vmax.f32 %v815, 0.0
    %v880 = vmax.f32 %v816, 0.0
    %v881 = vmax.f32 %v817, 0.0
    %v882 = vmax.f32 %v818, 0.0
    %v883 = vmax.f32 %v819, 0.0
    %v884 = vmax.f32 %v820, 0.0
    %v885 = vmax.f32 %v821, 0.0
    %v886 = vmax.f32 %v822, 0.0
    %v887 = vmax.f32 %v823, 0.0
    %v888 = vmax.f32 %v824, 0.0
    %v889 = vmax.f32 %v825, 0.0
    %v890 = vmax.f32 %v826, 0.0
    %v891 = vmax.f32 %v827, 0.0
    %v892 = vmax.f32 %v828, 0.0
    %v893 = vmax.f32 %v829, 0.0
    %v894 = vmax.f32 %v830, 0.0
    %v895 = vmax.f32 %v831, 0.0
    %v896 = vmax.f32 %v832, 0.0
    %v897 = vmax.f32 %v833, 0.0
    %v898 = vmax.f32 %v834, 0.0
    %v899 = vmax.f32 %v835, 0.0
    %v900 = vmax.f32 %v836, 0.0
    %v901 = vmax.f32 %v837, 0.0
    %v902 = vmax.f32 %v838, 0.0
    %v903 = vmax.f32 %v839, 0.0
    %v904 = vmax.f32 %v840, 0.0
    %v905 = vmax.f32 %v841, 0.0
    %v906 = vmax.f32 %v842, 0.0
    %v907 = vmax.f32 %v843, 0.0
    %v908 = vmax.f32 %v844, 0.0
    %v909 = vmax.f32 %v845, 0.0
    %v910 = vmax.f32 %v846, 0.0
    %v911 = vmax.f32 %v847, 0.0
    %v912 = vmax.f32 %v848, 0.0
    %v913 = vmax.f32 %v849, 0.0
    %v914 = vmax.f32 %v850, 0.0
    %v915 = vmax.f32 %v851, 0.0
    %v916 = vpack.c.bf16 %v853, %v852
    %v917 = vpack.c.bf16 %v855, %v854
    %v918 = vpack.c.bf16 %v857, %v856
    %v919 = vpack.c.bf16 %v859, %v858
    %v920 = vpack.c.bf16 %v861, %v860
    %v921 = vpack.c.bf16 %v863, %v862
    %v922 = vpack.c.bf16 %v865, %v864
    %v923 = vpack.c.bf16 %v867, %v866
    %v924 = vpack.c.bf16 %v869, %v868
    %v925 = vpack.c.bf16 %v871, %v870
    %v926 = vpack.c.bf16 %v873, %v872
    %v927 = vpack.c.bf16 %v875, %v874
    %v928 = vpack.c.bf16 %v877, %v876
    %v929 = vpack.c.bf16 %v879, %v878
    %v930 = vpack.c.bf16 %v881, %v880
    %v931 = vpack.c.bf16 %v883, %v882
    %v932 = vpack.c.bf16 %v885, %v884
    %v933 = vpack.c.bf16 %v887, %v886
    %v934 = vpack.c.bf16 %v889, %v888
    %v935 = vpack.c.bf16 %v891, %v890
    %v936 = vpack.c.bf16 %v893, %v892
    %v937 = vpack.c.bf16 %v895, %v894
    %v938 = vpack.c.bf16 %v897, %v896
    %v939 = vpack.c.bf16 %v899, %v898
    %v940 = vpack.c.bf16 %v901, %v900
    %v941 = vpack.c.bf16 %v903, %v902
    %v942 = vpack.c.bf16 %v905, %v904
    %v943 = vpack.c.bf16 %v907, %v906
    %v944 = vpack.c.bf16 %v909, %v908
    %v945 = vpack.c.bf16 %v911, %v910
    %v946 = vpack.c.bf16 %v913, %v912
    %v947 = vpack.c.bf16 %v915, %v914
    %v948 = vld [vmem:[%s3] sm:$0xf]
    %v949 = vld [vmem:[%s3 + $0x4] sm:$0xf]
    %v950 = vld [vmem:[%s9 + $0x1] sm:$0x1]
    %v951 = vlaneseq
    %v952 = vshrl.u32 %v951, 7
    %v953 = vsub.s32 0, %v952
    %v954 = vrot.slane %v950, %v953
    %v957 = vunpack.c.l.b16 %v948
    %v958 = vunpack.c.l.b16 %v949
    %v959 = vpack.c.b16 %v958, %v957
    %vm961 = vcmask 130048
    %v963 = vsel %vm961, %v916, 0
    %v966 = vsel %vm961, %v917, 0
    %v969 = vsel %vm961, %v918, 0
    %v972 = vsel %vm961, %v919, 0
    %v975 = vsel %vm961, %v920, 0
    %v978 = vsel %vm961, %v921, 0
    %v981 = vsel %vm961, %v922, 0
    %v984 = vsel %vm961, %v923, 0
    %v987 = vsel %vm961, %v924, 0
    %v990 = vsel %vm961, %v925, 0
    %v993 = vsel %vm961, %v926, 0
    %v996 = vsel %vm961, %v927, 0
    %v999 = vsel %vm961, %v928, 0
    %v1002 = vsel %vm961, %v929, 0
    %v1005 = vsel %vm961, %v930, 0
    %v1008 = vsel %vm961, %v931, 0
    %v1011 = vsel %vm961, %v932, 0
    %v1014 = vsel %vm961, %v933, 0
    %v1017 = vsel %vm961, %v934, 0
    %v1020 = vsel %vm961, %v935, 0
    %v1023 = vsel %vm961, %v936, 0
    %v1026 = vsel %vm961, %v937, 0
    %v1029 = vsel %vm961, %v938, 0
    %v1032 = vsel %vm961, %v939, 0
    %v1035 = vsel %vm961, %v940, 0
    %v1038 = vsel %vm961, %v941, 0
    %v1041 = vsel %vm961, %v942, 0
    %v1044 = vsel %vm961, %v943, 0
    %v1047 = vsel %vm961, %v944, 0
    %v1050 = vsel %vm961, %v945, 0
    %v1053 = vsel %vm961, %v946, 0
    %v1056 = vsel %vm961, %v947, 0
    %1058 = vmatprep.subr.bf16.mxu0 0
    %1059 = vmatpush1.bf16.msra.mxu0 %v959
    %1060 = vmatprep.subr.bf16.mxu0 0
    %1061 = vmatpush1.bf16.msra.mxu0 0
    %1062 = vmatprep.subr.bf16.mxu0 0
    %1063 = vmatpush1.bf16.msra.mxu0 0
    %1064 = vmatprep.subr.bf16.mxu0 0
    %1065 = vmatpush1.bf16.msra.mxu0 0
    %1066 = vmatprep.subr.bf16.mxu0 0
    %1067 = vmatpush1.bf16.msra.mxu0 0
    %1068 = vmatprep.subr.bf16.mxu0 0
    %1069 = vmatpush1.bf16.msra.mxu0 0
    %1070 = vmatprep.subr.bf16.mxu0 0
    %1071 = vmatpush1.bf16.msra.mxu0 0
    %1072 = vmatprep.subr.bf16.mxu0 0
    %1073 = vmatpush1.bf16.msra.mxu0 0
    %1074 = vmatprep.subr.bf16.mxu0 0
    %1075 = vmatpush1.bf16.msra.mxu0 0
    %1076 = vmatprep.subr.bf16.mxu0 0
    %1077 = vmatpush1.bf16.msra.mxu0 0
    %1078 = vmatprep.subr.bf16.mxu0 0
    %1079 = vmatpush1.bf16.msra.mxu0 0
    %1080 = vmatprep.subr.bf16.mxu0 0
    %1081 = vmatpush1.bf16.msra.mxu0 0
    %1082 = vmatprep.subr.bf16.mxu0 0
    %1083 = vmatpush1.bf16.msra.mxu0 0
    %1084 = vmatprep.subr.bf16.mxu0 0
    %1085 = vmatpush1.bf16.msra.mxu0 0
    %1086 = vmatprep.subr.bf16.mxu0 0
    %1087 = vmatpush1.bf16.msra.mxu0 0
    %1088 = vmatprep.subr.bf16.mxu0 0
    %1089 = vmatpush1.bf16.msra.mxu0 0
    %1090 = vmatprep.mubr.bf16.mxu0 0
    %1091 = vmatmul.mubr.bf16.gmra.mrb[0].mxu0 %v963
    %v1092 = vpop.f32.mrb[0].mxu0
    %v1093 = vadd.f32 %v954, %v1092
    %v1094 = vpop.f32.mrb[0].mxu0
    %v1095 = vpop.f32.mrb[0].mxu0
    %v1096 = vadd.f32 %v954, %v1095
    %v1097 = vpop.f32.mrb[0].mxu0
    %1098 = vmatprep.mubr.bf16.mxu0 0
    %1099 = vmatmul.mubr.bf16.gmra.mrb[0].mxu0 %v966
    %v1100 = vpop.f32.mrb[0].mxu0
    %v1101 = vadd.f32 %v954, %v1100
    %v1102 = vpop.f32.mrb[0].mxu0
    %v1103 = vpop.f32.mrb[0].mxu0
    %v1104 = vadd.f32 %v954, %v1103
    %v1105 = vpop.f32.mrb[0].mxu0
    %1106 = vmatprep.mubr.bf16.mxu0 0
    %1107 = vmatmul.mubr.bf16.gmra.mrb[0].mxu0 %v969
    %v1108 = vpop.f32.mrb[0].mxu0
    %v1109 = vadd.f32 %v954, %v1108
    %v1110 = vpop.f32.mrb[0].mxu0
    %v1111 = vpop.f32.mrb[0].mxu0
    %v1112 = vadd.f32 %v954, %v1111
    %v1113 = vpop.f32.mrb[0].mxu0
    %1114 = vmatprep.mubr.bf16.mxu0 0
    %1115 = vmatmul.mubr.bf16.gmra.mrb[0].mxu0 %v972
    %v1116 = vpop.f32.mrb[0].mxu0
    %v1117 = vadd.f32 %v954, %v1116
    %v1118 = vpop.f32.mrb[0].mxu0
    %v1119 = vpop.f32.mrb[0].mxu0
    %v1120 = vadd.f32 %v954, %v1119
    %v1121 = vpop.f32.mrb[0].mxu0
    %1122 = vmatprep.mubr.bf16.mxu0 0
    %1123 = vmatmul.mubr.bf16.gmra.mrb[0].mxu0 %v975
    %v1124 = vpop.f32.mrb[0].mxu0
    %v1125 = vadd.f32 %v954, %v1124
    %v1126 = vpop.f32.mrb[0].mxu0
    %v1127 = vpop.f32.mrb[0].mxu0
    %v1128 = vadd.f32 %v954, %v1127
    %v1129 = vpop.f32.mrb[0].mxu0
    %1130 = vmatprep.mubr.bf16.mxu0 0
    %1131 = vmatmul.mubr.bf16.gmra.mrb[0].mxu0 %v978
    %v1132 = vpop.f32.mrb[0].mxu0
    %v1133 = vadd.f32 %v954, %v1132
    %v1134 = vpop.f32.mrb[0].mxu0
    %v1135 = vpop.f32.mrb[0].mxu0
    %v1136 = vadd.f32 %v954, %v1135
    %v1137 = vpop.f32.mrb[0].mxu0
    %1138 = vmatprep.mubr.bf16.mxu0 0
    %1139 = vmatmul.mubr.bf16.gmra.mrb[0].mxu0 %v981
    %v1140 = vpop.f32.mrb[0].mxu0
    %v1141 = vadd.f32 %v954, %v1140
    %v1142 = vpop.f32.mrb[0].mxu0
    %v1143 = vpop.f32.mrb[0].mxu0
    %v1144 = vadd.f32 %v954, %v1143
    %v1145 = vpop.f32.mrb[0].mxu0
    %1146 = vmatprep.mubr.bf16.mxu0 0
    %1147 = vmatmul.mubr.bf16.gmra.mrb[0].mxu0 %v984
    %v1148 = vpop.f32.mrb[0].mxu0
    %v1149 = vadd.f32 %v954, %v1148
    %v1150 = vpop.f32.mrb[0].mxu0
    %v1151 = vpop.f32.mrb[0].mxu0
    %v1152 = vadd.f32 %v954, %v1151
    %v1153 = vpop.f32.mrb[0].mxu0
    %1154 = vmatprep.mubr.bf16.mxu0 0
    %1155 = vmatmul.mubr.bf16.gmra.mrb[0].mxu0 %v987
    %v1156 = vpop.f32.mrb[0].mxu0
    %v1157 = vadd.f32 %v954, %v1156
    %v1158 = vpop.f32.mrb[0].mxu0
    %v1159 = vpop.f32.mrb[0].mxu0
    %v1160 = vadd.f32 %v954, %v1159
    %v1161 = vpop.f32.mrb[0].mxu0
    %1162 = vmatprep.mubr.bf16.mxu0 0
    %1163 = vmatmul.mubr.bf16.gmra.mrb[0].mxu0 %v990
    %v1164 = vpop.f32.mrb[0].mxu0
    %v1165 = vadd.f32 %v954, %v1164
    %v1166 = vpop.f32.mrb[0].mxu0
    %v1167 = vpop.f32.mrb[0].mxu0
    %v1168 = vadd.f32 %v954, %v1167
    %v1169 = vpop.f32.mrb[0].mxu0
    %1170 = vmatprep.mubr.bf16.mxu0 0
    %1171 = vmatmul.mubr.bf16.gmra.mrb[0].mxu0 %v993
    %v1172 = vpop.f32.mrb[0].mxu0
    %v1173 = vadd.f32 %v954, %v1172
    %v1174 = vpop.f32.mrb[0].mxu0
    %v1175 = vpop.f32.mrb[0].mxu0
    %v1176 = vadd.f32 %v954, %v1175
    %v1177 = vpop.f32.mrb[0].mxu0
    %1178 = vmatprep.mubr.bf16.mxu0 0
    %1179 = vmatmul.mubr.bf16.gmra.mrb[0].mxu0 %v996
    %v1180 = vpop.f32.mrb[0].mxu0
    %v1181 = vadd.f32 %v954, %v1180
    %v1182 = vpop.f32.mrb[0].mxu0
    %v1183 = vpop.f32.mrb[0].mxu0
    %v1184 = vadd.f32 %v954, %v1183
    %v1185 = vpop.f32.mrb[0].mxu0
    %1186 = vmatprep.mubr.bf16.mxu0 0
    %1187 = vmatmul.mubr.bf16.gmra.mrb[0].mxu0 %v999
    %v1188 = vpop.f32.mrb[0].mxu0
    %v1189 = vadd.f32 %v954, %v1188
    %v1190 = vpop.f32.mrb[0].mxu0
    %v1191 = vpop.f32.mrb[0].mxu0
    %v1192 = vadd.f32 %v954, %v1191
    %v1193 = vpop.f32.mrb[0].mxu0
    %1194 = vmatprep.mubr.bf16.mxu0 0
    %1195 = vmatmul.mubr.bf16.gmra.mrb[0].mxu0 %v1002
    %v1196 = vpop.f32.mrb[0].mxu0
    %v1197 = vadd.f32 %v954, %v1196
    %v1198 = vpop.f32.mrb[0].mxu0
    %v1199 = vpop.f32.mrb[0].mxu0
    %v1200 = vadd.f32 %v954, %v1199
    %v1201 = vpop.f32.mrb[0].mxu0
    %1202 = vmatprep.mubr.bf16.mxu0 0
    %1203 = vmatmul.mubr.bf16.gmra.mrb[0].mxu0 %v1005
    %v1204 = vpop.f32.mrb[0].mxu0
    %v1205 = vadd.f32 %v954, %v1204
    %v1206 = vpop.f32.mrb[0].mxu0
    %v1207 = vpop.f32.mrb[0].mxu0
    %v1208 = vadd.f32 %v954, %v1207
    %v1209 = vpop.f32.mrb[0].mxu0
    %1210 = vmatprep.mubr.bf16.mxu0 0
    %1211 = vmatmul.mubr.bf16.gmra.mrb[0].mxu0 %v1008
    %v1212 = vpop.f32.mrb[0].mxu0
    %v1213 = vadd.f32 %v954, %v1212
    %v1214 = vpop.f32.mrb[0].mxu0
    %v1215 = vpop.f32.mrb[0].mxu0
    %v1216 = vadd.f32 %v954, %v1215
    %v1217 = vpop.f32.mrb[0].mxu0
    %1218 = vmatprep.mubr.bf16.mxu0 0
    %1219 = vmatmul.mubr.bf16.gmra.mrb[0].mxu0 %v1011
    %v1220 = vpop.f32.mrb[0].mxu0
    %v1221 = vadd.f32 %v954, %v1220
    %v1222 = vpop.f32.mrb[0].mxu0
    %v1223 = vpop.f32.mrb[0].mxu0
    %v1224 = vadd.f32 %v954, %v1223
    %v1225 = vpop.f32.mrb[0].mxu0
    %1226 = vmatprep.mubr.bf16.mxu0 0
    %1227 = vmatmul.mubr.bf16.gmra.mrb[0].mxu0 %v1014
    %v1228 = vpop.f32.mrb[0].mxu0
    %v1229 = vadd.f32 %v954, %v1228
    %v1230 = vpop.f32.mrb[0].mxu0
    %v1231 = vpop.f32.mrb[0].mxu0
    %v1232 = vadd.f32 %v954, %v1231
    %v1233 = vpop.f32.mrb[0].mxu0
    %1234 = vmatprep.mubr.bf16.mxu0 0
    %1235 = vmatmul.mubr.bf16.gmra.mrb[0].mxu0 %v1017
    %v1236 = vpop.f32.mrb[0].mxu0
    %v1237 = vadd.f32 %v954, %v1236
    %v1238 = vpop.f32.mrb[0].mxu0
    %v1239 = vpop.f32.mrb[0].mxu0
    %v1240 = vadd.f32 %v954, %v1239
    %v1241 = vpop.f32.mrb[0].mxu0
    %1242 = vmatprep.mubr.bf16.mxu0 0
    %1243 = vmatmul.mubr.bf16.gmra.mrb[0].mxu0 %v1020
    %v1244 = vpop.f32.mrb[0].mxu0
    %v1245 = vadd.f32 %v954, %v1244
    %v1246 = vpop.f32.mrb[0].mxu0
    %v1247 = vpop.f32.mrb[0].mxu0
    %v1248 = vadd.f32 %v954, %v1247
    %v1249 = vpop.f32.mrb[0].mxu0
    %1250 = vmatprep.mubr.bf16.mxu0 0
    %1251 = vmatmul.mubr.bf16.gmra.mrb[0].mxu0 %v1023
    %v1252 = vpop.f32.mrb[0].mxu0
    %v1253 = vadd.f32 %v954, %v1252
    %v1254 = vpop.f32.mrb[0].mxu0
    %v1255 = vpop.f32.mrb[0].mxu0
    %v1256 = vadd.f32 %v954, %v1255
    %v1257 = vpop.f32.mrb[0].mxu0
    %1258 = vmatprep.mubr.bf16.mxu0 0
    %1259 = vmatmul.mubr.bf16.gmra.mrb[0].mxu0 %v1026
    %v1260 = vpop.f32.mrb[0].mxu0
    %v1261 = vadd.f32 %v954, %v1260
    %v1262 = vpop.f32.mrb[0].mxu0
    %v1263 = vpop.f32.mrb[0].mxu0
    %v1264 = vadd.f32 %v954, %v1263
    %v1265 = vpop.f32.mrb[0].mxu0
    %1266 = vmatprep.mubr.bf16.mxu0 0
    %1267 = vmatmul.mubr.bf16.gmra.mrb[0].mxu0 %v1029
    %v1268 = vpop.f32.mrb[0].mxu0
    %v1269 = vadd.f32 %v954, %v1268
    %v1270 = vpop.f32.mrb[0].mxu0
    %v1271 = vpop.f32.mrb[0].mxu0
    %v1272 = vadd.f32 %v954, %v1271
    %v1273 = vpop.f32.mrb[0].mxu0
    %1274 = vmatprep.mubr.bf16.mxu0 0
    %1275 = vmatmul.mubr.bf16.gmra.mrb[0].mxu0 %v1032
    %v1276 = vpop.f32.mrb[0].mxu0
    %v1277 = vadd.f32 %v954, %v1276
    %v1278 = vpop.f32.mrb[0].mxu0
    %v1279 = vpop.f32.mrb[0].mxu0
    %v1280 = vadd.f32 %v954, %v1279
    %v1281 = vpop.f32.mrb[0].mxu0
    %1282 = vmatprep.mubr.bf16.mxu0 0
    %1283 = vmatmul.mubr.bf16.gmra.mrb[0].mxu0 %v1035
    %v1284 = vpop.f32.mrb[0].mxu0
    %v1285 = vadd.f32 %v954, %v1284
    %v1286 = vpop.f32.mrb[0].mxu0
    %v1287 = vpop.f32.mrb[0].mxu0
    %v1288 = vadd.f32 %v954, %v1287
    %v1289 = vpop.f32.mrb[0].mxu0
    %1290 = vmatprep.mubr.bf16.mxu0 0
    %1291 = vmatmul.mubr.bf16.gmra.mrb[0].mxu0 %v1038
    %v1292 = vpop.f32.mrb[0].mxu0
    %v1293 = vadd.f32 %v954, %v1292
    %v1294 = vpop.f32.mrb[0].mxu0
    %v1295 = vpop.f32.mrb[0].mxu0
    %v1296 = vadd.f32 %v954, %v1295
    %v1297 = vpop.f32.mrb[0].mxu0
    %1298 = vmatprep.mubr.bf16.mxu0 0
    %1299 = vmatmul.mubr.bf16.gmra.mrb[0].mxu0 %v1041
    %v1300 = vpop.f32.mrb[0].mxu0
    %v1301 = vadd.f32 %v954, %v1300
    %v1302 = vpop.f32.mrb[0].mxu0
    %v1303 = vpop.f32.mrb[0].mxu0
    %v1304 = vadd.f32 %v954, %v1303
    %v1305 = vpop.f32.mrb[0].mxu0
    %1306 = vmatprep.mubr.bf16.mxu0 0
    %1307 = vmatmul.mubr.bf16.gmra.mrb[0].mxu0 %v1044
    %v1308 = vpop.f32.mrb[0].mxu0
    %v1309 = vadd.f32 %v954, %v1308
    %v1310 = vpop.f32.mrb[0].mxu0
    %v1311 = vpop.f32.mrb[0].mxu0
    %v1312 = vadd.f32 %v954, %v1311
    %v1313 = vpop.f32.mrb[0].mxu0
    %1314 = vmatprep.mubr.bf16.mxu0 0
    %1315 = vmatmul.mubr.bf16.gmra.mrb[0].mxu0 %v1047
    %v1316 = vpop.f32.mrb[0].mxu0
    %v1317 = vadd.f32 %v954, %v1316
    %v1318 = vpop.f32.mrb[0].mxu0
    %v1319 = vpop.f32.mrb[0].mxu0
    %v1320 = vadd.f32 %v954, %v1319
    %v1321 = vpop.f32.mrb[0].mxu0
    %1322 = vmatprep.mubr.bf16.mxu0 0
    %1323 = vmatmul.mubr.bf16.gmra.mrb[0].mxu0 %v1050
    %v1324 = vpop.f32.mrb[0].mxu0
    %v1325 = vadd.f32 %v954, %v1324
    %v1326 = vpop.f32.mrb[0].mxu0
    %v1327 = vpop.f32.mrb[0].mxu0
    %v1328 = vadd.f32 %v954, %v1327
    %v1329 = vpop.f32.mrb[0].mxu0
    %1330 = vmatprep.mubr.bf16.mxu0 0
    %1331 = vmatmul.mubr.bf16.gmra.mrb[0].mxu0 %v1053
    %v1332 = vpop.f32.mrb[0].mxu0
    %v1333 = vadd.f32 %v954, %v1332
    %v1334 = vpop.f32.mrb[0].mxu0
    %v1335 = vpop.f32.mrb[0].mxu0
    %v1336 = vadd.f32 %v954, %v1335
    %v1337 = vpop.f32.mrb[0].mxu0
    %1338 = vmatprep.mubr.bf16.mxu0 0
    %1339 = vmatmul.mubr.bf16.gmra.mrb[0].mxu0 %v1056
    %v1340 = vpop.f32.mrb[0].mxu0
    %v1341 = vadd.f32 %v954, %v1340
    %v1342 = vpop.f32.mrb[0].mxu0
    %v1343 = vpop.f32.mrb[0].mxu0
    %v1344 = vadd.f32 %v954, %v1343
    %v1345 = vpop.f32.mrb[0].mxu0
    %1346 = vdwg.mxu0
    %v1347 = vpack.c.bf16 %v1096, %v1093
    %v1348 = vpack.c.bf16 %v1104, %v1101
    %v1349 = vpack.c.bf16 %v1112, %v1109
    %v1350 = vpack.c.bf16 %v1120, %v1117
    %v1351 = vpack.c.bf16 %v1128, %v1125
    %v1352 = vpack.c.bf16 %v1136, %v1133
    %v1353 = vpack.c.bf16 %v1144, %v1141
    %v1354 = vpack.c.bf16 %v1152, %v1149
    %v1355 = vpack.c.bf16 %v1160, %v1157
    %v1356 = vpack.c.bf16 %v1168, %v1165
    %v1357 = vpack.c.bf16 %v1176, %v1173
    %v1358 = vpack.c.bf16 %v1184, %v1181
    %v1359 = vpack.c.bf16 %v1192, %v1189
    %v1360 = vpack.c.bf16 %v1200, %v1197
    %v1361 = vpack.c.bf16 %v1208, %v1205
    %v1362 = vpack.c.bf16 %v1216, %v1213
    %v1363 = vpack.c.bf16 %v1224, %v1221
    %v1364 = vpack.c.bf16 %v1232, %v1229
    %v1365 = vpack.c.bf16 %v1240, %v1237
    %v1366 = vpack.c.bf16 %v1248, %v1245
    %v1367 = vpack.c.bf16 %v1256, %v1253
    %v1368 = vpack.c.bf16 %v1264, %v1261
    %v1369 = vpack.c.bf16 %v1272, %v1269
    %v1370 = vpack.c.bf16 %v1280, %v1277
    %v1371 = vpack.c.bf16 %v1288, %v1285
    %v1372 = vpack.c.bf16 %v1296, %v1293
    %v1373 = vpack.c.bf16 %v1304, %v1301
    %v1374 = vpack.c.bf16 %v1312, %v1309
    %v1375 = vpack.c.bf16 %v1320, %v1317
    %v1376 = vpack.c.bf16 %v1328, %v1325
    %v1377 = vpack.c.bf16 %v1336, %v1333
    %v1378 = vpack.c.bf16 %v1344, %v1341
    %s1379 = sld [smem:[#allocation2 + $0x1]]
    %v1380 = vstv %s1379
    %v1381 = vmul.f32 %v1380, %v723
    %v1382 = vmul.f32 %v1380, %v724
    %v1383 = vmul.f32 %v1380, %v725
    %v1384 = vmul.f32 %v1380, %v726
    %v1385 = vmul.f32 %v1380, %v727
    %v1386 = vmul.f32 %v1380, %v728
    %v1387 = vmul.f32 %v1380, %v729
    %v1388 = vmul.f32 %v1380, %v730
    %v1389 = vmul.f32 %v1380, %v731
    %v1390 = vmul.f32 %v1380, %v732
    %v1391 = vmul.f32 %v1380, %v733
    %v1392 = vmul.f32 %v1380, %v734
    %v1393 = vmul.f32 %v1380, %v735
    %v1394 = vmul.f32 %v1380, %v736
    %v1395 = vmul.f32 %v1380, %v737
    %v1396 = vmul.f32 %v1380, %v738
    %v1397 = vmul.f32 %v1380, %v739
    %v1398 = vmul.f32 %v1380, %v740
    %v1399 = vmul.f32 %v1380, %v741
    %v1400 = vmul.f32 %v1380, %v742
    %v1401 = vmul.f32 %v1380, %v743
    %v1402 = vmul.f32 %v1380, %v744
    %v1403 = vmul.f32 %v1380, %v745
    %v1404 = vmul.f32 %v1380, %v746
    %v1405 = vmul.f32 %v1380, %v747
    %v1406 = vmul.f32 %v1380, %v748
    %v1407 = vmul.f32 %v1380, %v749
    %v1408 = vmul.f32 %v1380, %v750
    %v1409 = vmul.f32 %v1380, %v751
    %v1410 = vmul.f32 %v1380, %v752
    %v1411 = vmul.f32 %v1380, %v753
    %v1412 = vmul.f32 %v1380, %v754
    %v1413 = vmul.f32 %v1380, %v755
    %v1414 = vmul.f32 %v1380, %v756
    %v1415 = vmul.f32 %v1380, %v757
    %v1416 = vmul.f32 %v1380, %v758
    %v1417 = vmul.f32 %v1380, %v759
    %v1418 = vmul.f32 %v1380, %v760
    %v1419 = vmul.f32 %v1380, %v761
    %v1420 = vmul.f32 %v1380, %v762
    %v1421 = vmul.f32 %v1380, %v763
    %v1422 = vmul.f32 %v1380, %v764
    %v1423 = vmul.f32 %v1380, %v765
    %v1424 = vmul.f32 %v1380, %v766
    %v1425 = vmul.f32 %v1380, %v767
    %v1426 = vmul.f32 %v1380, %v768
    %v1427 = vmul.f32 %v1380, %v769
    %v1428 = vmul.f32 %v1380, %v770
    %v1429 = vmul.f32 %v1380, %v771
    %v1430 = vmul.f32 %v1380, %v772
    %v1431 = vmul.f32 %v1380, %v773
    %v1432 = vmul.f32 %v1380, %v774
    %v1433 = vmul.f32 %v1380, %v775
    %v1434 = vmul.f32 %v1380, %v776
    %v1435 = vmul.f32 %v1380, %v777
    %v1436 = vmul.f32 %v1380, %v778
    %v1437 = vmul.f32 %v1380, %v779
    %v1438 = vmul.f32 %v1380, %v780
    %v1439 = vmul.f32 %v1380, %v781
    %v1440 = vmul.f32 %v1380, %v782
    %v1441 = vmul.f32 %v1380, %v783
    %v1442 = vmul.f32 %v1380, %v784
    %v1443 = vmul.f32 %v1380, %v785
    %v1444 = vmul.f32 %v1380, %v786
    %s1445 = sld [smem:[#allocation2 + $0x2]]
    %v1446 = vunpack.c.l.bf16 %v1347
    %v1447 = vunpack.c.h.bf16 %v1347
    %v1448 = vunpack.c.l.bf16 %v1348
    %v1449 = vunpack.c.h.bf16 %v1348
    %v1450 = vunpack.c.l.bf16 %v1349
    %v1451 = vunpack.c.h.bf16 %v1349
    %v1452 = vunpack.c.l.bf16 %v1350
    %v1453 = vunpack.c.h.bf16 %v1350
    %v1454 = vunpack.c.l.bf16 %v1351
    %v1455 = vunpack.c.h.bf16 %v1351
    %v1456 = vunpack.c.l.bf16 %v1352
    %v1457 = vunpack.c.h.bf16 %v1352
    %v1458 = vunpack.c.l.bf16 %v1353
    %v1459 = vunpack.c.h.bf16 %v1353
    %v1460 = vunpack.c.l.bf16 %v1354
    %v1461 = vunpack.c.h.bf16 %v1354
    %v1462 = vunpack.c.l.bf16 %v1355
    %v1463 = vunpack.c.h.bf16 %v1355
    %v1464 = vunpack.c.l.bf16 %v1356
    %v1465 = vunpack.c.h.bf16 %v1356
    %v1466 = vunpack.c.l.bf16 %v1357
    %v1467 = vunpack.c.h.bf16 %v1357
    %v1468 = vunpack.c.l.bf16 %v1358
    %v1469 = vunpack.c.h.bf16 %v1358
    %v1470 = vunpack.c.l.bf16 %v1359
    %v1471 = vunpack.c.h.bf16 %v1359
    %v1472 = vunpack.c.l.bf16 %v1360
    %v1473 = vunpack.c.h.bf16 %v1360
    %v1474 = vunpack.c.l.bf16 %v1361
    %v1475 = vunpack.c.h.bf16 %v1361
    %v1476 = vunpack.c.l.bf16 %v1362
    %v1477 = vunpack.c.h.bf16 %v1362
    %v1478 = vunpack.c.l.bf16 %v1363
    %v1479 = vunpack.c.h.bf16 %v1363
    %v1480 = vunpack.c.l.bf16 %v1364
    %v1481 = vunpack.c.h.bf16 %v1364
    %v1482 = vunpack.c.l.bf16 %v1365
    %v1483 = vunpack.c.h.bf16 %v1365
    %v1484 = vunpack.c.l.bf16 %v1366
    %v1485 = vunpack.c.h.bf16 %v1366
    %v1486 = vunpack.c.l.bf16 %v1367
    %v1487 = vunpack.c.h.bf16 %v1367
    %v1488 = vunpack.c.l.bf16 %v1368
    %v1489 = vunpack.c.h.bf16 %v1368
    %v1490 = vunpack.c.l.bf16 %v1369
    %v1491 = vunpack.c.h.bf16 %v1369
    %v1492 = vunpack.c.l.bf16 %v1370
    %v1493 = vunpack.c.h.bf16 %v1370
    %v1494 = vunpack.c.l.bf16 %v1371
    %v1495 = vunpack.c.h.bf16 %v1371
    %v1496 = vunpack.c.l.bf16 %v1372
    %v1497 = vunpack.c.h.bf16 %v1372
    %v1498 = vunpack.c.l.bf16 %v1373
    %v1499 = vunpack.c.h.bf16 %v1373
    %v1500 = vunpack.c.l.bf16 %v1374
    %v1501 = vunpack.c.h.bf16 %v1374
    %v1502 = vunpack.c.l.bf16 %v1375
    %v1503 = vunpack.c.h.bf16 %v1375
    %v1504 = vunpack.c.l.bf16 %v1376
    %v1505 = vunpack.c.h.bf16 %v1376
    %v1506 = vunpack.c.l.bf16 %v1377
    %v1507 = vunpack.c.h.bf16 %v1377
    %v1508 = vunpack.c.l.bf16 %v1378
    %v1509 = vunpack.c.h.bf16 %v1378
    %v1510 = vstv %s1445
    %v1511 = vmul.f32 %v1510, %v1446
    %v1512 = vmul.f32 %v1510, %v1447
    %v1513 = vmul.f32 %v1510, %v1448
    %v1514 = vmul.f32 %v1510, %v1449
    %v1515 = vmul.f32 %v1510, %v1450
    %v1516 = vmul.f32 %v1510, %v1451
    %v1517 = vmul.f32 %v1510, %v1452
    %v1518 = vmul.f32 %v1510, %v1453
    %v1519 = vmul.f32 %v1510, %v1454
    %v1520 = vmul.f32 %v1510, %v1455
    %v1521 = vmul.f32 %v1510, %v1456
    %v1522 = vmul.f32 %v1510, %v1457
    %v1523 = vmul.f32 %v1510, %v1458
    %v1524 = vmul.f32 %v1510, %v1459
    %v1525 = vmul.f32 %v1510, %v1460
    %v1526 = vmul.f32 %v1510, %v1461
    %v1527 = vmul.f32 %v1510, %v1462
    %v1528 = vmul.f32 %v1510, %v1463
    %v1529 = vmul.f32 %v1510, %v1464
    %v1530 = vmul.f32 %v1510, %v1465
    %v1531 = vmul.f32 %v1510, %v1466
    %v1532 = vmul.f32 %v1510, %v1467
    %v1533 = vmul.f32 %v1510, %v1468
    %v1534 = vmul.f32 %v1510, %v1469
    %v1535 = vmul.f32 %v1510, %v1470
    %v1536 = vmul.f32 %v1510, %v1471
    %v1537 = vmul.f32 %v1510, %v1472
    %v1538 = vmul.f32 %v1510, %v1473
    %v1539 = vmul.f32 %v1510, %v1474
    %v1540 = vmul.f32 %v1510, %v1475
    %v1541 = vmul.f32 %v1510, %v1476
    %v1542 = vmul.f32 %v1510, %v1477
    %v1543 = vmul.f32 %v1510, %v1478
    %v1544 = vmul.f32 %v1510, %v1479
    %v1545 = vmul.f32 %v1510, %v1480
    %v1546 = vmul.f32 %v1510, %v1481
    %v1547 = vmul.f32 %v1510, %v1482
    %v1548 = vmul.f32 %v1510, %v1483
    %v1549 = vmul.f32 %v1510, %v1484
    %v1550 = vmul.f32 %v1510, %v1485
    %v1551 = vmul.f32 %v1510, %v1486
    %v1552 = vmul.f32 %v1510, %v1487
    %v1553 = vmul.f32 %v1510, %v1488
    %v1554 = vmul.f32 %v1510, %v1489
    %v1555 = vmul.f32 %v1510, %v1490
    %v1556 = vmul.f32 %v1510, %v1491
    %v1557 = vmul.f32 %v1510, %v1492
    %v1558 = vmul.f32 %v1510, %v1493
    %v1559 = vmul.f32 %v1510, %v1494
    %v1560 = vmul.f32 %v1510, %v1495
    %v1561 = vmul.f32 %v1510, %v1496
    %v1562 = vmul.f32 %v1510, %v1497
    %v1563 = vmul.f32 %v1510, %v1498
    %v1564 = vmul.f32 %v1510, %v1499
    %v1565 = vmul.f32 %v1510, %v1500
    %v1566 = vmul.f32 %v1510, %v1501
    %v1567 = vmul.f32 %v1510, %v1502
    %v1568 = vmul.f32 %v1510, %v1503
    %v1569 = vmul.f32 %v1510, %v1504
    %v1570 = vmul.f32 %v1510, %v1505
    %v1571 = vmul.f32 %v1510, %v1506
    %v1572 = vmul.f32 %v1510, %v1507
    %v1573 = vmul.f32 %v1510, %v1508
    %v1574 = vmul.f32 %v1510, %v1509
    %v1575 = vadd.f32 %v1381, %v1511
    %v1576 = vadd.f32 %v1382, %v1512
    %v1577 = vadd.f32 %v1383, %v1513
    %v1578 = vadd.f32 %v1384, %v1514
    %v1579 = vadd.f32 %v1385, %v1515
    %v1580 = vadd.f32 %v1386, %v1516
    %v1581 = vadd.f32 %v1387, %v1517
    %v1582 = vadd.f32 %v1388, %v1518
    %v1583 = vadd.f32 %v1389, %v1519
    %v1584 = vadd.f32 %v1390, %v1520
    %v1585 = vadd.f32 %v1391, %v1521
    %v1586 = vadd.f32 %v1392, %v1522
    %v1587 = vadd.f32 %v1393, %v1523
    %v1588 = vadd.f32 %v1394, %v1524
    %v1589 = vadd.f32 %v1395, %v1525
    %v1590 = vadd.f32 %v1396, %v1526
    %v1591 = vadd.f32 %v1397, %v1527
    %v1592 = vadd.f32 %v1398, %v1528
    %v1593 = vadd.f32 %v1399, %v1529
    %v1594 = vadd.f32 %v1400, %v1530
    %v1595 = vadd.f32 %v1401, %v1531
    %v1596 = vadd.f32 %v1402, %v1532
    %v1597 = vadd.f32 %v1403, %v1533
    %v1598 = vadd.f32 %v1404, %v1534
    %v1599 = vadd.f32 %v1405, %v1535
    %v1600 = vadd.f32 %v1406, %v1536
    %v1601 = vadd.f32 %v1407, %v1537
    %v1602 = vadd.f32 %v1408, %v1538
    %v1603 = vadd.f32 %v1409, %v1539
    %v1604 = vadd.f32 %v1410, %v1540
    %v1605 = vadd.f32 %v1411, %v1541
    %v1606 = vadd.f32 %v1412, %v1542
    %v1607 = vadd.f32 %v1413, %v1543
    %v1608 = vadd.f32 %v1414, %v1544
    %v1609 = vadd.f32 %v1415, %v1545
    %v1610 = vadd.f32 %v1416, %v1546
    %v1611 = vadd.f32 %v1417, %v1547
    %v1612 = vadd.f32 %v1418, %v1548
    %v1613 = vadd.f32 %v1419, %v1549
    %v1614 = vadd.f32 %v1420, %v1550
    %v1615 = vadd.f32 %v1421, %v1551
    %v1616 = vadd.f32 %v1422, %v1552
    %v1617 = vadd.f32 %v1423, %v1553
    %v1618 = vadd.f32 %v1424, %v1554
    %v1619 = vadd.f32 %v1425, %v1555
    %v1620 = vadd.f32 %v1426, %v1556
    %v1621 = vadd.f32 %v1427, %v1557
    %v1622 = vadd.f32 %v1428, %v1558
    %v1623 = vadd.f32 %v1429, %v1559
    %v1624 = vadd.f32 %v1430, %v1560
    %v1625 = vadd.f32 %v1431, %v1561
    %v1626 = vadd.f32 %v1432, %v1562
    %v1627 = vadd.f32 %v1433, %v1563
    %v1628 = vadd.f32 %v1434, %v1564
    %v1629 = vadd.f32 %v1435, %v1565
    %v1630 = vadd.f32 %v1436, %v1566
    %v1631 = vadd.f32 %v1437, %v1567
    %v1632 = vadd.f32 %v1438, %v1568
    %v1633 = vadd.f32 %v1439, %v1569
    %v1634 = vadd.f32 %v1440, %v1570
    %v1635 = vadd.f32 %v1441, %v1571
    %v1636 = vadd.f32 %v1442, %v1572
    %v1637 = vadd.f32 %v1443, %v1573
    %v1638 = vadd.f32 %v1444, %v1574
    %v1639 = vmax.f32 %v1575, 0.0
    %v1640 = vmax.f32 %v1576, 0.0
    %v1641 = vmax.f32 %v1577, 0.0
    %v1642 = vmax.f32 %v1578, 0.0
    %v1643 = vmax.f32 %v1579, 0.0
    %v1644 = vmax.f32 %v1580, 0.0
    %v1645 = vmax.f32 %v1581, 0.0
    %v1646 = vmax.f32 %v1582, 0.0
    %v1647 = vmax.f32 %v1583, 0.0
    %v1648 = vmax.f32 %v1584, 0.0
    %v1649 = vmax.f32 %v1585, 0.0
    %v1650 = vmax.f32 %v1586, 0.0
    %v1651 = vmax.f32 %v1587, 0.0
    %v1652 = vmax.f32 %v1588, 0.0
    %v1653 = vmax.f32 %v1589, 0.0
    %v1654 = vmax.f32 %v1590, 0.0
    %v1655 = vmax.f32 %v1591, 0.0
    %v1656 = vmax.f32 %v1592, 0.0
    %v1657 = vmax.f32 %v1593, 0.0
    %v1658 = vmax.f32 %v1594, 0.0
    %v1659 = vmax.f32 %v1595, 0.0
    %v1660 = vmax.f32 %v1596, 0.0
    %v1661 = vmax.f32 %v1597, 0.0
    %v1662 = vmax.f32 %v1598, 0.0
    %v1663 = vmax.f32 %v1599, 0.0
    %v1664 = vmax.f32 %v1600, 0.0
    %v1665 = vmax.f32 %v1601, 0.0
    %v1666 = vmax.f32 %v1602, 0.0
    %v1667 = vmax.f32 %v1603, 0.0
    %v1668 = vmax.f32 %v1604, 0.0
    %v1669 = vmax.f32 %v1605, 0.0
    %v1670 = vmax.f32 %v1606, 0.0
    %v1671 = vmax.f32 %v1607, 0.0
    %v1672 = vmax.f32 %v1608, 0.0
    %v1673 = vmax.f32 %v1609, 0.0
    %v1674 = vmax.f32 %v1610, 0.0
    %v1675 = vmax.f32 %v1611, 0.0
    %v1676 = vmax.f32 %v1612, 0.0
    %v1677 = vmax.f32 %v1613, 0.0
    %v1678 = vmax.f32 %v1614, 0.0
    %v1679 = vmax.f32 %v1615, 0.0
    %v1680 = vmax.f32 %v1616, 0.0
    %v1681 = vmax.f32 %v1617, 0.0
    %v1682 = vmax.f32 %v1618, 0.0
    %v1683 = vmax.f32 %v1619, 0.0
    %v1684 = vmax.f32 %v1620, 0.0
    %v1685 = vmax.f32 %v1621, 0.0
    %v1686 = vmax.f32 %v1622, 0.0
    %v1687 = vmax.f32 %v1623, 0.0
    %v1688 = vmax.f32 %v1624, 0.0
    %v1689 = vmax.f32 %v1625, 0.0
    %v1690 = vmax.f32 %v1626, 0.0
    %v1691 = vmax.f32 %v1627, 0.0
    %v1692 = vmax.f32 %v1628, 0.0
    %v1693 = vmax.f32 %v1629, 0.0
    %v1694 = vmax.f32 %v1630, 0.0
    %v1695 = vmax.f32 %v1631, 0.0
    %v1696 = vmax.f32 %v1632, 0.0
    %v1697 = vmax.f32 %v1633, 0.0
    %v1698 = vmax.f32 %v1634, 0.0
    %v1699 = vmax.f32 %v1635, 0.0
    %v1700 = vmax.f32 %v1636, 0.0
    %v1701 = vmax.f32 %v1637, 0.0
    %v1702 = vmax.f32 %v1638, 0.0
    %v1703 = vpack.c.bf16 %v1640, %v1639
    %v1704 = vpack.c.bf16 %v1642, %v1641
    %v1705 = vpack.c.bf16 %v1644, %v1643
    %v1706 = vpack.c.bf16 %v1646, %v1645
    %v1707 = vpack.c.bf16 %v1648, %v1647
    %v1708 = vpack.c.bf16 %v1650, %v1649
    %v1709 = vpack.c.bf16 %v1652, %v1651
    %v1710 = vpack.c.bf16 %v1654, %v1653
    %v1711 = vpack.c.bf16 %v1656, %v1655
    %v1712 = vpack.c.bf16 %v1658, %v1657
    %v1713 = vpack.c.bf16 %v1660, %v1659
    %v1714 = vpack.c.bf16 %v1662, %v1661
    %v1715 = vpack.c.bf16 %v1664, %v1663
    %v1716 = vpack.c.bf16 %v1666, %v1665
    %v1717 = vpack.c.bf16 %v1668, %v1667
    %v1718 = vpack.c.bf16 %v1670, %v1669
    %v1719 = vpack.c.bf16 %v1672, %v1671
    %v1720 = vpack.c.bf16 %v1674, %v1673
    %v1721 = vpack.c.bf16 %v1676, %v1675
    %v1722 = vpack.c.bf16 %v1678, %v1677
    %v1723 = vpack.c.bf16 %v1680, %v1679
    %v1724 = vpack.c.bf16 %v1682, %v1681
    %v1725 = vpack.c.bf16 %v1684, %v1683
    %v1726 = vpack.c.bf16 %v1686, %v1685
    %v1727 = vpack.c.bf16 %v1688, %v1687
    %v1728 = vpack.c.bf16 %v1690, %v1689
    %v1729 = vpack.c.bf16 %v1692, %v1691
    %v1730 = vpack.c.bf16 %v1694, %v1693
    %v1731 = vpack.c.bf16 %v1696, %v1695
    %v1732 = vpack.c.bf16 %v1698, %v1697
    %v1733 = vpack.c.bf16 %v1700, %v1699
    %v1734 = vpack.c.bf16 %v1702, %v1701
    %s1735 = scalar_lea.vmem %s3, 8
    %v1736 = vld [vmem:[%s1735] sm:$0xf]
    %v1737 = vld [vmem:[%s1735 + $0x4] sm:$0xf]
    %v1738 = vld [vmem:[%s9 + $0x2] sm:$0x1]
    %v1739 = vlaneseq
    %v1740 = vshrl.u32 %v1739, 7
    %v1741 = vsub.s32 0, %v1740
    %v1742 = vrot.slane %v1738, %v1741
    %v1745 = vunpack.c.l.b16 %v1736
    %v1746 = vunpack.c.l.b16 %v1737
    %v1747 = vpack.c.b16 %v1746, %v1745
    %v1750 = vsel %vm961, %v1703, 0
    %v1753 = vsel %vm961, %v1704, 0
    %v1756 = vsel %vm961, %v1705, 0
    %v1759 = vsel %vm961, %v1706, 0
    %v1762 = vsel %vm961, %v1707, 0
    %v1765 = vsel %vm961, %v1708, 0
    %v1768 = vsel %vm961, %v1709, 0
    %v1771 = vsel %vm961, %v1710, 0
    %v1774 = vsel %vm961, %v1711, 0
    %v1777 = vsel %vm961, %v1712, 0
    %v1780 = vsel %vm961, %v1713, 0
    %v1783 = vsel %vm961, %v1714, 0
    %v1786 = vsel %vm961, %v1715, 0
    %v1789 = vsel %vm961, %v1716, 0
    %v1792 = vsel %vm961, %v1717, 0
    %v1795 = vsel %vm961, %v1718, 0
    %v1798 = vsel %vm961, %v1719, 0
    %v1801 = vsel %vm961, %v1720, 0
    %v1804 = vsel %vm961, %v1721, 0
    %v1807 = vsel %vm961, %v1722, 0
    %v1810 = vsel %vm961, %v1723, 0
    %v1813 = vsel %vm961, %v1724, 0
    %v1816 = vsel %vm961, %v1725, 0
    %v1819 = vsel %vm961, %v1726, 0
    %v1822 = vsel %vm961, %v1727, 0
    %v1825 = vsel %vm961, %v1728, 0
    %v1828 = vsel %vm961, %v1729, 0
    %v1831 = vsel %vm961, %v1730, 0
    %v1834 = vsel %vm961, %v1731, 0
    %v1837 = vsel %vm961, %v1732, 0
    %v1840 = vsel %vm961, %v1733, 0
    %v1843 = vsel %vm961, %v1734, 0
    %1845 = vmatprep.subr.bf16.mxu0 0
    %1846 = vmatpush1.bf16.msra.mxu0 %v1747
    %1847 = vmatprep.subr.bf16.mxu0 0
    %1848 = vmatpush1.bf16.msra.mxu0 0
    %1849 = vmatprep.subr.bf16.mxu0 0
    %1850 = vmatpush1.bf16.msra.mxu0 0
    %1851 = vmatprep.subr.bf16.mxu0 0
    %1852 = vmatpush1.bf16.msra.mxu0 0
    %1853 = vmatprep.subr.bf16.mxu0 0
    %1854 = vmatpush1.bf16.msra.mxu0 0
    %1855 = vmatprep.subr.bf16.mxu0 0
    %1856 = vmatpush1.bf16.msra.mxu0 0
    %1857 = vmatprep.subr.bf16.mxu0 0
    %1858 = vmatpush1.bf16.msra.mxu0 0
    %1859 = vmatprep.subr.bf16.mxu0 0
    %1860 = vmatpush1.bf16.msra.mxu0 0
    %1861 = vmatprep.subr.bf16.mxu0 0
    %1862 = vmatpush1.bf16.msra.mxu0 0
    %1863 = vmatprep.subr.bf16.mxu0 0
    %1864 = vmatpush1.bf16.msra.mxu0 0
    %1865 = vmatprep.subr.bf16.mxu0 0
    %1866 = vmatpush1.bf16.msra.mxu0 0
    %1867 = vmatprep.subr.bf16.mxu0 0
    %1868 = vmatpush1.bf16.msra.mxu0 0
    %1869 = vmatprep.subr.bf16.mxu0 0
    %1870 = vmatpush1.bf16.msra.mxu0 0
    %1871 = vmatprep.subr.bf16.mxu0 0
    %1872 = vmatpush1.bf16.msra.mxu0 0
    %1873 = vmatprep.subr.bf16.mxu0 0
    %1874 = vmatpush1.bf16.msra.mxu0 0
    %1875 = vmatprep.subr.bf16.mxu0 0
    %1876 = vmatpush1.bf16.msra.mxu0 0
    %1877 = vmatprep.mubr.bf16.mxu0 0
    %1878 = vmatmul.mubr.bf16.gmra.mrb[0].mxu0 %v1750
    %v1879 = vpop.f32.mrb[0].mxu0
    %v1880 = vadd.f32 %v1742, %v1879
    %v1881 = vpop.f32.mrb[0].mxu0
    %v1882 = vpop.f32.mrb[0].mxu0
    %v1883 = vadd.f32 %v1742, %v1882
    %v1884 = vpop.f32.mrb[0].mxu0
    %1885 = vmatprep.mubr.bf16.mxu0 0
    %1886 = vmatmul.mubr.bf16.gmra.mrb[0].mxu0 %v1753
    %v1887 = vpop.f32.mrb[0].mxu0
    %v1888 = vadd.f32 %v1742, %v1887
    %v1889 = vpop.f32.mrb[0].mxu0
    %v1890 = vpop.f32.mrb[0].mxu0
    %v1891 = vadd.f32 %v1742, %v1890
    %v1892 = vpop.f32.mrb[0].mxu0
    %1893 = vmatprep.mubr.bf16.mxu0 0
    %1894 = vmatmul.mubr.bf16.gmra.mrb[0].mxu0 %v1756
    %v1895 = vpop.f32.mrb[0].mxu0
    %v1896 = vadd.f32 %v1742, %v1895
    %v1897 = vpop.f32.mrb[0].mxu0
    %v1898 = vpop.f32.mrb[0].mxu0
    %v1899 = vadd.f32 %v1742, %v1898
    %v1900 = vpop.f32.mrb[0].mxu0
    %1901 = vmatprep.mubr.bf16.mxu0 0
    %1902 = vmatmul.mubr.bf16.gmra.mrb[0].mxu0 %v1759
    %v1903 = vpop.f32.mrb[0].mxu0
    %v1904 = vadd.f32 %v1742, %v1903
    %v1905 = vpop.f32.mrb[0].mxu0
    %v1906 = vpop.f32.mrb[0].mxu0
    %v1907 = vadd.f32 %v1742, %v1906
    %v1908 = vpop.f32.mrb[0].mxu0
    %1909 = vmatprep.mubr.bf16.mxu0 0
    %1910 = vmatmul.mubr.bf16.gmra.mrb[0].mxu0 %v1762
    %v1911 = vpop.f32.mrb[0].mxu0
    %v1912 = vadd.f32 %v1742, %v1911
    %v1913 = vpop.f32.mrb[0].mxu0
    %v1914 = vpop.f32.mrb[0].mxu0
    %v1915 = vadd.f32 %v1742, %v1914
    %v1916 = vpop.f32.mrb[0].mxu0
    %1917 = vmatprep.mubr.bf16.mxu0 0
    %1918 = vmatmul.mubr.bf16.gmra.mrb[0].mxu0 %v1765
    %v1919 = vpop.f32.mrb[0].mxu0
    %v1920 = vadd.f32 %v1742, %v1919
    %v1921 = vpop.f32.mrb[0].mxu0
    %v1922 = vpop.f32.mrb[0].mxu0
    %v1923 = vadd.f32 %v1742, %v1922
    %v1924 = vpop.f32.mrb[0].mxu0
    %1925 = vmatprep.mubr.bf16.mxu0 0
    %1926 = vmatmul.mubr.bf16.gmra.mrb[0].mxu0 %v1768
    %v1927 = vpop.f32.mrb[0].mxu0
    %v1928 = vadd.f32 %v1742, %v1927
    %v1929 = vpop.f32.mrb[0].mxu0
    %v1930 = vpop.f32.mrb[0].mxu0
    %v1931 = vadd.f32 %v1742, %v1930
    %v1932 = vpop.f32.mrb[0].mxu0
    %1933 = vmatprep.mubr.bf16.mxu0 0
    %1934 = vmatmul.mubr.bf16.gmra.mrb[0].mxu0 %v1771
    %v1935 = vpop.f32.mrb[0].mxu0
    %v1936 = vadd.f32 %v1742, %v1935
    %v1937 = vpop.f32.mrb[0].mxu0
    %v1938 = vpop.f32.mrb[0].mxu0
    %v1939 = vadd.f32 %v1742, %v1938
    %v1940 = vpop.f32.mrb[0].mxu0
    %1941 = vmatprep.mubr.bf16.mxu0 0
    %1942 = vmatmul.mubr.bf16.gmra.mrb[0].mxu0 %v1774
    %v1943 = vpop.f32.mrb[0].mxu0
    %v1944 = vadd.f32 %v1742, %v1943
    %v1945 = vpop.f32.mrb[0].mxu0
    %v1946 = vpop.f32.mrb[0].mxu0
    %v1947 = vadd.f32 %v1742, %v1946
    %v1948 = vpop.f32.mrb[0].mxu0
    %1949 = vmatprep.mubr.bf16.mxu0 0
    %1950 = vmatmul.mubr.bf16.gmra.mrb[0].mxu0 %v1777
    %v1951 = vpop.f32.mrb[0].mxu0
    %v1952 = vadd.f32 %v1742, %v1951
    %v1953 = vpop.f32.mrb[0].mxu0
    %v1954 = vpop.f32.mrb[0].mxu0
    %v1955 = vadd.f32 %v1742, %v1954
    %v1956 = vpop.f32.mrb[0].mxu0
    %1957 = vmatprep.mubr.bf16.mxu0 0
    %1958 = vmatmul.mubr.bf16.gmra.mrb[0].mxu0 %v1780
    %v1959 = vpop.f32.mrb[0].mxu0
    %v1960 = vadd.f32 %v1742, %v1959
    %v1961 = vpop.f32.mrb[0].mxu0
    %v1962 = vpop.f32.mrb[0].mxu0
    %v1963 = vadd.f32 %v1742, %v1962
    %v1964 = vpop.f32.mrb[0].mxu0
    %1965 = vmatprep.mubr.bf16.mxu0 0
    %1966 = vmatmul.mubr.bf16.gmra.mrb[0].mxu0 %v1783
    %v1967 = vpop.f32.mrb[0].mxu0
    %v1968 = vadd.f32 %v1742, %v1967
    %v1969 = vpop.f32.mrb[0].mxu0
    %v1970 = vpop.f32.mrb[0].mxu0
    %v1971 = vadd.f32 %v1742, %v1970
    %v1972 = vpop.f32.mrb[0].mxu0
    %1973 = vmatprep.mubr.bf16.mxu0 0
    %1974 = vmatmul.mubr.bf16.gmra.mrb[0].mxu0 %v1786
    %v1975 = vpop.f32.mrb[0].mxu0
    %v1976 = vadd.f32 %v1742, %v1975
    %v1977 = vpop.f32.mrb[0].mxu0
    %v1978 = vpop.f32.mrb[0].mxu0
    %v1979 = vadd.f32 %v1742, %v1978
    %v1980 = vpop.f32.mrb[0].mxu0
    %1981 = vmatprep.mubr.bf16.mxu0 0
    %1982 = vmatmul.mubr.bf16.gmra.mrb[0].mxu0 %v1789
    %v1983 = vpop.f32.mrb[0].mxu0
    %v1984 = vadd.f32 %v1742, %v1983
    %v1985 = vpop.f32.mrb[0].mxu0
    %v1986 = vpop.f32.mrb[0].mxu0
    %v1987 = vadd.f32 %v1742, %v1986
    %v1988 = vpop.f32.mrb[0].mxu0
    %1989 = vmatprep.mubr.bf16.mxu0 0
    %1990 = vmatmul.mubr.bf16.gmra.mrb[0].mxu0 %v1792
    %v1991 = vpop.f32.mrb[0].mxu0
    %v1992 = vadd.f32 %v1742, %v1991
    %v1993 = vpop.f32.mrb[0].mxu0
    %v1994 = vpop.f32.mrb[0].mxu0
    %v1995 = vadd.f32 %v1742, %v1994
    %v1996 = vpop.f32.mrb[0].mxu0
    %1997 = vmatprep.mubr.bf16.mxu0 0
    %1998 = vmatmul.mubr.bf16.gmra.mrb[0].mxu0 %v1795
    %v1999 = vpop.f32.mrb[0].mxu0
    %v2000 = vadd.f32 %v1742, %v1999
    %v2001 = vpop.f32.mrb[0].mxu0
    %v2002 = vpop.f32.mrb[0].mxu0
    %v2003 = vadd.f32 %v1742, %v2002
    %v2004 = vpop.f32.mrb[0].mxu0
    %2005 = vmatprep.mubr.bf16.mxu0 0
    %2006 = vmatmul.mubr.bf16.gmra.mrb[0].mxu0 %v1798
    %v2007 = vpop.f32.mrb[0].mxu0
    %v2008 = vadd.f32 %v1742, %v2007
    %v2009 = vpop.f32.mrb[0].mxu0
    %v2010 = vpop.f32.mrb[0].mxu0
    %v2011 = vadd.f32 %v1742, %v2010
    %v2012 = vpop.f32.mrb[0].mxu0
    %2013 = vmatprep.mubr.bf16.mxu0 0
    %2014 = vmatmul.mubr.bf16.gmra.mrb[0].mxu0 %v1801
    %v2015 = vpop.f32.mrb[0].mxu0
    %v2016 = vadd.f32 %v1742, %v2015
    %v2017 = vpop.f32.mrb[0].mxu0
    %v2018 = vpop.f32.mrb[0].mxu0
    %v2019 = vadd.f32 %v1742, %v2018
    %v2020 = vpop.f32.mrb[0].mxu0
    %2021 = vmatprep.mubr.bf16.mxu0 0
    %2022 = vmatmul.mubr.bf16.gmra.mrb[0].mxu0 %v1804
    %v2023 = vpop.f32.mrb[0].mxu0
    %v2024 = vadd.f32 %v1742, %v2023
    %v2025 = vpop.f32.mrb[0].mxu0
    %v2026 = vpop.f32.mrb[0].mxu0
    %v2027 = vadd.f32 %v1742, %v2026
    %v2028 = vpop.f32.mrb[0].mxu0
    %2029 = vmatprep.mubr.bf16.mxu0 0
    %2030 = vmatmul.mubr.bf16.gmra.mrb[0].mxu0 %v1807
    %v2031 = vpop.f32.mrb[0].mxu0
    %v2032 = vadd.f32 %v1742, %v2031
    %v2033 = vpop.f32.mrb[0].mxu0
    %v2034 = vpop.f32.mrb[0].mxu0
    %v2035 = vadd.f32 %v1742, %v2034
    %v2036 = vpop.f32.mrb[0].mxu0
    %2037 = vmatprep.mubr.bf16.mxu0 0
    %2038 = vmatmul.mubr.bf16.gmra.mrb[0].mxu0 %v1810
    %v2039 = vpop.f32.mrb[0].mxu0
    %v2040 = vadd.f32 %v1742, %v2039
    %v2041 = vpop.f32.mrb[0].mxu0
    %v2042 = vpop.f32.mrb[0].mxu0
    %v2043 = vadd.f32 %v1742, %v2042
    %v2044 = vpop.f32.mrb[0].mxu0
    %2045 = vmatprep.mubr.bf16.mxu0 0
    %2046 = vmatmul.mubr.bf16.gmra.mrb[0].mxu0 %v1813
    %v2047 = vpop.f32.mrb[0].mxu0
    %v2048 = vadd.f32 %v1742, %v2047
    %v2049 = vpop.f32.mrb[0].mxu0
    %v2050 = vpop.f32.mrb[0].mxu0
    %v2051 = vadd.f32 %v1742, %v2050
    %v2052 = vpop.f32.mrb[0].mxu0
    %2053 = vmatprep.mubr.bf16.mxu0 0
    %2054 = vmatmul.mubr.bf16.gmra.mrb[0].mxu0 %v1816
    %v2055 = vpop.f32.mrb[0].mxu0
    %v2056 = vadd.f32 %v1742, %v2055
    %v2057 = vpop.f32.mrb[0].mxu0
    %v2058 = vpop.f32.mrb[0].mxu0
    %v2059 = vadd.f32 %v1742, %v2058
    %v2060 = vpop.f32.mrb[0].mxu0
    %2061 = vmatprep.mubr.bf16.mxu0 0
    %2062 = vmatmul.mubr.bf16.gmra.mrb[0].mxu0 %v1819
    %v2063 = vpop.f32.mrb[0].mxu0
    %v2064 = vadd.f32 %v1742, %v2063
    %v2065 = vpop.f32.mrb[0].mxu0
    %v2066 = vpop.f32.mrb[0].mxu0
    %v2067 = vadd.f32 %v1742, %v2066
    %v2068 = vpop.f32.mrb[0].mxu0
    %2069 = vmatprep.mubr.bf16.mxu0 0
    %2070 = vmatmul.mubr.bf16.gmra.mrb[0].mxu0 %v1822
    %v2071 = vpop.f32.mrb[0].mxu0
    %v2072 = vadd.f32 %v1742, %v2071
    %v2073 = vpop.f32.mrb[0].mxu0
    %v2074 = vpop.f32.mrb[0].mxu0
    %v2075 = vadd.f32 %v1742, %v2074
    %v2076 = vpop.f32.mrb[0].mxu0
    %2077 = vmatprep.mubr.bf16.mxu0 0
    %2078 = vmatmul.mubr.bf16.gmra.mrb[0].mxu0 %v1825
    %v2079 = vpop.f32.mrb[0].mxu0
    %v2080 = vadd.f32 %v1742, %v2079
    %v2081 = vpop.f32.mrb[0].mxu0
    %v2082 = vpop.f32.mrb[0].mxu0
    %v2083 = vadd.f32 %v1742, %v2082
    %v2084 = vpop.f32.mrb[0].mxu0
    %2085 = vmatprep.mubr.bf16.mxu0 0
    %2086 = vmatmul.mubr.bf16.gmra.mrb[0].mxu0 %v1828
    %v2087 = vpop.f32.mrb[0].mxu0
    %v2088 = vadd.f32 %v1742, %v2087
    %v2089 = vpop.f32.mrb[0].mxu0
    %v2090 = vpop.f32.mrb[0].mxu0
    %v2091 = vadd.f32 %v1742, %v2090
    %v2092 = vpop.f32.mrb[0].mxu0
    %2093 = vmatprep.mubr.bf16.mxu0 0
    %2094 = vmatmul.mubr.bf16.gmra.mrb[0].mxu0 %v1831
    %v2095 = vpop.f32.mrb[0].mxu0
    %v2096 = vadd.f32 %v1742, %v2095
    %v2097 = vpop.f32.mrb[0].mxu0
    %v2098 = vpop.f32.mrb[0].mxu0
    %v2099 = vadd.f32 %v1742, %v2098
    %v2100 = vpop.f32.mrb[0].mxu0
    %2101 = vmatprep.mubr.bf16.mxu0 0
    %2102 = vmatmul.mubr.bf16.gmra.mrb[0].mxu0 %v1834
    %v2103 = vpop.f32.mrb[0].mxu0
    %v2104 = vadd.f32 %v1742, %v2103
    %v2105 = vpop.f32.mrb[0].mxu0
    %v2106 = vpop.f32.mrb[0].mxu0
    %v2107 = vadd.f32 %v1742, %v2106
    %v2108 = vpop.f32.mrb[0].mxu0
    %2109 = vmatprep.mubr.bf16.mxu0 0
    %2110 = vmatmul.mubr.bf16.gmra.mrb[0].mxu0 %v1837
    %v2111 = vpop.f32.mrb[0].mxu0
    %v2112 = vadd.f32 %v1742, %v2111
    %v2113 = vpop.f32.mrb[0].mxu0
    %v2114 = vpop.f32.mrb[0].mxu0
    %v2115 = vadd.f32 %v1742, %v2114
    %v2116 = vpop.f32.mrb[0].mxu0
    %2117 = vmatprep.mubr.bf16.mxu0 0
    %2118 = vmatmul.mubr.bf16.gmra.mrb[0].mxu0 %v1840
    %v2119 = vpop.f32.mrb[0].mxu0
    %v2120 = vadd.f32 %v1742, %v2119
    %v2121 = vpop.f32.mrb[0].mxu0
    %v2122 = vpop.f32.mrb[0].mxu0
    %v2123 = vadd.f32 %v1742, %v2122
    %v2124 = vpop.f32.mrb[0].mxu0
    %2125 = vmatprep.mubr.bf16.mxu0 0
    %2126 = vmatmul.mubr.bf16.gmra.mrb[0].mxu0 %v1843
    %v2127 = vpop.f32.mrb[0].mxu0
    %v2128 = vadd.f32 %v1742, %v2127
    %v2129 = vpop.f32.mrb[0].mxu0
    %v2130 = vpop.f32.mrb[0].mxu0
    %v2131 = vadd.f32 %v1742, %v2130
    %v2132 = vpop.f32.mrb[0].mxu0
    %2133 = vdwg.mxu0
    %v2134 = vpack.c.bf16 %v1883, %v1880
    %v2135 = vpack.c.bf16 %v1891, %v1888
    %v2136 = vpack.c.bf16 %v1899, %v1896
    %v2137 = vpack.c.bf16 %v1907, %v1904
    %v2138 = vpack.c.bf16 %v1915, %v1912
    %v2139 = vpack.c.bf16 %v1923, %v1920
    %v2140 = vpack.c.bf16 %v1931, %v1928
    %v2141 = vpack.c.bf16 %v1939, %v1936
    %v2142 = vpack.c.bf16 %v1947, %v1944
    %v2143 = vpack.c.bf16 %v1955, %v1952
    %v2144 = vpack.c.bf16 %v1963, %v1960
    %v2145 = vpack.c.bf16 %v1971, %v1968
    %v2146 = vpack.c.bf16 %v1979, %v1976
    %v2147 = vpack.c.bf16 %v1987, %v1984
    %v2148 = vpack.c.bf16 %v1995, %v1992
    %v2149 = vpack.c.bf16 %v2003, %v2000
    %v2150 = vpack.c.bf16 %v2011, %v2008
    %v2151 = vpack.c.bf16 %v2019, %v2016
    %v2152 = vpack.c.bf16 %v2027, %v2024
    %v2153 = vpack.c.bf16 %v2035, %v2032
    %v2154 = vpack.c.bf16 %v2043, %v2040
    %v2155 = vpack.c.bf16 %v2051, %v2048
    %v2156 = vpack.c.bf16 %v2059, %v2056
    %v2157 = vpack.c.bf16 %v2067, %v2064
    %v2158 = vpack.c.bf16 %v2075, %v2072
    %v2159 = vpack.c.bf16 %v2083, %v2080
    %v2160 = vpack.c.bf16 %v2091, %v2088
    %v2161 = vpack.c.bf16 %v2099, %v2096
    %v2162 = vpack.c.bf16 %v2107, %v2104
    %v2163 = vpack.c.bf16 %v2115, %v2112
    %v2164 = vpack.c.bf16 %v2123, %v2120
    %v2165 = vpack.c.bf16 %v2131, %v2128
    %2198 = vrot.lane.b32.xlu0 %v2134, 16
    %v2199 = vpop.permute.xlu0 %2198
    %2200 = vrot.lane.b32.xlu0 %v2135, 16
    %v2201 = vpop.permute.xlu0 %2200
    %2202 = vrot.lane.b32.xlu0 %v2136, 16
    %v2203 = vpop.permute.xlu0 %2202
    %2204 = vrot.lane.b32.xlu0 %v2137, 16
    %v2205 = vpop.permute.xlu0 %2204
    %2206 = vrot.lane.b32.xlu0 %v2138, 16
    %v2207 = vpop.permute.xlu0 %2206
    %2208 = vrot.lane.b32.xlu0 %v2139, 16
    %v2209 = vpop.permute.xlu0 %2208
    %2210 = vrot.lane.b32.xlu0 %v2140, 16
    %v2211 = vpop.permute.xlu0 %2210
    %2212 = vrot.lane.b32.xlu0 %v2141, 16
    %v2213 = vpop.permute.xlu0 %2212
    %2214 = vrot.lane.b32.xlu0 %v2142, 16
    %v2215 = vpop.permute.xlu0 %2214
    %2216 = vrot.lane.b32.xlu0 %v2143, 16
    %v2217 = vpop.permute.xlu0 %2216
    %2218 = vrot.lane.b32.xlu0 %v2144, 16
    %v2219 = vpop.permute.xlu0 %2218
    %2220 = vrot.lane.b32.xlu0 %v2145, 16
    %v2221 = vpop.permute.xlu0 %2220
    %2222 = vrot.lane.b32.xlu0 %v2146, 16
    %v2223 = vpop.permute.xlu0 %2222
    %2224 = vrot.lane.b32.xlu0 %v2147, 16
    %v2225 = vpop.permute.xlu0 %2224
    %2226 = vrot.lane.b32.xlu0 %v2148, 16
    %v2227 = vpop.permute.xlu0 %2226
    %2228 = vrot.lane.b32.xlu0 %v2149, 16
    %v2229 = vpop.permute.xlu0 %2228
    %2230 = vrot.lane.b32.xlu0 %v2150, 16
    %v2231 = vpop.permute.xlu0 %2230
    %2232 = vrot.lane.b32.xlu0 %v2151, 16
    %v2233 = vpop.permute.xlu0 %2232
    %2234 = vrot.lane.b32.xlu0 %v2152, 16
    %v2235 = vpop.permute.xlu0 %2234
    %2236 = vrot.lane.b32.xlu0 %v2153, 16
    %v2237 = vpop.permute.xlu0 %2236
    %2238 = vrot.lane.b32.xlu0 %v2154, 16
    %v2239 = vpop.permute.xlu0 %2238
    %2240 = vrot.lane.b32.xlu0 %v2155, 16
    %v2241 = vpop.permute.xlu0 %2240
    %2242 = vrot.lane.b32.xlu0 %v2156, 16
    %v2243 = vpop.permute.xlu0 %2242
    %2244 = vrot.lane.b32.xlu0 %v2157, 16
    %v2245 = vpop.permute.xlu0 %2244
    %2246 = vrot.lane.b32.xlu0 %v2158, 16
    %v2247 = vpop.permute.xlu0 %2246
    %2248 = vrot.lane.b32.xlu0 %v2159, 16
    %v2249 = vpop.permute.xlu0 %2248
    %2250 = vrot.lane.b32.xlu0 %v2160, 16
    %v2251 = vpop.permute.xlu0 %2250
    %2252 = vrot.lane.b32.xlu0 %v2161, 16
    %v2253 = vpop.permute.xlu0 %2252
    %2254 = vrot.lane.b32.xlu0 %v2162, 16
    %v2255 = vpop.permute.xlu0 %2254
    %2256 = vrot.lane.b32.xlu0 %v2163, 16
    %v2257 = vpop.permute.xlu0 %2256
    %2258 = vrot.lane.b32.xlu0 %v2164, 16
    %v2259 = vpop.permute.xlu0 %2258
    %2260 = vrot.lane.b32.xlu0 %v2165, 16
    %v2261 = vpop.permute.xlu0 %2260
    %v2264 = vsel %vm961, %v1347, %v2199
    %v2268 = vsel %vm961, %v1348, %v2201
    %v2272 = vsel %vm961, %v1349, %v2203
    %v2276 = vsel %vm961, %v1350, %v2205
    %v2280 = vsel %vm961, %v1351, %v2207
    %v2284 = vsel %vm961, %v1352, %v2209
    %v2288 = vsel %vm961, %v1353, %v2211
    %v2292 = vsel %vm961, %v1354, %v2213
    %v2296 = vsel %vm961, %v1355, %v2215
    %v2300 = vsel %vm961, %v1356, %v2217
    %v2304 = vsel %vm961, %v1357, %v2219
    %v2308 = vsel %vm961, %v1358, %v2221
    %v2312 = vsel %vm961, %v1359, %v2223
    %v2316 = vsel %vm961, %v1360, %v2225
    %v2320 = vsel %vm961, %v1361, %v2227
    %v2324 = vsel %vm961, %v1362, %v2229
    %v2328 = vsel %vm961, %v1363, %v2231
    %v2332 = vsel %vm961, %v1364, %v2233
    %v2336 = vsel %vm961, %v1365, %v2235
    %v2340 = vsel %vm961, %v1366, %v2237
    %v2344 = vsel %vm961, %v1367, %v2239
    %v2348 = vsel %vm961, %v1368, %v2241
    %v2352 = vsel %vm961, %v1369, %v2243
    %v2356 = vsel %vm961, %v1370, %v2245
    %v2360 = vsel %vm961, %v1371, %v2247
    %v2364 = vsel %vm961, %v1372, %v2249
    %v2368 = vsel %vm961, %v1373, %v2251
    %v2372 = vsel %vm961, %v1374, %v2253
    %v2376 = vsel %vm961, %v1375, %v2255
    %v2380 = vsel %vm961, %v1376, %v2257
    %v2384 = vsel %vm961, %v1377, %v2259
    %v2388 = vsel %vm961, %v1378, %v2261
    %v2390 = vld [vmem:[%s10] sm:$0xff]
    %v2391 = vld [vmem:[%s10 + $0x8] sm:$0xff]
    %v2392 = vld [vmem:[%s10 + $0x10] sm:$0xff]
    %v2393 = vld [vmem:[%s10 + $0x18] sm:$0xff]
    %v2394 = vld [vmem:[%s10 + $0x20] sm:$0xff]
    %v2395 = vld [vmem:[%s10 + $0x28] sm:$0xff]
    %v2396 = vld [vmem:[%s10 + $0x30] sm:$0xff]
    %v2397 = vld [vmem:[%s10 + $0x38] sm:$0xff]
    %v2406 = vunpack.c.l.b16 %v2390
    %v2407 = vunpack.c.h.b16 %v2390
    %v2408 = vunpack.c.l.b16 %v2391
    %v2409 = vunpack.c.h.b16 %v2391
    %v2410 = vunpack.c.l.b16 %v2392
    %v2411 = vunpack.c.h.b16 %v2392
    %v2412 = vunpack.c.l.b16 %v2393
    %v2413 = vunpack.c.h.b16 %v2393
    %v2414 = vunpack.c.l.b16 %v2394
    %v2415 = vunpack.c.h.b16 %v2394
    %v2416 = vunpack.c.l.b16 %v2395
    %v2417 = vunpack.c.h.b16 %v2395
    %v2418 = vunpack.c.l.b16 %v2396
    %v2419 = vunpack.c.h.b16 %v2396
    %v2420 = vunpack.c.l.b16 %v2397
    %v2421 = vunpack.c.h.b16 %v2397
    %v2422 = vpack.c.b16 %v2408, %v2406
    %v2423 = vpack.c.b16 %v2409, %v2407
    %v2424 = vpack.c.b16 %v2412, %v2410
    %v2425 = vpack.c.b16 %v2413, %v2411
    %v2426 = vpack.c.b16 %v2416, %v2414
    %v2427 = vpack.c.b16 %v2417, %v2415
    %v2428 = vpack.c.b16 %v2420, %v2418
    %v2429 = vpack.c.b16 %v2421, %v2419
    %2438 = vmatprep.subr.bf16.mxu0 0
    %2439 = vmatpush1.bf16.msra.mxu0 %v2264
    %2440 = vmatprep.subr.bf16.mxu0 0
    %2441 = vmatpush1.bf16.msra.mxu0 %v2268
    %2442 = vmatprep.subr.bf16.mxu0 0
    %2443 = vmatpush1.bf16.msra.mxu0 %v2272
    %2444 = vmatprep.subr.bf16.mxu0 0
    %2445 = vmatpush1.bf16.msra.mxu0 %v2276
    %2446 = vmatprep.subr.bf16.mxu0 0
    %2447 = vmatpush1.bf16.msra.mxu0 %v2280
    %2448 = vmatprep.subr.bf16.mxu0 0
    %2449 = vmatpush1.bf16.msra.mxu0 %v2284
    %2450 = vmatprep.subr.bf16.mxu0 0
    %2451 = vmatpush1.bf16.msra.mxu0 %v2288
    %2452 = vmatprep.subr.bf16.mxu0 0
    %2453 = vmatpush1.bf16.msra.mxu0 %v2292
    %2454 = vmatprep.subr.bf16.mxu0 0
    %2455 = vmatpush1.bf16.msra.mxu0 %v2296
    %2456 = vmatprep.subr.bf16.mxu0 0
    %2457 = vmatpush1.bf16.msra.mxu0 %v2300
    %2458 = vmatprep.subr.bf16.mxu0 0
    %2459 = vmatpush1.bf16.msra.mxu0 %v2304
    %2460 = vmatprep.subr.bf16.mxu0 0
    %2461 = vmatpush1.bf16.msra.mxu0 %v2308
    %2462 = vmatprep.subr.bf16.mxu0 0
    %2463 = vmatpush1.bf16.msra.mxu0 %v2312
    %2464 = vmatprep.subr.bf16.mxu0 0
    %2465 = vmatpush1.bf16.msra.mxu0 %v2316
    %2466 = vmatprep.subr.bf16.mxu0 0
    %2467 = vmatpush1.bf16.msra.mxu0 %v2320
    %2468 = vmatprep.subr.bf16.mxu0 0
    %2469 = vmatpush1.bf16.msra.mxu0 %v2324
    %2470 = vmatprep.mubr.bf16.mxu0 %v2423
    %2471 = vmatmul.mubr.bf16.gmra.mrb[0].mxu0 %v2422
    %v2472 = vpop.f32.mrb[0].mxu0
    %v2473 = vadd.f32 0.0, %v2472
    %v2474 = vpop.f32.mrb[0].mxu0
    %v2475 = vpop.f32.mrb[0].mxu0
    %v2476 = vadd.f32 0.0, %v2475
    %v2477 = vpop.f32.mrb[0].mxu0
    %2478 = vmatprep.mubr.bf16.mxu0 %v2425
    %2479 = vmatmul.mubr.bf16.gmra.mrb[0].mxu0 %v2424
    %v2480 = vpop.f32.mrb[0].mxu0
    %v2481 = vadd.f32 0.0, %v2480
    %v2482 = vpop.f32.mrb[0].mxu0
    %v2483 = vpop.f32.mrb[0].mxu0
    %v2484 = vadd.f32 0.0, %v2483
    %v2485 = vpop.f32.mrb[0].mxu0
    %2486 = vmatprep.mubr.bf16.mxu0 %v2427
    %2487 = vmatmul.mubr.bf16.gmra.mrb[0].mxu0 %v2426
    %v2488 = vpop.f32.mrb[0].mxu0
    %v2489 = vadd.f32 0.0, %v2488
    %v2490 = vpop.f32.mrb[0].mxu0
    %v2491 = vpop.f32.mrb[0].mxu0
    %v2492 = vadd.f32 0.0, %v2491
    %v2493 = vpop.f32.mrb[0].mxu0
    %2494 = vmatprep.mubr.bf16.mxu0 %v2429
    %2495 = vmatmul.mubr.bf16.gmra.mrb[0].mxu0 %v2428
    %v2496 = vpop.f32.mrb[0].mxu0
    %v2497 = vadd.f32 0.0, %v2496
    %v2498 = vpop.f32.mrb[0].mxu0
    %v2499 = vpop.f32.mrb[0].mxu0
    %v2500 = vadd.f32 0.0, %v2499
    %v2501 = vpop.f32.mrb[0].mxu0
    %2502 = vdwg.mxu0
    %2503 = vmatprep.subr.bf16.mxu0 0
    %2504 = vmatpush1.bf16.msra.mxu0 %v2328
    %2505 = vmatprep.subr.bf16.mxu0 0
    %2506 = vmatpush1.bf16.msra.mxu0 %v2332
    %2507 = vmatprep.subr.bf16.mxu0 0
    %2508 = vmatpush1.bf16.msra.mxu0 %v2336
    %2509 = vmatprep.subr.bf16.mxu0 0
    %2510 = vmatpush1.bf16.msra.mxu0 %v2340
    %2511 = vmatprep.subr.bf16.mxu0 0
    %2512 = vmatpush1.bf16.msra.mxu0 %v2344
    %2513 = vmatprep.subr.bf16.mxu0 0
    %2514 = vmatpush1.bf16.msra.mxu0 %v2348
    %2515 = vmatprep.subr.bf16.mxu0 0
    %2516 = vmatpush1.bf16.msra.mxu0 %v2352
    %2517 = vmatprep.subr.bf16.mxu0 0
    %2518 = vmatpush1.bf16.msra.mxu0 %v2356
    %2519 = vmatprep.subr.bf16.mxu0 0
    %2520 = vmatpush1.bf16.msra.mxu0 %v2360
    %2521 = vmatprep.subr.bf16.mxu0 0
    %2522 = vmatpush1.bf16.msra.mxu0 %v2364
    %2523 = vmatprep.subr.bf16.mxu0 0
    %2524 = vmatpush1.bf16.msra.mxu0 %v2368
    %2525 = vmatprep.subr.bf16.mxu0 0
    %2526 = vmatpush1.bf16.msra.mxu0 %v2372
    %2527 = vmatprep.subr.bf16.mxu0 0
    %2528 = vmatpush1.bf16.msra.mxu0 %v2376
    %2529 = vmatprep.subr.bf16.mxu0 0
    %2530 = vmatpush1.bf16.msra.mxu0 %v2380
    %2531 = vmatprep.subr.bf16.mxu0 0
    %2532 = vmatpush1.bf16.msra.mxu0 %v2384
    %2533 = vmatprep.subr.bf16.mxu0 0
    %2534 = vmatpush1.bf16.msra.mxu0 %v2388
    %2535 = vmatprep.mubr.bf16.mxu0 %v2423
    %2536 = vmatmul.mubr.bf16.gmra.mrb[0].mxu0 %v2422
    %v2537 = vpop.f32.mrb[0].mxu0
    %v2538 = vadd.f32 0.0, %v2537
    %v2539 = vpop.f32.mrb[0].mxu0
    %v2540 = vpop.f32.mrb[0].mxu0
    %v2541 = vadd.f32 0.0, %v2540
    %v2542 = vpop.f32.mrb[0].mxu0
    %2543 = vmatprep.mubr.bf16.mxu0 %v2425
    %2544 = vmatmul.mubr.bf16.gmra.mrb[0].mxu0 %v2424
    %v2545 = vpop.f32.mrb[0].mxu0
    %v2546 = vadd.f32 0.0, %v2545
    %v2547 = vpop.f32.mrb[0].mxu0
    %v2548 = vpop.f32.mrb[0].mxu0
    %v2549 = vadd.f32 0.0, %v2548
    %v2550 = vpop.f32.mrb[0].mxu0
    %2551 = vmatprep.mubr.bf16.mxu0 %v2427
    %2552 = vmatmul.mubr.bf16.gmra.mrb[0].mxu0 %v2426
    %v2553 = vpop.f32.mrb[0].mxu0
    %v2554 = vadd.f32 0.0, %v2553
    %v2555 = vpop.f32.mrb[0].mxu0
    %v2556 = vpop.f32.mrb[0].mxu0
    %v2557 = vadd.f32 0.0, %v2556
    %v2558 = vpop.f32.mrb[0].mxu0
    %2559 = vmatprep.mubr.bf16.mxu0 %v2429
    %2560 = vmatmul.mubr.bf16.gmra.mrb[0].mxu0 %v2428
    %v2561 = vpop.f32.mrb[0].mxu0
    %v2562 = vadd.f32 0.0, %v2561
    %v2563 = vpop.f32.mrb[0].mxu0
    %v2564 = vpop.f32.mrb[0].mxu0
    %v2565 = vadd.f32 0.0, %v2564
    %v2566 = vpop.f32.mrb[0].mxu0
    %2567 = vdwg.mxu0
    %v2568 = vmax.f32 %v2473, 0.0
    %v2569 = vmax.f32 %v2476, 0.0
    %v2570 = vmax.f32 %v2481, 0.0
    %v2571 = vmax.f32 %v2484, 0.0
    %v2572 = vmax.f32 %v2489, 0.0
    %v2573 = vmax.f32 %v2492, 0.0
    %v2574 = vmax.f32 %v2497, 0.0
    %v2575 = vmax.f32 %v2500, 0.0
    %v2576 = vmax.f32 %v2538, 0.0
    %v2577 = vmax.f32 %v2541, 0.0
    %v2578 = vmax.f32 %v2546, 0.0
    %v2579 = vmax.f32 %v2549, 0.0
    %v2580 = vmax.f32 %v2554, 0.0
    %v2581 = vmax.f32 %v2557, 0.0
    %v2582 = vmax.f32 %v2562, 0.0
    %v2583 = vmax.f32 %v2565, 0.0
    %v2584 = vpack.c.bf16 %v2569, %v2568
    %v2585 = vpack.c.bf16 %v2571, %v2570
    %v2586 = vpack.c.bf16 %v2573, %v2572
    %v2587 = vpack.c.bf16 %v2575, %v2574
    %v2588 = vpack.c.bf16 %v2577, %v2576
    %v2589 = vpack.c.bf16 %v2579, %v2578
    %v2590 = vpack.c.bf16 %v2581, %v2580
    %v2591 = vpack.c.bf16 %v2583, %v2582
    %v2592 = vld [vmem:[%s4] sm:$0xf]
    %v2593 = vld [vmem:[%s4 + $0x4] sm:$0xf]
    %v2594 = vld [vmem:[%s4 + $0x8] sm:$0xf]
    %v2595 = vld [vmem:[%s4 + $0xc] sm:$0xf]
    %v2596 = vld [vmem:[%s9 + $0x3] sm:$0x1]
    %v2597 = vlaneseq
    %v2598 = vshrl.u32 %v2597, 7
    %v2599 = vsub.s32 0, %v2598
    %v2600 = vrot.slane %v2596, %v2599
    %v2605 = vunpack.c.l.b16 %v2592
    %v2606 = vunpack.c.l.b16 %v2593
    %v2607 = vunpack.c.l.b16 %v2594
    %v2608 = vunpack.c.l.b16 %v2595
    %v2609 = vpack.c.b16 %v2606, %v2605
    %v2610 = vpack.c.b16 %v2608, %v2607
    %v2614 = vsel %vm304, %v2584, 0
    %v2617 = vsel %vm304, %v2585, 0
    %v2620 = vsel %vm304, %v2586, 0
    %v2623 = vsel %vm304, %v2587, 0
    %v2626 = vsel %vm304, %v2588, 0
    %v2629 = vsel %vm304, %v2589, 0
    %v2632 = vsel %vm304, %v2590, 0
    %v2635 = vsel %vm304, %v2591, 0
    %2637 = vmatprep.subr.bf16.mxu0 0
    %2638 = vmatpush1.bf16.msra.mxu0 %v2609
    %2639 = vmatprep.subr.bf16.mxu0 0
    %2640 = vmatpush1.bf16.msra.mxu0 %v2610
    %2641 = vmatprep.subr.bf16.mxu0 0
    %2642 = vmatpush1.bf16.msra.mxu0 0
    %2643 = vmatprep.subr.bf16.mxu0 0
    %2644 = vmatpush1.bf16.msra.mxu0 0
    %2645 = vmatprep.subr.bf16.mxu0 0
    %2646 = vmatpush1.bf16.msra.mxu0 0
    %2647 = vmatprep.subr.bf16.mxu0 0
    %2648 = vmatpush1.bf16.msra.mxu0 0
    %2649 = vmatprep.subr.bf16.mxu0 0
    %2650 = vmatpush1.bf16.msra.mxu0 0
    %2651 = vmatprep.subr.bf16.mxu0 0
    %2652 = vmatpush1.bf16.msra.mxu0 0
    %2653 = vmatprep.subr.bf16.mxu0 0
    %2654 = vmatpush1.bf16.msra.mxu0 0
    %2655 = vmatprep.subr.bf16.mxu0 0
    %2656 = vmatpush1.bf16.msra.mxu0 0
    %2657 = vmatprep.subr.bf16.mxu0 0
    %2658 = vmatpush1.bf16.msra.mxu0 0
    %2659 = vmatprep.subr.bf16.mxu0 0
    %2660 = vmatpush1.bf16.msra.mxu0 0
    %2661 = vmatprep.subr.bf16.mxu0 0
    %2662 = vmatpush1.bf16.msra.mxu0 0
    %2663 = vmatprep.subr.bf16.mxu0 0
    %2664 = vmatpush1.bf16.msra.mxu0 0
    %2665 = vmatprep.subr.bf16.mxu0 0
    %2666 = vmatpush1.bf16.msra.mxu0 0
    %2667 = vmatprep.subr.bf16.mxu0 0
    %2668 = vmatpush1.bf16.msra.mxu0 0
    %2669 = vmatprep.mubr.bf16.mxu0 0
    %2670 = vmatmul.mubr.bf16.gmra.mrb[0].mxu0 %v2614
    %v2671 = vpop.f32.mrb[0].mxu0
    %v2672 = vadd.f32 %v2600, %v2671
    %v2673 = vpop.f32.mrb[0].mxu0
    %v2674 = vpop.f32.mrb[0].mxu0
    %v2675 = vadd.f32 %v2600, %v2674
    %v2676 = vpop.f32.mrb[0].mxu0
    %2677 = vmatprep.mubr.bf16.mxu0 0
    %2678 = vmatmul.mubr.bf16.gmra.mrb[0].mxu0 %v2617
    %v2679 = vpop.f32.mrb[0].mxu0
    %v2680 = vadd.f32 %v2600, %v2679
    %v2681 = vpop.f32.mrb[0].mxu0
    %v2682 = vpop.f32.mrb[0].mxu0
    %v2683 = vadd.f32 %v2600, %v2682
    %v2684 = vpop.f32.mrb[0].mxu0
    %2685 = vmatprep.mubr.bf16.mxu0 0
    %2686 = vmatmul.mubr.bf16.gmra.mrb[0].mxu0 %v2620
    %v2687 = vpop.f32.mrb[0].mxu0
    %v2688 = vadd.f32 %v2600, %v2687
    %v2689 = vpop.f32.mrb[0].mxu0
    %v2690 = vpop.f32.mrb[0].mxu0
    %v2691 = vadd.f32 %v2600, %v2690
    %v2692 = vpop.f32.mrb[0].mxu0
    %2693 = vmatprep.mubr.bf16.mxu0 0
    %2694 = vmatmul.mubr.bf16.gmra.mrb[0].mxu0 %v2623
    %v2695 = vpop.f32.mrb[0].mxu0
    %v2696 = vadd.f32 %v2600, %v2695
    %v2697 = vpop.f32.mrb[0].mxu0
    %v2698 = vpop.f32.mrb[0].mxu0
    %v2699 = vadd.f32 %v2600, %v2698
    %v2700 = vpop.f32.mrb[0].mxu0
    %2701 = vmatprep.mubr.bf16.mxu0 0
    %2702 = vmatmul.mubr.bf16.gmra.mrb[0].mxu0 %v2626
    %v2703 = vpop.f32.mrb[0].mxu0
    %v2704 = vadd.f32 %v2600, %v2703
    %v2705 = vpop.f32.mrb[0].mxu0
    %v2706 = vpop.f32.mrb[0].mxu0
    %v2707 = vadd.f32 %v2600, %v2706
    %v2708 = vpop.f32.mrb[0].mxu0
    %2709 = vmatprep.mubr.bf16.mxu0 0
    %2710 = vmatmul.mubr.bf16.gmra.mrb[0].mxu0 %v2629
    %v2711 = vpop.f32.mrb[0].mxu0
    %v2712 = vadd.f32 %v2600, %v2711
    %v2713 = vpop.f32.mrb[0].mxu0
    %v2714 = vpop.f32.mrb[0].mxu0
    %v2715 = vadd.f32 %v2600, %v2714
    %v2716 = vpop.f32.mrb[0].mxu0
    %2717 = vmatprep.mubr.bf16.mxu0 0
    %2718 = vmatmul.mubr.bf16.gmra.mrb[0].mxu0 %v2632
    %v2719 = vpop.f32.mrb[0].mxu0
    %v2720 = vadd.f32 %v2600, %v2719
    %v2721 = vpop.f32.mrb[0].mxu0
    %v2722 = vpop.f32.mrb[0].mxu0
    %v2723 = vadd.f32 %v2600, %v2722
    %v2724 = vpop.f32.mrb[0].mxu0
    %2725 = vmatprep.mubr.bf16.mxu0 0
    %2726 = vmatmul.mubr.bf16.gmra.mrb[0].mxu0 %v2635
    %v2727 = vpop.f32.mrb[0].mxu0
    %v2728 = vadd.f32 %v2600, %v2727
    %v2729 = vpop.f32.mrb[0].mxu0
    %v2730 = vpop.f32.mrb[0].mxu0
    %v2731 = vadd.f32 %v2600, %v2730
    %v2732 = vpop.f32.mrb[0].mxu0
    %2733 = vdwg.mxu0
    %v2734 = vpack.c.bf16 %v2675, %v2672
    %v2735 = vpack.c.bf16 %v2683, %v2680
    %v2736 = vpack.c.bf16 %v2691, %v2688
    %v2737 = vpack.c.bf16 %v2699, %v2696
    %v2738 = vpack.c.bf16 %v2707, %v2704
    %v2739 = vpack.c.bf16 %v2715, %v2712
    %v2740 = vpack.c.bf16 %v2723, %v2720
    %v2741 = vpack.c.bf16 %v2731, %v2728
    %s2742 = sld [smem:[#allocation2 + $0x3]]
    %v2743 = vunpack.c.l.bf16 %v2734
    %v2744 = vunpack.c.h.bf16 %v2734
    %v2745 = vunpack.c.l.bf16 %v2735
    %v2746 = vunpack.c.h.bf16 %v2735
    %v2747 = vunpack.c.l.bf16 %v2736
    %v2748 = vunpack.c.h.bf16 %v2736
    %v2749 = vunpack.c.l.bf16 %v2737
    %v2750 = vunpack.c.h.bf16 %v2737
    %v2751 = vunpack.c.l.bf16 %v2738
    %v2752 = vunpack.c.h.bf16 %v2738
    %v2753 = vunpack.c.l.bf16 %v2739
    %v2754 = vunpack.c.h.bf16 %v2739
    %v2755 = vunpack.c.l.bf16 %v2740
    %v2756 = vunpack.c.h.bf16 %v2740
    %v2757 = vunpack.c.l.bf16 %v2741
    %v2758 = vunpack.c.h.bf16 %v2741
    %v2759 = vstv %s2742
    %v2760 = vmul.f32 %v2759, %v2743
    %v2761 = vmul.f32 %v2759, %v2744
    %v2762 = vmul.f32 %v2759, %v2745
    %v2763 = vmul.f32 %v2759, %v2746
    %v2764 = vmul.f32 %v2759, %v2747
    %v2765 = vmul.f32 %v2759, %v2748
    %v2766 = vmul.f32 %v2759, %v2749
    %v2767 = vmul.f32 %v2759, %v2750
    %v2768 = vmul.f32 %v2759, %v2751
    %v2769 = vmul.f32 %v2759, %v2752
    %v2770 = vmul.f32 %v2759, %v2753
    %v2771 = vmul.f32 %v2759, %v2754
    %v2772 = vmul.f32 %v2759, %v2755
    %v2773 = vmul.f32 %v2759, %v2756
    %v2774 = vmul.f32 %v2759, %v2757
    %v2775 = vmul.f32 %v2759, %v2758
    %v2776 = vmax.f32 %v2760, 0.0
    %v2777 = vmax.f32 %v2761, 0.0
    %v2778 = vmax.f32 %v2762, 0.0
    %v2779 = vmax.f32 %v2763, 0.0
    %v2780 = vmax.f32 %v2764, 0.0
    %v2781 = vmax.f32 %v2765, 0.0
    %v2782 = vmax.f32 %v2766, 0.0
    %v2783 = vmax.f32 %v2767, 0.0
    %v2784 = vmax.f32 %v2768, 0.0
    %v2785 = vmax.f32 %v2769, 0.0
    %v2786 = vmax.f32 %v2770, 0.0
    %v2787 = vmax.f32 %v2771, 0.0
    %v2788 = vmax.f32 %v2772, 0.0
    %v2789 = vmax.f32 %v2773, 0.0
    %v2790 = vmax.f32 %v2774, 0.0
    %v2791 = vmax.f32 %v2775, 0.0
    %v2792 = vpack.c.bf16 %v2777, %v2776
    %v2793 = vpack.c.bf16 %v2779, %v2778
    %v2794 = vpack.c.bf16 %v2781, %v2780
    %v2795 = vpack.c.bf16 %v2783, %v2782
    %v2796 = vpack.c.bf16 %v2785, %v2784
    %v2797 = vpack.c.bf16 %v2787, %v2786
    %v2798 = vpack.c.bf16 %v2789, %v2788
    %v2799 = vpack.c.bf16 %v2791, %v2790
    %v2800 = vld [vmem:[%s5] sm:$0xf]
    %v2801 = vld [vmem:[%s5 + $0x4] sm:$0xf]
    %v2802 = vld [vmem:[%s5 + $0x8] sm:$0xf]
    %v2803 = vld [vmem:[%s5 + $0xc] sm:$0xf]
    %v2804 = vld [vmem:[%s9 + $0x4] sm:$0x1]
    %v2805 = vlaneseq
    %v2806 = vshrl.u32 %v2805, 7
    %v2807 = vsub.s32 0, %v2806
    %v2808 = vrot.slane %v2804, %v2807
    %v2813 = vunpack.c.l.b16 %v2800
    %v2814 = vunpack.c.l.b16 %v2801
    %v2815 = vunpack.c.l.b16 %v2802
    %v2816 = vunpack.c.l.b16 %v2803
    %v2817 = vpack.c.b16 %v2814, %v2813
    %v2818 = vpack.c.b16 %v2816, %v2815
    %v2822 = vsel %vm304, %v2792, 0
    %v2825 = vsel %vm304, %v2793, 0
    %v2828 = vsel %vm304, %v2794, 0
    %v2831 = vsel %vm304, %v2795, 0
    %v2834 = vsel %vm304, %v2796, 0
    %v2837 = vsel %vm304, %v2797, 0
    %v2840 = vsel %vm304, %v2798, 0
    %v2843 = vsel %vm304, %v2799, 0
    %2845 = vmatprep.subr.bf16.mxu0 0
    %2846 = vmatpush1.bf16.msra.mxu0 %v2817
    %2847 = vmatprep.subr.bf16.mxu0 0
    %2848 = vmatpush1.bf16.msra.mxu0 %v2818
    %2849 = vmatprep.subr.bf16.mxu0 0
    %2850 = vmatpush1.bf16.msra.mxu0 0
    %2851 = vmatprep.subr.bf16.mxu0 0
    %2852 = vmatpush1.bf16.msra.mxu0 0
    %2853 = vmatprep.subr.bf16.mxu0 0
    %2854 = vmatpush1.bf16.msra.mxu0 0
    %2855 = vmatprep.subr.bf16.mxu0 0
    %2856 = vmatpush1.bf16.msra.mxu0 0
    %2857 = vmatprep.subr.bf16.mxu0 0
    %2858 = vmatpush1.bf16.msra.mxu0 0
    %2859 = vmatprep.subr.bf16.mxu0 0
    %2860 = vmatpush1.bf16.msra.mxu0 0
    %2861 = vmatprep.subr.bf16.mxu0 0
    %2862 = vmatpush1.bf16.msra.mxu0 0
    %2863 = vmatprep.subr.bf16.mxu0 0
    %2864 = vmatpush1.bf16.msra.mxu0 0
    %2865 = vmatprep.subr.bf16.mxu0 0
    %2866 = vmatpush1.bf16.msra.mxu0 0
    %2867 = vmatprep.subr.bf16.mxu0 0
    %2868 = vmatpush1.bf16.msra.mxu0 0
    %2869 = vmatprep.subr.bf16.mxu0 0
    %2870 = vmatpush1.bf16.msra.mxu0 0
    %2871 = vmatprep.subr.bf16.mxu0 0
    %2872 = vmatpush1.bf16.msra.mxu0 0
    %2873 = vmatprep.subr.bf16.mxu0 0
    %2874 = vmatpush1.bf16.msra.mxu0 0
    %2875 = vmatprep.subr.bf16.mxu0 0
    %2876 = vmatpush1.bf16.msra.mxu0 0
    %2877 = vmatprep.mubr.bf16.mxu0 0
    %2878 = vmatmul.mubr.bf16.gmra.mrb[0].mxu0 %v2822
    %v2879 = vpop.f32.mrb[0].mxu0
    %v2880 = vadd.f32 %v2808, %v2879
    %v2881 = vpop.f32.mrb[0].mxu0
    %v2882 = vpop.f32.mrb[0].mxu0
    %v2883 = vadd.f32 %v2808, %v2882
    %v2884 = vpop.f32.mrb[0].mxu0
    %2885 = vmatprep.mubr.bf16.mxu0 0
    %2886 = vmatmul.mubr.bf16.gmra.mrb[0].mxu0 %v2825
    %v2887 = vpop.f32.mrb[0].mxu0
    %v2888 = vadd.f32 %v2808, %v2887
    %v2889 = vpop.f32.mrb[0].mxu0
    %v2890 = vpop.f32.mrb[0].mxu0
    %v2891 = vadd.f32 %v2808, %v2890
    %v2892 = vpop.f32.mrb[0].mxu0
    %2893 = vmatprep.mubr.bf16.mxu0 0
    %2894 = vmatmul.mubr.bf16.gmra.mrb[0].mxu0 %v2828
    %v2895 = vpop.f32.mrb[0].mxu0
    %v2896 = vadd.f32 %v2808, %v2895
    %v2897 = vpop.f32.mrb[0].mxu0
    %v2898 = vpop.f32.mrb[0].mxu0
    %v2899 = vadd.f32 %v2808, %v2898
    %v2900 = vpop.f32.mrb[0].mxu0
    %2901 = vmatprep.mubr.bf16.mxu0 0
    %2902 = vmatmul.mubr.bf16.gmra.mrb[0].mxu0 %v2831
    %v2903 = vpop.f32.mrb[0].mxu0
    %v2904 = vadd.f32 %v2808, %v2903
    %v2905 = vpop.f32.mrb[0].mxu0
    %v2906 = vpop.f32.mrb[0].mxu0
    %v2907 = vadd.f32 %v2808, %v2906
    %v2908 = vpop.f32.mrb[0].mxu0
    %2909 = vmatprep.mubr.bf16.mxu0 0
    %2910 = vmatmul.mubr.bf16.gmra.mrb[0].mxu0 %v2834
    %v2911 = vpop.f32.mrb[0].mxu0
    %v2912 = vadd.f32 %v2808, %v2911
    %v2913 = vpop.f32.mrb[0].mxu0
    %v2914 = vpop.f32.mrb[0].mxu0
    %v2915 = vadd.f32 %v2808, %v2914
    %v2916 = vpop.f32.mrb[0].mxu0
    %2917 = vmatprep.mubr.bf16.mxu0 0
    %2918 = vmatmul.mubr.bf16.gmra.mrb[0].mxu0 %v2837
    %v2919 = vpop.f32.mrb[0].mxu0
    %v2920 = vadd.f32 %v2808, %v2919
    %v2921 = vpop.f32.mrb[0].mxu0
    %v2922 = vpop.f32.mrb[0].mxu0
    %v2923 = vadd.f32 %v2808, %v2922
    %v2924 = vpop.f32.mrb[0].mxu0
    %2925 = vmatprep.mubr.bf16.mxu0 0
    %2926 = vmatmul.mubr.bf16.gmra.mrb[0].mxu0 %v2840
    %v2927 = vpop.f32.mrb[0].mxu0
    %v2928 = vadd.f32 %v2808, %v2927
    %v2929 = vpop.f32.mrb[0].mxu0
    %v2930 = vpop.f32.mrb[0].mxu0
    %v2931 = vadd.f32 %v2808, %v2930
    %v2932 = vpop.f32.mrb[0].mxu0
    %2933 = vmatprep.mubr.bf16.mxu0 0
    %2934 = vmatmul.mubr.bf16.gmra.mrb[0].mxu0 %v2843
    %v2935 = vpop.f32.mrb[0].mxu0
    %v2936 = vadd.f32 %v2808, %v2935
    %v2937 = vpop.f32.mrb[0].mxu0
    %v2938 = vpop.f32.mrb[0].mxu0
    %v2939 = vadd.f32 %v2808, %v2938
    %v2940 = vpop.f32.mrb[0].mxu0
    %2941 = vdwg.mxu0
    %v2942 = vpack.c.bf16 %v2883, %v2880
    %v2943 = vpack.c.bf16 %v2891, %v2888
    %v2944 = vpack.c.bf16 %v2899, %v2896
    %v2945 = vpack.c.bf16 %v2907, %v2904
    %v2946 = vpack.c.bf16 %v2915, %v2912
    %v2947 = vpack.c.bf16 %v2923, %v2920
    %v2948 = vpack.c.bf16 %v2931, %v2928
    %v2949 = vpack.c.bf16 %v2939, %v2936
    %s2950 = sld [smem:[#allocation2 + $0x4]]
    %v2951 = vstv %s2950
    %v2952 = vmul.f32 %v2951, %v2743
    %v2953 = vmul.f32 %v2951, %v2744
    %v2954 = vmul.f32 %v2951, %v2745
    %v2955 = vmul.f32 %v2951, %v2746
    %v2956 = vmul.f32 %v2951, %v2747
    %v2957 = vmul.f32 %v2951, %v2748
    %v2958 = vmul.f32 %v2951, %v2749
    %v2959 = vmul.f32 %v2951, %v2750
    %v2960 = vmul.f32 %v2951, %v2751
    %v2961 = vmul.f32 %v2951, %v2752
    %v2962 = vmul.f32 %v2951, %v2753
    %v2963 = vmul.f32 %v2951, %v2754
    %v2964 = vmul.f32 %v2951, %v2755
    %v2965 = vmul.f32 %v2951, %v2756
    %v2966 = vmul.f32 %v2951, %v2757
    %v2967 = vmul.f32 %v2951, %v2758
    %s2968 = sld [smem:[#allocation2 + $0x5]]
    %v2969 = vunpack.c.l.bf16 %v2942
    %v2970 = vunpack.c.h.bf16 %v2942
    %v2971 = vunpack.c.l.bf16 %v2943
    %v2972 = vunpack.c.h.bf16 %v2943
    %v2973 = vunpack.c.l.bf16 %v2944
    %v2974 = vunpack.c.h.bf16 %v2944
    %v2975 = vunpack.c.l.bf16 %v2945
    %v2976 = vunpack.c.h.bf16 %v2945
    %v2977 = vunpack.c.l.bf16 %v2946
    %v2978 = vunpack.c.h.bf16 %v2946
    %v2979 = vunpack.c.l.bf16 %v2947
    %v2980 = vunpack.c.h.bf16 %v2947
    %v2981 = vunpack.c.l.bf16 %v2948
    %v2982 = vunpack.c.h.bf16 %v2948
    %v2983 = vunpack.c.l.bf16 %v2949
    %v2984 = vunpack.c.h.bf16 %v2949
    %v2985 = vstv %s2968
    %v2986 = vmul.f32 %v2985, %v2969
    %v2987 = vmul.f32 %v2985, %v2970
    %v2988 = vmul.f32 %v2985, %v2971
    %v2989 = vmul.f32 %v2985, %v2972
    %v2990 = vmul.f32 %v2985, %v2973
    %v2991 = vmul.f32 %v2985, %v2974
    %v2992 = vmul.f32 %v2985, %v2975
    %v2993 = vmul.f32 %v2985, %v2976
    %v2994 = vmul.f32 %v2985, %v2977
    %v2995 = vmul.f32 %v2985, %v2978
    %v2996 = vmul.f32 %v2985, %v2979
    %v2997 = vmul.f32 %v2985, %v2980
    %v2998 = vmul.f32 %v2985, %v2981
    %v2999 = vmul.f32 %v2985, %v2982
    %v3000 = vmul.f32 %v2985, %v2983
    %v3001 = vmul.f32 %v2985, %v2984
    %v3002 = vadd.f32 %v2952, %v2986
    %v3003 = vadd.f32 %v2953, %v2987
    %v3004 = vadd.f32 %v2954, %v2988
    %v3005 = vadd.f32 %v2955, %v2989
    %v3006 = vadd.f32 %v2956, %v2990
    %v3007 = vadd.f32 %v2957, %v2991
    %v3008 = vadd.f32 %v2958, %v2992
    %v3009 = vadd.f32 %v2959, %v2993
    %v3010 = vadd.f32 %v2960, %v2994
    %v3011 = vadd.f32 %v2961, %v2995
    %v3012 = vadd.f32 %v2962, %v2996
    %v3013 = vadd.f32 %v2963, %v2997
    %v3014 = vadd.f32 %v2964, %v2998
    %v3015 = vadd.f32 %v2965, %v2999
    %v3016 = vadd.f32 %v2966, %v3000
    %v3017 = vadd.f32 %v2967, %v3001
    %v3018 = vmax.f32 %v3002, 0.0
    %v3019 = vmax.f32 %v3003, 0.0
    %v3020 = vmax.f32 %v3004, 0.0
    %v3021 = vmax.f32 %v3005, 0.0
    %v3022 = vmax.f32 %v3006, 0.0
    %v3023 = vmax.f32 %v3007, 0.0
    %v3024 = vmax.f32 %v3008, 0.0
    %v3025 = vmax.f32 %v3009, 0.0
    %v3026 = vmax.f32 %v3010, 0.0
    %v3027 = vmax.f32 %v3011, 0.0
    %v3028 = vmax.f32 %v3012, 0.0
    %v3029 = vmax.f32 %v3013, 0.0
    %v3030 = vmax.f32 %v3014, 0.0
    %v3031 = vmax.f32 %v3015, 0.0
    %v3032 = vmax.f32 %v3016, 0.0
    %v3033 = vmax.f32 %v3017, 0.0
    %v3034 = vpack.c.bf16 %v3019, %v3018
    %v3035 = vpack.c.bf16 %v3021, %v3020
    %v3036 = vpack.c.bf16 %v3023, %v3022
    %v3037 = vpack.c.bf16 %v3025, %v3024
    %v3038 = vpack.c.bf16 %v3027, %v3026
    %v3039 = vpack.c.bf16 %v3029, %v3028
    %v3040 = vpack.c.bf16 %v3031, %v3030
    %v3041 = vpack.c.bf16 %v3033, %v3032
    %s3042 = scalar_lea.vmem %s5, 16
    %v3043 = vld [vmem:[%s3042] sm:$0xf]
    %v3044 = vld [vmem:[%s3042 + $0x4] sm:$0xf]
    %v3045 = vld [vmem:[%s3042 + $0x8] sm:$0xf]
    %v3046 = vld [vmem:[%s3042 + $0xc] sm:$0xf]
    %v3047 = vld [vmem:[%s9 + $0x5] sm:$0x1]
    %v3048 = vlaneseq
    %v3049 = vshrl.u32 %v3048, 7
    %v3050 = vsub.s32 0, %v3049
    %v3051 = vrot.slane %v3047, %v3050
    %v3056 = vunpack.c.l.b16 %v3043
    %v3057 = vunpack.c.l.b16 %v3044
    %v3058 = vunpack.c.l.b16 %v3045
    %v3059 = vunpack.c.l.b16 %v3046
    %v3060 = vpack.c.b16 %v3057, %v3056
    %v3061 = vpack.c.b16 %v3059, %v3058
    %v3065 = vsel %vm304, %v3034, 0
    %v3068 = vsel %vm304, %v3035, 0
    %v3071 = vsel %vm304, %v3036, 0
    %v3074 = vsel %vm304, %v3037, 0
    %v3077 = vsel %vm304, %v3038, 0
    %v3080 = vsel %vm304, %v3039, 0
    %v3083 = vsel %vm304, %v3040, 0
    %v3086 = vsel %vm304, %v3041, 0
    %3088 = vmatprep.subr.bf16.mxu0 0
    %3089 = vmatpush1.bf16.msra.mxu0 %v3060
    %3090 = vmatprep.subr.bf16.mxu0 0
    %3091 = vmatpush1.bf16.msra.mxu0 %v3061
    %3092 = vmatprep.subr.bf16.mxu0 0
    %3093 = vmatpush1.bf16.msra.mxu0 0
    %3094 = vmatprep.subr.bf16.mxu0 0
    %3095 = vmatpush1.bf16.msra.mxu0 0
    %3096 = vmatprep.subr.bf16.mxu0 0
    %3097 = vmatpush1.bf16.msra.mxu0 0
    %3098 = vmatprep.subr.bf16.mxu0 0
    %3099 = vmatpush1.bf16.msra.mxu0 0
    %3100 = vmatprep.subr.bf16.mxu0 0
    %3101 = vmatpush1.bf16.msra.mxu0 0
    %3102 = vmatprep.subr.bf16.mxu0 0
    %3103 = vmatpush1.bf16.msra.mxu0 0
    %3104 = vmatprep.subr.bf16.mxu0 0
    %3105 = vmatpush1.bf16.msra.mxu0 0
    %3106 = vmatprep.subr.bf16.mxu0 0
    %3107 = vmatpush1.bf16.msra.mxu0 0
    %3108 = vmatprep.subr.bf16.mxu0 0
    %3109 = vmatpush1.bf16.msra.mxu0 0
    %3110 = vmatprep.subr.bf16.mxu0 0
    %3111 = vmatpush1.bf16.msra.mxu0 0
    %3112 = vmatprep.subr.bf16.mxu0 0
    %3113 = vmatpush1.bf16.msra.mxu0 0
    %3114 = vmatprep.subr.bf16.mxu0 0
    %3115 = vmatpush1.bf16.msra.mxu0 0
    %3116 = vmatprep.subr.bf16.mxu0 0
    %3117 = vmatpush1.bf16.msra.mxu0 0
    %3118 = vmatprep.subr.bf16.mxu0 0
    %3119 = vmatpush1.bf16.msra.mxu0 0
    %3120 = vmatprep.mubr.bf16.mxu0 0
    %3121 = vmatmul.mubr.bf16.gmra.mrb[0].mxu0 %v3065
    %v3122 = vpop.f32.mrb[0].mxu0
    %v3123 = vadd.f32 %v3051, %v3122
    %v3124 = vpop.f32.mrb[0].mxu0
    %v3125 = vpop.f32.mrb[0].mxu0
    %v3126 = vadd.f32 %v3051, %v3125
    %v3127 = vpop.f32.mrb[0].mxu0
    %3128 = vmatprep.mubr.bf16.mxu0 0
    %3129 = vmatmul.mubr.bf16.gmra.mrb[0].mxu0 %v3068
    %v3130 = vpop.f32.mrb[0].mxu0
    %v3131 = vadd.f32 %v3051, %v3130
    %v3132 = vpop.f32.mrb[0].mxu0
    %v3133 = vpop.f32.mrb[0].mxu0
    %v3134 = vadd.f32 %v3051, %v3133
    %v3135 = vpop.f32.mrb[0].mxu0
    %3136 = vmatprep.mubr.bf16.mxu0 0
    %3137 = vmatmul.mubr.bf16.gmra.mrb[0].mxu0 %v3071
    %v3138 = vpop.f32.mrb[0].mxu0
    %v3139 = vadd.f32 %v3051, %v3138
    %v3140 = vpop.f32.mrb[0].mxu0
    %v3141 = vpop.f32.mrb[0].mxu0
    %v3142 = vadd.f32 %v3051, %v3141
    %v3143 = vpop.f32.mrb[0].mxu0
    %3144 = vmatprep.mubr.bf16.mxu0 0
    %3145 = vmatmul.mubr.bf16.gmra.mrb[0].mxu0 %v3074
    %v3146 = vpop.f32.mrb[0].mxu0
    %v3147 = vadd.f32 %v3051, %v3146
    %v3148 = vpop.f32.mrb[0].mxu0
    %v3149 = vpop.f32.mrb[0].mxu0
    %v3150 = vadd.f32 %v3051, %v3149
    %v3151 = vpop.f32.mrb[0].mxu0
    %3152 = vmatprep.mubr.bf16.mxu0 0
    %3153 = vmatmul.mubr.bf16.gmra.mrb[0].mxu0 %v3077
    %v3154 = vpop.f32.mrb[0].mxu0
    %v3155 = vadd.f32 %v3051, %v3154
    %v3156 = vpop.f32.mrb[0].mxu0
    %v3157 = vpop.f32.mrb[0].mxu0
    %v3158 = vadd.f32 %v3051, %v3157
    %v3159 = vpop.f32.mrb[0].mxu0
    %3160 = vmatprep.mubr.bf16.mxu0 0
    %3161 = vmatmul.mubr.bf16.gmra.mrb[0].mxu0 %v3080
    %v3162 = vpop.f32.mrb[0].mxu0
    %v3163 = vadd.f32 %v3051, %v3162
    %v3164 = vpop.f32.mrb[0].mxu0
    %v3165 = vpop.f32.mrb[0].mxu0
    %v3166 = vadd.f32 %v3051, %v3165
    %v3167 = vpop.f32.mrb[0].mxu0
    %3168 = vmatprep.mubr.bf16.mxu0 0
    %3169 = vmatmul.mubr.bf16.gmra.mrb[0].mxu0 %v3083
    %v3170 = vpop.f32.mrb[0].mxu0
    %v3171 = vadd.f32 %v3051, %v3170
    %v3172 = vpop.f32.mrb[0].mxu0
    %v3173 = vpop.f32.mrb[0].mxu0
    %v3174 = vadd.f32 %v3051, %v3173
    %v3175 = vpop.f32.mrb[0].mxu0
    %3176 = vmatprep.mubr.bf16.mxu0 0
    %3177 = vmatmul.mubr.bf16.gmra.mrb[0].mxu0 %v3086
    %v3178 = vpop.f32.mrb[0].mxu0
    %v3179 = vadd.f32 %v3051, %v3178
    %v3180 = vpop.f32.mrb[0].mxu0
    %v3181 = vpop.f32.mrb[0].mxu0
    %v3182 = vadd.f32 %v3051, %v3181
    %v3183 = vpop.f32.mrb[0].mxu0
    %3184 = vdwg.mxu0
    %v3185 = vpack.c.bf16 %v3126, %v3123
    %v3186 = vpack.c.bf16 %v3134, %v3131
    %v3187 = vpack.c.bf16 %v3142, %v3139
    %v3188 = vpack.c.bf16 %v3150, %v3147
    %v3189 = vpack.c.bf16 %v3158, %v3155
    %v3190 = vpack.c.bf16 %v3166, %v3163
    %v3191 = vpack.c.bf16 %v3174, %v3171
    %v3192 = vpack.c.bf16 %v3182, %v3179
    %3201 = vrot.lane.b32.xlu0 %v3185, 32
    %v3202 = vpop.permute.xlu0 %3201
    %3203 = vrot.lane.b32.xlu0 %v3186, 32
    %v3204 = vpop.permute.xlu0 %3203
    %3205 = vrot.lane.b32.xlu0 %v3187, 32
    %v3206 = vpop.permute.xlu0 %3205
    %3207 = vrot.lane.b32.xlu0 %v3188, 32
    %v3208 = vpop.permute.xlu0 %3207
    %3209 = vrot.lane.b32.xlu0 %v3189, 32
    %v3210 = vpop.permute.xlu0 %3209
    %3211 = vrot.lane.b32.xlu0 %v3190, 32
    %v3212 = vpop.permute.xlu0 %3211
    %3213 = vrot.lane.b32.xlu0 %v3191, 32
    %v3214 = vpop.permute.xlu0 %3213
    %3215 = vrot.lane.b32.xlu0 %v3192, 32
    %v3216 = vpop.permute.xlu0 %3215
    %v3219 = vsel %vm304, %v2942, %v3202
    %v3223 = vsel %vm304, %v2943, %v3204
    %v3227 = vsel %vm304, %v2944, %v3206
    %v3231 = vsel %vm304, %v2945, %v3208
    %v3235 = vsel %vm304, %v2946, %v3210
    %v3239 = vsel %vm304, %v2947, %v3212
    %v3243 = vsel %vm304, %v2948, %v3214
    %v3247 = vsel %vm304, %v2949, %v3216
    %v3249 = vld [vmem:[%s11] sm:$0xf]
    %v3250 = vld [vmem:[%s11 + $0x4] sm:$0xf]
    %v3253 = vunpack.c.l.b16 %v3249
    %v3254 = vunpack.c.l.b16 %v3250
    %v3255 = vpack.c.b16 %v3254, %v3253
    %vm3256 = vcmask 523264
    %v3258 = vsel %vm3256, %v3255, 0
    %3260 = vmatprep.subr.bf16.mxu0 0
    %3261 = vmatpush1.bf16.msra.mxu0 %v3219
    %3262 = vmatprep.subr.bf16.mxu0 0
    %3263 = vmatpush1.bf16.msra.mxu0 %v3223
    %3264 = vmatprep.subr.bf16.mxu0 0
    %3265 = vmatpush1.bf16.msra.mxu0 %v3227
    %3266 = vmatprep.subr.bf16.mxu0 0
    %3267 = vmatpush1.bf16.msra.mxu0 %v3231
    %3268 = vmatprep.subr.bf16.mxu0 0
    %3269 = vmatpush1.bf16.msra.mxu0 0
    %3270 = vmatprep.subr.bf16.mxu0 0
    %3271 = vmatpush1.bf16.msra.mxu0 0
    %3272 = vmatprep.subr.bf16.mxu0 0
    %3273 = vmatpush1.bf16.msra.mxu0 0
    %3274 = vmatprep.subr.bf16.mxu0 0
    %3275 = vmatpush1.bf16.msra.mxu0 0
    %3276 = vmatprep.subr.bf16.mxu0 0
    %3277 = vmatpush1.bf16.msra.mxu0 0
    %3278 = vmatprep.subr.bf16.mxu0 0
    %3279 = vmatpush1.bf16.msra.mxu0 0
    %3280 = vmatprep.subr.bf16.mxu0 0
    %3281 = vmatpush1.bf16.msra.mxu0 0
    %3282 = vmatprep.subr.bf16.mxu0 0
    %3283 = vmatpush1.bf16.msra.mxu0 0
    %3284 = vmatprep.subr.bf16.mxu0 0
    %3285 = vmatpush1.bf16.msra.mxu0 0
    %3286 = vmatprep.subr.bf16.mxu0 0
    %3287 = vmatpush1.bf16.msra.mxu0 0
    %3288 = vmatprep.subr.bf16.mxu0 0
    %3289 = vmatpush1.bf16.msra.mxu0 0
    %3290 = vmatprep.subr.bf16.mxu0 0
    %3291 = vmatpush1.bf16.msra.mxu0 0
    %3292 = vmatprep.mubr.bf16.mxu0 0
    %3293 = vmatmul.mubr.bf16.gmra.mrb[0].mxu0 %v3258
    %v3294 = vpop.f32.mrb[0].mxu0
    %v3295 = vadd.f32 0.0, %v3294
    %v3296 = vpop.f32.mrb[0].mxu0
    %v3297 = vpop.f32.mrb[0].mxu0
    %v3298 = vadd.f32 0.0, %v3297
    %v3299 = vpop.f32.mrb[0].mxu0
    %3300 = vdwg.mxu0
    %3301 = vmatprep.subr.bf16.mxu0 0
    %3302 = vmatpush1.bf16.msra.mxu0 %v3235
    %3303 = vmatprep.subr.bf16.mxu0 0
    %3304 = vmatpush1.bf16.msra.mxu0 %v3239
    %3305 = vmatprep.subr.bf16.mxu0 0
    %3306 = vmatpush1.bf16.msra.mxu0 %v3243
    %3307 = vmatprep.subr.bf16.mxu0 0
    %3308 = vmatpush1.bf16.msra.mxu0 %v3247
    %3309 = vmatprep.subr.bf16.mxu0 0
    %3310 = vmatpush1.bf16.msra.mxu0 0
    %3311 = vmatprep.subr.bf16.mxu0 0
    %3312 = vmatpush1.bf16.msra.mxu0 0
    %3313 = vmatprep.subr.bf16.mxu0 0
    %3314 = vmatpush1.bf16.msra.mxu0 0
    %3315 = vmatprep.subr.bf16.mxu0 0
    %3316 = vmatpush1.bf16.msra.mxu0 0
    %3317 = vmatprep.subr.bf16.mxu0 0
    %3318 = vmatpush1.bf16.msra.mxu0 0
    %3319 = vmatprep.subr.bf16.mxu0 0
    %3320 = vmatpush1.bf16.msra.mxu0 0
    %3321 = vmatprep.subr.bf16.mxu0 0
    %3322 = vmatpush1.bf16.msra.mxu0 0
    %3323 = vmatprep.subr.bf16.mxu0 0
    %3324 = vmatpush1.bf16.msra.mxu0 0
    %3325 = vmatprep.subr.bf16.mxu0 0
    %3326 = vmatpush1.bf16.msra.mxu0 0
    %3327 = vmatprep.subr.bf16.mxu0 0
    %3328 = vmatpush1.bf16.msra.mxu0 0
    %3329 = vmatprep.subr.bf16.mxu0 0
    %3330 = vmatpush1.bf16.msra.mxu0 0
    %3331 = vmatprep.subr.bf16.mxu0 0
    %3332 = vmatpush1.bf16.msra.mxu0 0
    %3333 = vmatprep.mubr.bf16.mxu0 0
    %3334 = vmatmul.mubr.bf16.gmra.mrb[0].mxu0 %v3258
    %v3335 = vpop.f32.mrb[0].mxu0
    %v3336 = vadd.f32 0.0, %v3335
    %v3337 = vpop.f32.mrb[0].mxu0
    %v3338 = vpop.f32.mrb[0].mxu0
    %v3339 = vadd.f32 0.0, %v3338
    %v3340 = vpop.f32.mrb[0].mxu0
    %3341 = vdwg.mxu0
    %v3342 = vmax.f32 %v3295, 0.0
    %v3343 = vmax.f32 %v3298, 0.0
    %v3344 = vmax.f32 %v3336, 0.0
    %v3345 = vmax.f32 %v3339, 0.0
    %v3346 = vpack.c.bf16 %v3343, %v3342
    %v3347 = vpack.c.bf16 %v3345, %v3344
    %v3348 = vld [vmem:[%s6] sm:$0xf]
    %v3349 = vld [vmem:[%s6 + $0x4] sm:$0xf]
    %v3350 = vld [vmem:[%s6 + $0x8] sm:$0xf]
    %v3351 = vld [vmem:[%s6 + $0xc] sm:$0xf]
    %v3352 = vld [vmem:[%s6 + $0x10] sm:$0xf]
    %v3353 = vld [vmem:[%s6 + $0x14] sm:$0xf]
    %v3354 = vld [vmem:[%s6 + $0x18] sm:$0xf]
    %v3355 = vld [vmem:[%s6 + $0x1c] sm:$0xf]
    %v3356 = vld [vmem:[%s9 + $0x6] sm:$0x1]
    %v3357 = vlaneseq
    %v3358 = vshrl.u32 %v3357, 7
    %v3359 = vsub.s32 0, %v3358
    %v3360 = vrot.slane %v3356, %v3359
    %v3369 = vunpack.c.l.b16 %v3348
    %v3370 = vunpack.c.l.b16 %v3349
    %v3371 = vunpack.c.l.b16 %v3350
    %v3372 = vunpack.c.l.b16 %v3351
    %v3373 = vunpack.c.l.b16 %v3352
    %v3374 = vunpack.c.l.b16 %v3353
    %v3375 = vunpack.c.l.b16 %v3354
    %v3376 = vunpack.c.l.b16 %v3355
    %v3377 = vpack.c.b16 %v3370, %v3369
    %v3378 = vpack.c.b16 %v3372, %v3371
    %v3379 = vpack.c.b16 %v3374, %v3373
    %v3380 = vpack.c.b16 %v3376, %v3375
    %v3386 = vsel %vm3256, %v3346, 0
    %v3389 = vsel %vm3256, %v3347, 0
    %3391 = vmatprep.subr.bf16.mxu0 0
    %3392 = vmatpush1.bf16.msra.mxu0 %v3377
    %3393 = vmatprep.subr.bf16.mxu0 0
    %3394 = vmatpush1.bf16.msra.mxu0 %v3378
    %3395 = vmatprep.subr.bf16.mxu0 0
    %3396 = vmatpush1.bf16.msra.mxu0 %v3379
    %3397 = vmatprep.subr.bf16.mxu0 0
    %3398 = vmatpush1.bf16.msra.mxu0 %v3380
    %3399 = vmatprep.subr.bf16.mxu0 0
    %3400 = vmatpush1.bf16.msra.mxu0 0
    %3401 = vmatprep.subr.bf16.mxu0 0
    %3402 = vmatpush1.bf16.msra.mxu0 0
    %3403 = vmatprep.subr.bf16.mxu0 0
    %3404 = vmatpush1.bf16.msra.mxu0 0
    %3405 = vmatprep.subr.bf16.mxu0 0
    %3406 = vmatpush1.bf16.msra.mxu0 0
    %3407 = vmatprep.subr.bf16.mxu0 0
    %3408 = vmatpush1.bf16.msra.mxu0 0
    %3409 = vmatprep.subr.bf16.mxu0 0
    %3410 = vmatpush1.bf16.msra.mxu0 0
    %3411 = vmatprep.subr.bf16.mxu0 0
    %3412 = vmatpush1.bf16.msra.mxu0 0
    %3413 = vmatprep.subr.bf16.mxu0 0
    %3414 = vmatpush1.bf16.msra.mxu0 0
    %3415 = vmatprep.subr.bf16.mxu0 0
    %3416 = vmatpush1.bf16.msra.mxu0 0
    %3417 = vmatprep.subr.bf16.mxu0 0
    %3418 = vmatpush1.bf16.msra.mxu0 0
    %3419 = vmatprep.subr.bf16.mxu0 0
    %3420 = vmatpush1.bf16.msra.mxu0 0
    %3421 = vmatprep.subr.bf16.mxu0 0
    %3422 = vmatpush1.bf16.msra.mxu0 0
    %3423 = vmatprep.mubr.bf16.mxu0 0
    %3424 = vmatmul.mubr.bf16.gmra.mrb[0].mxu0 %v3386
    %v3425 = vpop.f32.mrb[0].mxu0
    %v3426 = vadd.f32 %v3360, %v3425
    %v3427 = vpop.f32.mrb[0].mxu0
    %v3428 = vpop.f32.mrb[0].mxu0
    %v3429 = vadd.f32 %v3360, %v3428
    %v3430 = vpop.f32.mrb[0].mxu0
    %3431 = vmatprep.mubr.bf16.mxu0 0
    %3432 = vmatmul.mubr.bf16.gmra.mrb[0].mxu0 %v3389
    %v3433 = vpop.f32.mrb[0].mxu0
    %v3434 = vadd.f32 %v3360, %v3433
    %v3435 = vpop.f32.mrb[0].mxu0
    %v3436 = vpop.f32.mrb[0].mxu0
    %v3437 = vadd.f32 %v3360, %v3436
    %v3438 = vpop.f32.mrb[0].mxu0
    %3439 = vdwg.mxu0
    %v3440 = vpack.c.bf16 %v3429, %v3426
    %v3441 = vpack.c.bf16 %v3437, %v3434
    %s3442 = sld [smem:[#allocation2 + $0x6]]
    %v3443 = vunpack.c.l.bf16 %v3440
    %v3444 = vunpack.c.h.bf16 %v3440
    %v3445 = vunpack.c.l.bf16 %v3441
    %v3446 = vunpack.c.h.bf16 %v3441
    %v3447 = vstv %s3442
    %v3448 = vmul.f32 %v3447, %v3443
    %v3449 = vmul.f32 %v3447, %v3444
    %v3450 = vmul.f32 %v3447, %v3445
    %v3451 = vmul.f32 %v3447, %v3446
    %v3452 = vmax.f32 %v3448, 0.0
    %v3453 = vmax.f32 %v3449, 0.0
    %v3454 = vmax.f32 %v3450, 0.0
    %v3455 = vmax.f32 %v3451, 0.0
    %v3456 = vpack.c.bf16 %v3453, %v3452
    %v3457 = vpack.c.bf16 %v3455, %v3454
    %v3458 = vld [vmem:[%s7] sm:$0xf]
    %v3459 = vld [vmem:[%s7 + $0x4] sm:$0xf]
    %v3460 = vld [vmem:[%s7 + $0x8] sm:$0xf]
    %v3461 = vld [vmem:[%s7 + $0xc] sm:$0xf]
    %v3462 = vld [vmem:[%s7 + $0x10] sm:$0xf]
    %v3463 = vld [vmem:[%s7 + $0x14] sm:$0xf]
    %v3464 = vld [vmem:[%s7 + $0x18] sm:$0xf]
    %v3465 = vld [vmem:[%s7 + $0x1c] sm:$0xf]
    %v3466 = vld [vmem:[%s9 + $0x7] sm:$0x1]
    %v3467 = vlaneseq
    %v3468 = vshrl.u32 %v3467, 7
    %v3469 = vsub.s32 0, %v3468
    %v3470 = vrot.slane %v3466, %v3469
    %v3479 = vunpack.c.l.b16 %v3458
    %v3480 = vunpack.c.l.b16 %v3459
    %v3481 = vunpack.c.l.b16 %v3460
    %v3482 = vunpack.c.l.b16 %v3461
    %v3483 = vunpack.c.l.b16 %v3462
    %v3484 = vunpack.c.l.b16 %v3463
    %v3485 = vunpack.c.l.b16 %v3464
    %v3486 = vunpack.c.l.b16 %v3465
    %v3487 = vpack.c.b16 %v3480, %v3479
    %v3488 = vpack.c.b16 %v3482, %v3481
    %v3489 = vpack.c.b16 %v3484, %v3483
    %v3490 = vpack.c.b16 %v3486, %v3485
    %v3496 = vsel %vm3256, %v3456, 0
    %v3499 = vsel %vm3256, %v3457, 0
    %3501 = vmatprep.subr.bf16.mxu0 0
    %3502 = vmatpush1.bf16.msra.mxu0 %v3487
    %3503 = vmatprep.subr.bf16.mxu0 0
    %3504 = vmatpush1.bf16.msra.mxu0 %v3488
    %3505 = vmatprep.subr.bf16.mxu0 0
    %3506 = vmatpush1.bf16.msra.mxu0 %v3489
    %3507 = vmatprep.subr.bf16.mxu0 0
    %3508 = vmatpush1.bf16.msra.mxu0 %v3490
    %3509 = vmatprep.subr.bf16.mxu0 0
    %3510 = vmatpush1.bf16.msra.mxu0 0
    %3511 = vmatprep.subr.bf16.mxu0 0
    %3512 = vmatpush1.bf16.msra.mxu0 0
    %3513 = vmatprep.subr.bf16.mxu0 0
    %3514 = vmatpush1.bf16.msra.mxu0 0
    %3515 = vmatprep.subr.bf16.mxu0 0
    %3516 = vmatpush1.bf16.msra.mxu0 0
    %3517 = vmatprep.subr.bf16.mxu0 0
    %3518 = vmatpush1.bf16.msra.mxu0 0
    %3519 = vmatprep.subr.bf16.mxu0 0
    %3520 = vmatpush1.bf16.msra.mxu0 0
    %3521 = vmatprep.subr.bf16.mxu0 0
    %3522 = vmatpush1.bf16.msra.mxu0 0
    %3523 = vmatprep.subr.bf16.mxu0 0
    %3524 = vmatpush1.bf16.msra.mxu0 0
    %3525 = vmatprep.subr.bf16.mxu0 0
    %3526 = vmatpush1.bf16.msra.mxu0 0
    %3527 = vmatprep.subr.bf16.mxu0 0
    %3528 = vmatpush1.bf16.msra.mxu0 0
    %3529 = vmatprep.subr.bf16.mxu0 0
    %3530 = vmatpush1.bf16.msra.mxu0 0
    %3531 = vmatprep.subr.bf16.mxu0 0
    %3532 = vmatpush1.bf16.msra.mxu0 0
    %3533 = vmatprep.mubr.bf16.mxu0 0
    %3534 = vmatmul.mubr.bf16.gmra.mrb[0].mxu0 %v3496
    %v3535 = vpop.f32.mrb[0].mxu0
    %v3536 = vadd.f32 %v3470, %v3535
    %v3537 = vpop.f32.mrb[0].mxu0
    %v3538 = vpop.f32.mrb[0].mxu0
    %v3539 = vadd.f32 %v3470, %v3538
    %v3540 = vpop.f32.mrb[0].mxu0
    %3541 = vmatprep.mubr.bf16.mxu0 0
    %3542 = vmatmul.mubr.bf16.gmra.mrb[0].mxu0 %v3499
    %v3543 = vpop.f32.mrb[0].mxu0
    %v3544 = vadd.f32 %v3470, %v3543
    %v3545 = vpop.f32.mrb[0].mxu0
    %v3546 = vpop.f32.mrb[0].mxu0
    %v3547 = vadd.f32 %v3470, %v3546
    %v3548 = vpop.f32.mrb[0].mxu0
    %3549 = vdwg.mxu0
    %v3550 = vpack.c.bf16 %v3539, %v3536
    %v3551 = vpack.c.bf16 %v3547, %v3544
    %s3552 = sld [smem:[#allocation2 + $0x7]]
    %v3553 = vstv %s3552
    %v3554 = vmul.f32 %v3553, %v3443
    %v3555 = vmul.f32 %v3553, %v3444
    %v3556 = vmul.f32 %v3553, %v3445
    %v3557 = vmul.f32 %v3553, %v3446
    %s3558 = sld [smem:[#allocation2 + $0x8]]
    %v3559 = vunpack.c.l.bf16 %v3550
    %v3560 = vunpack.c.h.bf16 %v3550
    %v3561 = vunpack.c.l.bf16 %v3551
    %v3562 = vunpack.c.h.bf16 %v3551
    %v3563 = vstv %s3558
    %v3564 = vmul.f32 %v3563, %v3559
    %v3565 = vmul.f32 %v3563, %v3560
    %v3566 = vmul.f32 %v3563, %v3561
    %v3567 = vmul.f32 %v3563, %v3562
    %v3568 = vadd.f32 %v3554, %v3564
    %v3569 = vadd.f32 %v3555, %v3565
    %v3570 = vadd.f32 %v3556, %v3566
    %v3571 = vadd.f32 %v3557, %v3567
    %v3572 = vmax.f32 %v3568, 0.0
    %v3573 = vmax.f32 %v3569, 0.0
    %v3574 = vmax.f32 %v3570, 0.0
    %v3575 = vmax.f32 %v3571, 0.0
    %v3576 = vpack.c.bf16 %v3573, %v3572
    %v3577 = vpack.c.bf16 %v3575, %v3574
    %s3578 = scalar_lea.vmem %s7, 32
    %v3579 = vld [vmem:[%s3578] sm:$0xf]
    %v3580 = vld [vmem:[%s3578 + $0x4] sm:$0xf]
    %v3581 = vld [vmem:[%s3578 + $0x8] sm:$0xf]
    %v3582 = vld [vmem:[%s3578 + $0xc] sm:$0xf]
    %v3583 = vld [vmem:[%s3578 + $0x10] sm:$0xf]
    %v3584 = vld [vmem:[%s3578 + $0x14] sm:$0xf]
    %v3585 = vld [vmem:[%s3578 + $0x18] sm:$0xf]
    %v3586 = vld [vmem:[%s3578 + $0x1c] sm:$0xf]
    %v3587 = vld [vmem:[%s9 + $0x8] sm:$0x1]
    %v3588 = vlaneseq
    %v3589 = vshrl.u32 %v3588, 7
    %v3590 = vsub.s32 0, %v3589
    %v3591 = vrot.slane %v3587, %v3590
    %v3600 = vunpack.c.l.b16 %v3579
    %v3601 = vunpack.c.l.b16 %v3580
    %v3602 = vunpack.c.l.b16 %v3581
    %v3603 = vunpack.c.l.b16 %v3582
    %v3604 = vunpack.c.l.b16 %v3583
    %v3605 = vunpack.c.l.b16 %v3584
    %v3606 = vunpack.c.l.b16 %v3585
    %v3607 = vunpack.c.l.b16 %v3586
    %v3608 = vpack.c.b16 %v3601, %v3600
    %v3609 = vpack.c.b16 %v3603, %v3602
    %v3610 = vpack.c.b16 %v3605, %v3604
    %v3611 = vpack.c.b16 %v3607, %v3606
    %v3617 = vsel %vm3256, %v3576, 0
    %v3620 = vsel %vm3256, %v3577, 0
    %3622 = vmatprep.subr.bf16.mxu0 0
    %3623 = vmatpush1.bf16.msra.mxu0 %v3608
    %3624 = vmatprep.subr.bf16.mxu0 0
    %3625 = vmatpush1.bf16.msra.mxu0 %v3609
    %3626 = vmatprep.subr.bf16.mxu0 0
    %3627 = vmatpush1.bf16.msra.mxu0 %v3610
    %3628 = vmatprep.subr.bf16.mxu0 0
    %3629 = vmatpush1.bf16.msra.mxu0 %v3611
    %3630 = vmatprep.subr.bf16.mxu0 0
    %3631 = vmatpush1.bf16.msra.mxu0 0
    %3632 = vmatprep.subr.bf16.mxu0 0
    %3633 = vmatpush1.bf16.msra.mxu0 0
    %3634 = vmatprep.subr.bf16.mxu0 0
    %3635 = vmatpush1.bf16.msra.mxu0 0
    %3636 = vmatprep.subr.bf16.mxu0 0
    %3637 = vmatpush1.bf16.msra.mxu0 0
    %3638 = vmatprep.subr.bf16.mxu0 0
    %3639 = vmatpush1.bf16.msra.mxu0 0
    %3640 = vmatprep.subr.bf16.mxu0 0
    %3641 = vmatpush1.bf16.msra.mxu0 0
    %3642 = vmatprep.subr.bf16.mxu0 0
    %3643 = vmatpush1.bf16.msra.mxu0 0
    %3644 = vmatprep.subr.bf16.mxu0 0
    %3645 = vmatpush1.bf16.msra.mxu0 0
    %3646 = vmatprep.subr.bf16.mxu0 0
    %3647 = vmatpush1.bf16.msra.mxu0 0
    %3648 = vmatprep.subr.bf16.mxu0 0
    %3649 = vmatpush1.bf16.msra.mxu0 0
    %3650 = vmatprep.subr.bf16.mxu0 0
    %3651 = vmatpush1.bf16.msra.mxu0 0
    %3652 = vmatprep.subr.bf16.mxu0 0
    %3653 = vmatpush1.bf16.msra.mxu0 0
    %3654 = vmatprep.mubr.bf16.mxu0 0
    %3655 = vmatmul.mubr.bf16.gmra.mrb[0].mxu0 %v3617
    %v3656 = vpop.f32.mrb[0].mxu0
    %v3657 = vadd.f32 %v3591, %v3656
    %v3658 = vpop.f32.mrb[0].mxu0
    %v3659 = vpop.f32.mrb[0].mxu0
    %v3660 = vadd.f32 %v3591, %v3659
    %v3661 = vpop.f32.mrb[0].mxu0
    %3662 = vmatprep.mubr.bf16.mxu0 0
    %3663 = vmatmul.mubr.bf16.gmra.mrb[0].mxu0 %v3620
    %v3664 = vpop.f32.mrb[0].mxu0
    %v3665 = vadd.f32 %v3591, %v3664
    %v3666 = vpop.f32.mrb[0].mxu0
    %v3667 = vpop.f32.mrb[0].mxu0
    %v3668 = vadd.f32 %v3591, %v3667
    %v3669 = vpop.f32.mrb[0].mxu0
    %3670 = vdwg.mxu0
    %v3671 = vpack.c.bf16 %v3660, %v3657
    %v3672 = vpack.c.bf16 %v3668, %v3665
    %3675 = vrot.lane.b32.xlu0 %v3671, 64
    %v3676 = vpop.permute.xlu0 %3675
    %3677 = vrot.lane.b32.xlu0 %v3672, 64
    %v3678 = vpop.permute.xlu0 %3677
    %v3681 = vsel %vm3256, %v3550, %v3676
    %v3685 = vsel %vm3256, %v3551, %v3678
    %v3687 = vld [vmem:[%s12] sm:$0x1]
    %v3689 = vsel %vm304, %v3687, 0
    %3691 = vmatprep.subr.bf16.mxu0 0
    %3692 = vmatpush1.bf16.msra.mxu0 %v3681
    %3693 = vmatprep.subr.bf16.mxu0 0
    %3694 = vmatpush1.bf16.msra.mxu0 %v3685
    %3695 = vmatprep.subr.bf16.mxu0 0
    %3696 = vmatpush1.bf16.msra.mxu0 0
    %3697 = vmatprep.subr.bf16.mxu0 0
    %3698 = vmatpush1.bf16.msra.mxu0 0
    %3699 = vmatprep.subr.bf16.mxu0 0
    %3700 = vmatpush1.bf16.msra.mxu0 0
    %3701 = vmatprep.subr.bf16.mxu0 0
    %3702 = vmatpush1.bf16.msra.mxu0 0
    %3703 = vmatprep.subr.bf16.mxu0 0
    %3704 = vmatpush1.bf16.msra.mxu0 0
    %3705 = vmatprep.subr.bf16.mxu0 0
    %3706 = vmatpush1.bf16.msra.mxu0 0
    %3707 = vmatprep.subr.bf16.mxu0 0
    %3708 = vmatpush1.bf16.msra.mxu0 0
    %3709 = vmatprep.subr.bf16.mxu0 0
    %3710 = vmatpush1.bf16.msra.mxu0 0
    %3711 = vmatprep.subr.bf16.mxu0 0
    %3712 = vmatpush1.bf16.msra.mxu0 0
    %3713 = vmatprep.subr.bf16.mxu0 0
    %3714 = vmatpush1.bf16.msra.mxu0 0
    %3715 = vmatprep.subr.bf16.mxu0 0
    %3716 = vmatpush1.bf16.msra.mxu0 0
    %3717 = vmatprep.subr.bf16.mxu0 0
    %3718 = vmatpush1.bf16.msra.mxu0 0
    %3719 = vmatprep.subr.bf16.mxu0 0
    %3720 = vmatpush1.bf16.msra.mxu0 0
    %3721 = vmatprep.subr.bf16.mxu0 0
    %3722 = vmatpush1.bf16.msra.mxu0 0
    %3723 = vmatprep.mubr.bf16.mxu0 0
    %3724 = vmatmul.mubr.bf16.gmra.mrb[0].mxu0 %v3689
    %v3725 = vpop.f32.mrb[0].mxu0
    %v3726 = vadd.f32 0.0, %v3725
    %v3727 = vpop.f32.mrb[0].mxu0
    %v3728 = vpop.f32.mrb[0].mxu0
    %v3729 = vpop.f32.mrb[0].mxu0
    %3730 = vdwg.mxu0
    %v3731 = vpack.c.bf16 %v3726, %v3726
    %v3732 = vld [vmem:[%s8] sm:$0xf]
    %v3733 = vld [vmem:[%s8 + $0x4] sm:$0xf]
    %v3734 = vld [vmem:[%s8 + $0x8] sm:$0xf]
    %v3735 = vld [vmem:[%s8 + $0xc] sm:$0xf]
    %v3736 = vld [vmem:[%s8 + $0x10] sm:$0xf]
    %v3737 = vld [vmem:[%s8 + $0x14] sm:$0xf]
    %v3738 = vld [vmem:[%s8 + $0x18] sm:$0xf]
    %v3739 = vld [vmem:[%s8 + $0x1c] sm:$0xf]
    %v3740 = vld [vmem:[%s8 + $0x20] sm:$0xf]
    %v3741 = vld [vmem:[%s8 + $0x24] sm:$0xf]
    %v3742 = vld [vmem:[%s8 + $0x28] sm:$0xf]
    %v3743 = vld [vmem:[%s8 + $0x2c] sm:$0xf]
    %v3744 = vld [vmem:[%s8 + $0x30] sm:$0xf]
    %v3745 = vld [vmem:[%s8 + $0x34] sm:$0xf]
    %v3746 = vld [vmem:[%s8 + $0x38] sm:$0xf]
    %v3747 = vld [vmem:[%s8 + $0x3c] sm:$0xf]
    %v3748 = vld [vmem:[%s9 + $0x9] sm:$0x1]
    %v3749 = vlaneseq
    %v3750 = vshrl.u32 %v3749, 7
    %v3751 = vsub.s32 0, %v3750
    %v3752 = vrot.slane %v3748, %v3751
    %v3769 = vunpack.c.l.b16 %v3732
    %v3770 = vunpack.c.l.b16 %v3733
    %v3771 = vunpack.c.l.b16 %v3734
    %v3772 = vunpack.c.l.b16 %v3735
    %v3773 = vunpack.c.l.b16 %v3736
    %v3774 = vunpack.c.l.b16 %v3737
    %v3775 = vunpack.c.l.b16 %v3738
    %v3776 = vunpack.c.l.b16 %v3739
    %v3777 = vunpack.c.l.b16 %v3740
    %v3778 = vunpack.c.l.b16 %v3741
    %v3779 = vunpack.c.l.b16 %v3742
    %v3780 = vunpack.c.l.b16 %v3743
    %v3781 = vunpack.c.l.b16 %v3744
    %v3782 = vunpack.c.l.b16 %v3745
    %v3783 = vunpack.c.l.b16 %v3746
    %v3784 = vunpack.c.l.b16 %v3747
    %v3785 = vpack.c.b16 %v3770, %v3769
    %v3786 = vpack.c.b16 %v3772, %v3771
    %v3787 = vpack.c.b16 %v3774, %v3773
    %v3788 = vpack.c.b16 %v3776, %v3775
    %v3789 = vpack.c.b16 %v3778, %v3777
    %v3790 = vpack.c.b16 %v3780, %v3779
    %v3791 = vpack.c.b16 %v3782, %v3781
    %v3792 = vpack.c.b16 %v3784, %v3783
    %3801 = vmatprep.subr.bf16.mxu0 0
    %3802 = vmatpush1.bf16.msra.mxu0 %v3785
    %3803 = vmatprep.subr.bf16.mxu0 0
    %3804 = vmatpush1.bf16.msra.mxu0 %v3786
    %3805 = vmatprep.subr.bf16.mxu0 0
    %3806 = vmatpush1.bf16.msra.mxu0 %v3787
    %3807 = vmatprep.subr.bf16.mxu0 0
    %3808 = vmatpush1.bf16.msra.mxu0 %v3788
    %3809 = vmatprep.subr.bf16.mxu0 0
    %3810 = vmatpush1.bf16.msra.mxu0 %v3789
    %3811 = vmatprep.subr.bf16.mxu0 0
    %3812 = vmatpush1.bf16.msra.mxu0 %v3790
    %3813 = vmatprep.subr.bf16.mxu0 0
    %3814 = vmatpush1.bf16.msra.mxu0 %v3791
    %3815 = vmatprep.subr.bf16.mxu0 0
    %3816 = vmatpush1.bf16.msra.mxu0 %v3792
    %3817 = vmatprep.subr.bf16.mxu0 0
    %3818 = vmatpush1.bf16.msra.mxu0 0
    %3819 = vmatprep.subr.bf16.mxu0 0
    %3820 = vmatpush1.bf16.msra.mxu0 0
    %3821 = vmatprep.subr.bf16.mxu0 0
    %3822 = vmatpush1.bf16.msra.mxu0 0
    %3823 = vmatprep.subr.bf16.mxu0 0
    %3824 = vmatpush1.bf16.msra.mxu0 0
    %3825 = vmatprep.subr.bf16.mxu0 0
    %3826 = vmatpush1.bf16.msra.mxu0 0
    %3827 = vmatprep.subr.bf16.mxu0 0
    %3828 = vmatpush1.bf16.msra.mxu0 0
    %3829 = vmatprep.subr.bf16.mxu0 0
    %3830 = vmatpush1.bf16.msra.mxu0 0
    %3831 = vmatprep.subr.bf16.mxu0 0
    %3832 = vmatpush1.bf16.msra.mxu0 0
    %3833 = vmatprep.mubr.bf16.mxu0 0
    %3834 = vmatmul.mubr.bf16.gmra.mrb[0].mxu0 %v3731
    %v3835 = vpop.f32.mrb[0].mxu0
    %v3836 = vadd.f32 %v3752, %v3835
    %v3837 = vpop.f32.mrb[0].mxu0
    %v3838 = vpop.f32.mrb[0].mxu0
    %v3839 = vpop.f32.mrb[0].mxu0
    %3840 = vdwg.mxu0
    %vm3841 = vcmask 74752
    %3842 = vst.msk [vmem:[#allocation5] sm:$0x3] %vm3841, %v3836
    // Predicated region
    $region58: #{_forward_impl.1} parent=1 // pred_check
      _
    $region59: #{_forward_impl.1} parent=1 // pred_check_branch
      %3844 = sbr.rel (0) target = $region61
    $region60: #{_forward_impl.1} parent=1 // pred_region
      %s3846 = ssub.s32 32, 32
      %3847 = vsyncadd [#allocation3], %s3846
      %s3849 = sshll.u32 [#allocation5], 4
      %s3850 = int_to_ptr.vmem [resolvable:$true] %s3849
      %3852 = dma.vmem_to_hbm [thread:$0]  %s3850, 32, %s13, [#allocation3]
    $region61: #{_forward_impl.1} parent=1 // pred_fallthru
      _
    // Predicated region
    $region62: #{_forward_impl.1} parent=1 // pred_check
      _
    $region63: #{_forward_impl.1} parent=1 // pred_check_branch
      %3854 = sbr.rel (0) target = $region65
    $region64: #{_forward_impl.1} parent=1 // pred_region
      %3855 = dma.done [#allocation3], 32
    $region65: #{_forward_impl.1} parent=1 // pred_fallthru
      _
    %3856 = vsyncpa [#allocation3], 1
    %3857 = vsyncpa [#allocation4], 1

</llo_original>
